<compile_context>
chip_gen: v5e
topology: v5e:2x2
jax: 0.10.0
libtpu: 0.0.40
codegen_flags: <defaults>
</compile_context>

<pallas_src>
import math
import numpy as np
import jax
import jax.numpy as jnp
from jax import lax
from jax.experimental import pallas as pl
from jax.experimental.pallas import tpu as pltpu

# ----------------------------- configuration --------------------------------
NUM_LAYERS = 2          # num_decoder_layers
EMB        = 32         # emb_size / d_model
NHEAD      = 4
HEAD_DIM   = EMB // NHEAD
FFN        = 64         # dim_feedforward
VOCAB      = 40         # tgt_vocab_size
VOCAB_PAD  = 128        # lane-dense padded vocab for the generator output
SEQ        = 8          # target sequence length
SRC        = 8          # memory sequence length
BATCH      = 2
MAX_LEN    = 64         # positional-encoding table length
LN_EPS     = 1e-5
NEG        = -1e9       # additive mask value (stands in for -inf)

N_TGT = BATCH * SEQ     # fused target rows   (16)
N_MEM = BATCH * SRC     # fused memory rows   (16)

# packing assumptions for the "dyn" blob
assert N_TGT == N_MEM and N_TGT <= EMB and N_MEM <= EMB

# --- attention-weight blob slot layout (dim 1 of attnw, 8*NHEAD slots) ------
SLOT_SA_Q = 0 * NHEAD
SLOT_SA_K = 1 * NHEAD
SLOT_SA_V = 2 * NHEAD
SLOT_CA_Q = 3 * NHEAD
SLOT_CA_K = 4 * NHEAD
SLOT_CA_V = 5 * NHEAD
SLOT_SA_O = 6 * NHEAD
SLOT_CA_O = 7 * NHEAD
ATTN_SLOTS = 8 * NHEAD          # 32

# --- misc (bias / LayerNorm) blob row layout, one vector per sublane row ----
MISC_SA_OB, MISC_CA_OB, MISC_L1_B, MISC_L2_B = 0, 1, 2, 3
MISC_N1_G, MISC_N1_B, MISC_N2_G, MISC_N2_B, MISC_N3_G, MISC_N3_B = 4, 5, 6, 7, 8, 9
MISC_ROWS = 16                  # padded to a sublane multiple


# ------------------------------- Pallas kernel --------------------------------
def decoder_kernel(dyn_ref, attnw_ref, ffnw_ref, misc_ref, genw_ref, out_ref):
    f32 = jnp.float32

    x = dyn_ref[0]                          # [N_TGT, EMB] embedded + pos-encoded
    mem = dyn_ref[1]                        # [N_MEM, EMB]
    self_mask = dyn_ref[2, :, 0:N_TGT]      # [N_TGT, N_TGT] additive
    cross_mask = dyn_ref[3, :, 0:N_MEM]     # [N_TGT, N_MEM] additive

    # Constants (hoisted once, reused by every layer).
    ones_col = jnp.ones((N_TGT, 1), f32)                    # bias-fold column
    red_w = jnp.concatenate(                                 # MXU row-mean weights
        [jnp.full((EMB, 1), 1.0 / EMB, f32), jnp.zeros((EMB, 7), f32)], axis=1)

    mem_aug = jnp.concatenate([mem, ones_col], axis=1)       # [N_MEM, EMB+1]

    def layer_norm(y, g, b):
        # Row mean / mean-of-squares on the (idle) MXU instead of XLU reductions.
        m1 = jnp.dot(y, red_w, preferred_element_type=f32)[:, 0:1]
        m2 = jnp.dot(y * y, red_w, preferred_element_type=f32)[:, 0:1]
        var = m2 - m1 * m1
        return (y - m1) * lax.rsqrt(var + LN_EPS) * g + b

    def project(src_aug, w):
        # src_aug: [L, EMB+1]; w: [H, HEAD_DIM, EMB+1] (bias folded in last col)
        srcb = jnp.broadcast_to(src_aug[None, :, :], (w.shape[0],) + src_aug.shape)
        return jnp.einsum('hld,hkd->hlk', srcb, w, preferred_element_type=f32)

    def mha(q, k, v, ow, ob, add_mask):
        # q: [NHEAD, Lq, HD], k/v: [NHEAD, Lk, HD], ow: [NHEAD, HD, EMB], ob: [1, EMB]
        s = jnp.einsum('hqd,hkd->hqk', q, k, preferred_element_type=f32)
        s = s + add_mask[None, :, :]
        s = s - jnp.max(s, axis=-1, keepdims=True)           # one batched reduce
        p = jnp.exp(s)                                        # one batched EUP push
        p = p * pl.reciprocal(jnp.sum(p, axis=-1, keepdims=True), approx=True)
        ctx = jnp.einsum('hqk,hkd->hqd', p, v, preferred_element_type=f32)
        o = jnp.einsum('hqd,hde->hqe', ctx, ow, preferred_element_type=f32)
        return jnp.sum(o, axis=0) + ob                        # head-concat folded into sum

    for l in range(NUM_LAYERS):                               # static unrolled layers
        def vec(row, width):
            return misc_ref[l, row:row + 1, 0:width]          # [1, width], lane offset 0

        # --- self-attention + residual + LayerNorm ---
        x_aug = jnp.concatenate([x, ones_col], axis=1)        # fold biases into matmul
        qkv = project(x_aug, attnw_ref[l, SLOT_SA_Q:SLOT_SA_V + NHEAD, :, :])  # [3*NHEAD, N_TGT, HD]
        sa = mha(qkv[0:NHEAD], qkv[NHEAD:2 * NHEAD], qkv[2 * NHEAD:3 * NHEAD],
                 attnw_ref[l, SLOT_SA_O:SLOT_SA_O + NHEAD, :, 0:EMB],
                 vec(MISC_SA_OB, EMB), self_mask)
        x = layer_norm(x + sa, vec(MISC_N1_G, EMB), vec(MISC_N1_B, EMB))

        # --- cross-attention + residual + LayerNorm ---
        x_aug = jnp.concatenate([x, ones_col], axis=1)
        q = project(x_aug, attnw_ref[l, SLOT_CA_Q:SLOT_CA_Q + NHEAD, :, :])     # [NHEAD, N_TGT, HD]
        kv = project(mem_aug, attnw_ref[l, SLOT_CA_K:SLOT_CA_V + NHEAD, :, :])  # [2*NHEAD, N_MEM, HD]
        ca = mha(q, kv[0:NHEAD], kv[NHEAD:2 * NHEAD],
                 attnw_ref[l, SLOT_CA_O:SLOT_CA_O + NHEAD, :, 0:EMB],
                 vec(MISC_CA_OB, EMB), cross_mask)
        x = layer_norm(x + ca, vec(MISC_N2_G, EMB), vec(MISC_N2_B, EMB))

        # --- feed-forward (ReLU) + residual + LayerNorm ---
        h = (jnp.dot(x, ffnw_ref[l, 0, 0:EMB, :], preferred_element_type=f32)
             + vec(MISC_L1_B, FFN))
        h = jnp.maximum(h, 0.0)
        ff = (jnp.dot(h, ffnw_ref[l, 1, :, 0:EMB], preferred_element_type=f32)
              + vec(MISC_L2_B, EMB))
        x = layer_norm(x + ff, vec(MISC_N3_G, EMB), vec(MISC_N3_B, EMB))

    # --- generator Linear(EMB -> VOCAB), lane-dense 128-wide store ---
    out_ref[...] = (jnp.dot(x, genw_ref[0:EMB, :], preferred_element_type=f32)
                    + genw_ref[EMB:EMB + 1, :])


# ------------------------------- host-side wrapper -----------------------------
def _full_spec(shape):
    nd = len(shape)
    return pl.BlockSpec(shape, lambda i, _nd=nd: (0,) * _nd)


@jax.jit
def transformer_dec_forward(params, tgt_tokens, memory, tgt_mask,
                            tgt_padding_mask, memory_key_padding_mask):
    """Equivalent of TransformerDec.forward (eval mode).

    tgt_tokens:                [SEQ, BATCH] int32
    memory:                    [SRC, BATCH, EMB] float32
    tgt_mask:                  [SEQ, SEQ] additive float mask (0 / -inf or -1e9)
    tgt_padding_mask:          [BATCH, SEQ] bool (True = pad)
    memory_key_padding_mask:   [BATCH, SRC] bool (True = pad)
    returns                    [SEQ, BATCH, VOCAB]
    """
    f32 = jnp.float32

    # Token embedding (sqrt(EMB) folded into the table) + positional encoding.
    x = params["embedding"][tgt_tokens] + params["pe"][:SEQ][:, None, :]    # [SEQ,B,EMB]
    x_flat = jnp.transpose(x, (1, 0, 2)).reshape(N_TGT, EMB).astype(f32)
    mem_flat = jnp.transpose(memory, (1, 0, 2)).reshape(N_MEM, EMB).astype(f32)

    # Block-diagonal additive masks (single NEG application; no -inf stacking).
    bq = jnp.repeat(jnp.arange(BATCH), SEQ)
    bk = jnp.repeat(jnp.arange(BATCH), SRC)
    pos_t = jnp.tile(jnp.arange(SEQ), BATCH)
    causal_blocked = tgt_mask[pos_t[:, None], pos_t[None, :]] < -0.5         # bool
    self_blocked = ((bq[:, None] != bq[None, :]) | causal_blocked
                    | tgt_padding_mask.reshape(-1)[None, :])
    cross_blocked = ((bq[:, None] != bk[None, :])
                     | memory_key_padding_mask.reshape(-1)[None, :])
    self_mask = jnp.where(self_blocked, NEG, 0.0).astype(f32)                # [N_TGT, N_TGT]
    cross_mask = jnp.where(cross_blocked, NEG, 0.0).astype(f32)              # [N_TGT, N_MEM]

    # One packed per-call buffer: activations + masks (padded to EMB lanes).
    dyn = jnp.stack([
        x_flat, mem_flat,
        jnp.pad(self_mask, ((0, 0), (0, EMB - N_TGT))),
        jnp.pad(cross_mask, ((0, 0), (0, EMB - N_MEM))),
    ], axis=0)                                                               # [4, 16, EMB]

    inputs = (dyn, params["attnw"], params["ffnw"], params["misc"], params["genw"])
    out = pl.pallas_call(
        decoder_kernel,
        out_shape=jax.ShapeDtypeStruct((N_TGT, VOCAB_PAD), jnp.float32),
        grid=(1,),                                   # single fused program (one TC)
        in_specs=[_full_spec(a.shape) for a in inputs],
        out_specs=_full_spec((N_TGT, VOCAB_PAD)),
        compiler_params=pltpu.CompilerParams(dimension_semantics=("arbitrary",)),
    )(*inputs)
    # TODO(synk): for batch >> 2 on v7x, switch to grid=(BATCH,) with
    # dimension_semantics=("parallel",) so both TensorCores are used.

    logits = out[:, :VOCAB].reshape(BATCH, SEQ, VOCAB)        # drop lane padding
    return jnp.transpose(logits, (1, 0, 2))                   # [SEQ, BATCH, VOCAB]


# ------------------------------- parameter init --------------------------------
def init_params(key):
    """Random parameters generated directly in the packed kernel layout.
    (A real port would repack trained PyTorch weights the same way: transpose,
    split per head, fold softmax scale into Q and sqrt(EMB) into the table.)"""
    f32 = jnp.float32
    ks = iter(jax.random.split(key, 32))

    def rnd(shape, scale=0.05):
        return np.asarray(scale * jax.random.normal(next(ks), shape, f32))

    p = {}
    # TokenEmbedding: uniform(-0.1, 0.1) per init_weights(), sqrt(EMB) pre-folded.
    p["embedding"] = (jax.random.uniform(next(ks), (VOCAB, EMB), f32, -0.1, 0.1)
                      * math.sqrt(EMB))
    # PositionalEncoding table (deterministic).
    position = np.arange(MAX_LEN, dtype=np.float32)[:, None]
    div_term = np.exp(np.arange(0, EMB, 2, dtype=np.float32) * (-math.log(10000.0) / EMB))
    pe = np.zeros((MAX_LEN, EMB), np.float32)
    pe[:, 0::2] = np.sin(position * div_term)
    pe[:, 1::2] = np.cos(position * div_term)
    p["pe"] = jnp.asarray(pe)

    attnw = np.zeros((NUM_LAYERS, ATTN_SLOTS, HEAD_DIM, EMB + 1), np.float32)
    ffnw = np.zeros((NUM_LAYERS, 2, FFN, FFN), np.float32)
    misc = np.zeros((NUM_LAYERS, MISC_ROWS, 128), np.float32)
    scale = 1.0 / math.sqrt(HEAD_DIM)

    def pack_proj(l, slot0, w_t, b, scl):
        # w_t: [EMB, EMB] == (PyTorch Q/K/V weight).T ; b: [EMB]
        for h in range(NHEAD):
            cols = slice(h * HEAD_DIM, (h + 1) * HEAD_DIM)
            attnw[l, slot0 + h, :, 0:EMB] = w_t[:, cols].T * scl
            attnw[l, slot0 + h, :, EMB] = b[cols] * scl            # bias column

    for l in range(NUM_LAYERS):
        sa_w_t, sa_b = rnd((EMB, 3 * EMB)), rnd((3 * EMB,))        # self-attn in_proj.T
        ca_w_t, ca_b = rnd((EMB, 3 * EMB)), rnd((3 * EMB,))        # cross-attn in_proj.T
        sa_ow_t, sa_ob = rnd((EMB, EMB)), rnd((EMB,))              # out_proj.T / bias
        ca_ow_t, ca_ob = rnd((EMB, EMB)), rnd((EMB,))
        l1_w_t, l1_b = rnd((EMB, FFN)), rnd((FFN,))
        l2_w_t, l2_b = rnd((FFN, EMB)), rnd((EMB,))

        pack_proj(l, SLOT_SA_Q, sa_w_t[:, 0:EMB],        sa_b[0:EMB],        scale)
        pack_proj(l, SLOT_SA_K, sa_w_t[:, EMB:2 * EMB],  sa_b[EMB:2 * EMB],  1.0)
        pack_proj(l, SLOT_SA_V, sa_w_t[:, 2 * EMB:],     sa_b[2 * EMB:],     1.0)
        pack_proj(l, SLOT_CA_Q, ca_w_t[:, 0:EMB],        ca_b[0:EMB],        scale)
        pack_proj(l, SLOT_CA_K, ca_w_t[:, EMB:2 * EMB],  ca_b[EMB:2 * EMB],  1.0)
        pack_proj(l, SLOT_CA_V, ca_w_t[:, 2 * EMB:],     ca_b[2 * EMB:],     1.0)
        for h in range(NHEAD):
            rows = slice(h * HEAD_DIM, (h + 1) * HEAD_DIM)
            attnw[l, SLOT_SA_O + h, :, 0:EMB] = sa_ow_t[rows, :]
            attnw[l, SLOT_CA_O + h, :, 0:EMB] = ca_ow_t[rows, :]

        ffnw[l, 0, 0:EMB, :] = l1_w_t
        ffnw[l, 1, :, 0:EMB] = l2_w_t

        misc[l, MISC_SA_OB, 0:EMB] = sa_ob
        misc[l, MISC_CA_OB, 0:EMB] = ca_ob
        misc[l, MISC_L1_B, 0:FFN] = l1_b
        misc[l, MISC_L2_B, 0:EMB] = l2_b
        misc[l, MISC_N1_G, 0:EMB] = 1.0     # LayerNorm gamma=1 / beta=0 (PyTorch default)
        misc[l, MISC_N2_G, 0:EMB] = 1.0
        misc[l, MISC_N3_G, 0:EMB] = 1.0

    # generator Linear(EMB, VOCAB): weight.T in rows 0:EMB, bias in row EMB,
    # lane-padded to 128 (sliced back on the host).
    genw = np.zeros((EMB + 8, VOCAB_PAD), np.float32)
    genw[0:EMB, 0:VOCAB] = rnd((EMB, VOCAB))
    genw[EMB, 0:VOCAB] = rnd((VOCAB,))

    p["attnw"] = jnp.asarray(attnw)
    p["ffnw"] = jnp.asarray(ffnw)
    p["misc"] = jnp.asarray(misc)
    p["genw"] = jnp.asarray(genw)
    return p


# ------------------------------------ main -------------------------------------
if __name__ == "__main__":
    key = jax.random.PRNGKey(0)
    kp, kt, km = jax.random.split(key, 3)

    params = init_params(kp)

    # target tokens [SEQ, BATCH], memory [SRC, BATCH, EMB]
    tgt_tokens = jax.random.randint(kt, (SEQ, BATCH), 0, VOCAB, dtype=jnp.int32)
    memory = jax.random.normal(km, (SRC, BATCH, EMB), jnp.float32)

    # causal (square subsequent) additive mask
    causal = jnp.where(
        jnp.triu(jnp.ones((SEQ, SEQ), jnp.bool_), k=1), NEG, 0.0
    ).astype(jnp.float32)

    # padding masks: pad the last target position of batch 1, last memory pos of batch 0
    tgt_padding_mask = jnp.zeros((BATCH, SEQ), jnp.bool_).at[1, SEQ - 1].set(True)
    memory_key_padding_mask = jnp.zeros((BATCH, SRC), jnp.bool_).at[0, SRC - 1].set(True)

    out = transformer_dec_forward(
        params, tgt_tokens, memory, causal, tgt_padding_mask, memory_key_padding_mask
    )
    out = jax.block_until_ready(out)

    assert out.shape == (SEQ, BATCH, VOCAB)
    assert bool(jnp.all(jnp.isfinite(out)))
    print("KERNEL_OK")
</pallas_src>

<mosaic_0001>
module attributes {stable_mosaic.version = 11 : i64} {
  func.func @decoder_kernel(%arg0: i32, %arg1: memref<4x16x32xf32, #tpu.memory_space<vmem>>, %arg2: memref<2x32x8x33xf32, #tpu.memory_space<vmem>>, %arg3: memref<2x2x64x64xf32, #tpu.memory_space<vmem>>, %arg4: memref<2x16x128xf32, #tpu.memory_space<vmem>>, %arg5: memref<40x128xf32, #tpu.memory_space<vmem>>, %arg6: memref<16x128xf32, #tpu.memory_space<vmem>>) attributes {dimension_semantics = [#tpu.dimension_semantics<arbitrary>], iteration_bounds = array<i64: 1>, scalar_prefetch = 0 : i64, scratch_operands = 0 : i64, tpu.core_type = #tpu.core_type<tc>, window_params = [{pipeline_mode = #tpu.pipeline_mode<synchronous>, transform_indices = @transform_0, window_bounds = array<i64: 4, 16, 32>}, {pipeline_mode = #tpu.pipeline_mode<synchronous>, transform_indices = @transform_1, window_bounds = array<i64: 2, 32, 8, 33>}, {pipeline_mode = #tpu.pipeline_mode<synchronous>, transform_indices = @transform_2, window_bounds = array<i64: 2, 2, 64, 64>}, {pipeline_mode = #tpu.pipeline_mode<synchronous>, transform_indices = @transform_3, window_bounds = array<i64: 2, 16, 128>}, {pipeline_mode = #tpu.pipeline_mode<synchronous>, transform_indices = @transform_4, window_bounds = array<i64: 40, 128>}, {pipeline_mode = #tpu.pipeline_mode<synchronous>, transform_indices = @transform_5, window_bounds = array<i64: 16, 128>}]} {
    %c0 = arith.constant 0 : index
    %c0_0 = arith.constant 0 : index
    %c0_1 = arith.constant 0 : index
    %0 = vector.load %arg1[%c0, %c0_0, %c0_1] : memref<4x16x32xf32, #tpu.memory_space<vmem>>, vector<1x16x32xf32>
    %1 = vector.shape_cast %0 : vector<1x16x32xf32> to vector<16x32xf32>
    %c1 = arith.constant 1 : index
    %c0_2 = arith.constant 0 : index
    %c0_3 = arith.constant 0 : index
    %2 = vector.load %arg1[%c1, %c0_2, %c0_3] : memref<4x16x32xf32, #tpu.memory_space<vmem>>, vector<1x16x32xf32>
    %3 = vector.shape_cast %2 : vector<1x16x32xf32> to vector<16x32xf32>
    %c2 = arith.constant 2 : index
    %c0_4 = arith.constant 0 : index
    %c0_5 = arith.constant 0 : index
    %4 = vector.load %arg1[%c2, %c0_4, %c0_5] : memref<4x16x32xf32, #tpu.memory_space<vmem>>, vector<1x16x16xf32>
    %5 = vector.shape_cast %4 : vector<1x16x16xf32> to vector<16x16xf32>
    %c3 = arith.constant 3 : index
    %c0_6 = arith.constant 0 : index
    %c0_7 = arith.constant 0 : index
    %6 = vector.load %arg1[%c3, %c0_6, %c0_7] : memref<4x16x32xf32, #tpu.memory_space<vmem>>, vector<1x16x16xf32>
    %7 = vector.shape_cast %6 : vector<1x16x16xf32> to vector<16x16xf32>
    %cst = arith.constant 1.000000e+00 : f32
    %8 = vector.broadcast %cst : f32 to vector<16x1xf32>
    %cst_8 = arith.constant 3.125000e-02 : f32
    %9 = vector.broadcast %cst_8 : f32 to vector<32x1xf32>
    %cst_9 = arith.constant 0.000000e+00 : f32
    %10 = vector.broadcast %cst_9 : f32 to vector<32x7xf32>
    %11 = tpu.concatenate %9, %10 in 1 : vector<32x1xf32>, vector<32x7xf32> -> vector<32x8xf32>
    %12 = tpu.concatenate %3, %8 in 1 : vector<16x32xf32>, vector<16x1xf32> -> vector<16x33xf32>
    %13 = tpu.concatenate %1, %8 in 1 : vector<16x32xf32>, vector<16x1xf32> -> vector<16x33xf32>
    %c0_10 = arith.constant 0 : index
    %c0_11 = arith.constant 0 : index
    %c0_12 = arith.constant 0 : index
    %c0_13 = arith.constant 0 : index
    %14 = vector.load %arg2[%c0_10, %c0_11, %c0_12, %c0_13] : memref<2x32x8x33xf32, #tpu.memory_space<vmem>>, vector<1x12x8x33xf32>
    %15 = vector.shape_cast %14 : vector<1x12x8x33xf32> to vector<12x8x33xf32>
    %16 = vector.shape_cast %13 : vector<16x33xf32> to vector<1x16x33xf32>
    %17 = vector.shape_cast %16 : vector<1x16x33xf32> to vector<1x16x33xf32>
    %18 = vector.broadcast %17 : vector<1x16x33xf32> to vector<12x16x33xf32>
    "tpu.trace_start"() <{level = 10 : i32, message = "hld,hkd->hlk"}> : () -> ()
    %cst_14 = arith.constant dense<0.000000e+00> : vector<12x16x8xf32>
    %19 = tpu.matmul %18, %15, %cst_14 {dimension_numbers = #tpu.dot_dimension_numbers<[2], [2], [1], [1], [0, 0, 0, 1, 1, 1], [0], [0]>} : vector<12x16x33xf32>, vector<12x8x33xf32>, vector<12x16x8xf32> -> vector<12x16x8xf32>
    "tpu.trace_stop"() : () -> ()
    %20 = vector.extract_strided_slice %19 {offsets = [0, 0, 0], sizes = [4, 16, 8], strides = [1, 1, 1]} : vector<12x16x8xf32> to vector<4x16x8xf32>
    %21 = vector.extract_strided_slice %19 {offsets = [4, 0, 0], sizes = [4, 16, 8], strides = [1, 1, 1]} : vector<12x16x8xf32> to vector<4x16x8xf32>
    %22 = vector.extract_strided_slice %19 {offsets = [8, 0, 0], sizes = [4, 16, 8], strides = [1, 1, 1]} : vector<12x16x8xf32> to vector<4x16x8xf32>
    %c0_15 = arith.constant 0 : index
    %c24 = arith.constant 24 : index
    %c0_16 = arith.constant 0 : index
    %c0_17 = arith.constant 0 : index
    %23 = vector.load %arg2[%c0_15, %c24, %c0_16, %c0_17] : memref<2x32x8x33xf32, #tpu.memory_space<vmem>>, vector<1x4x8x32xf32>
    %24 = vector.shape_cast %23 : vector<1x4x8x32xf32> to vector<4x8x32xf32>
    %c0_18 = arith.constant 0 : index
    %c0_19 = arith.constant 0 : index
    %c0_20 = arith.constant 0 : index
    %25 = vector.load %arg4[%c0_18, %c0_19, %c0_20] : memref<2x16x128xf32, #tpu.memory_space<vmem>>, vector<1x1x32xf32>
    %26 = vector.shape_cast %25 : vector<1x1x32xf32> to vector<1x32xf32>
    "tpu.trace_start"() <{level = 10 : i32, message = "hqd,hkd->hqk"}> : () -> ()
    %cst_21 = arith.constant dense<0.000000e+00> : vector<4x16x16xf32>
    %27 = tpu.matmul %20, %21, %cst_21 {dimension_numbers = #tpu.dot_dimension_numbers<[2], [2], [1], [1], [0, 0, 0, 1, 1, 1], [0], [0]>} : vector<4x16x8xf32>, vector<4x16x8xf32>, vector<4x16x16xf32> -> vector<4x16x16xf32>
    "tpu.trace_stop"() : () -> ()
    %28 = vector.shape_cast %5 : vector<16x16xf32> to vector<1x16x16xf32>
    %29 = vector.broadcast %28 : vector<1x16x16xf32> to vector<4x16x16xf32>
    %30 = arith.addf %27, %29 : vector<4x16x16xf32>
    %cst_22 = arith.constant dense<0xFF800000> : vector<4x16xf32>
    %31 = vector.multi_reduction <maximumf>, %30, %cst_22 [2] : vector<4x16x16xf32> to vector<4x16xf32>
    %32 = vector.shape_cast %31 : vector<4x16xf32> to vector<4x16x1xf32>
    %33 = vector.broadcast %32 : vector<4x16x1xf32> to vector<4x16x16xf32>
    %34 = arith.subf %30, %33 : vector<4x16x16xf32>
    %35 = math.exp %34 : vector<4x16x16xf32>
    %cst_23 = arith.constant dense<0.000000e+00> : vector<4x16xf32>
    %36 = vector.multi_reduction <add>, %35, %cst_23 [2] : vector<4x16x16xf32> to vector<4x16xf32>
    %37 = vector.shape_cast %36 : vector<4x16xf32> to vector<4x16x1xf32>
    %38 = tpu.reciprocal %37 {approx = true} : vector<4x16x1xf32> -> vector<4x16x1xf32>
    %39 = vector.broadcast %38 : vector<4x16x1xf32> to vector<4x16x16xf32>
    %40 = arith.mulf %35, %39 : vector<4x16x16xf32>
    "tpu.trace_start"() <{level = 10 : i32, message = "hqk,hkd->hqd"}> : () -> ()
    %cst_24 = arith.constant dense<0.000000e+00> : vector<4x16x8xf32>
    %41 = tpu.matmul %40, %22, %cst_24 {dimension_numbers = #tpu.dot_dimension_numbers<[2], [1], [1], [2], [0, 0, 0, 1, 1, 2], [0], [0]>} : vector<4x16x16xf32>, vector<4x16x8xf32>, vector<4x16x8xf32> -> vector<4x16x8xf32>
    "tpu.trace_stop"() : () -> ()
    "tpu.trace_start"() <{level = 10 : i32, message = "hqd,hde->hqe"}> : () -> ()
    %cst_25 = arith.constant dense<0.000000e+00> : vector<4x16x32xf32>
    %42 = tpu.matmul %41, %24, %cst_25 {dimension_numbers = #tpu.dot_dimension_numbers<[2], [1], [1], [2], [0, 0, 0, 1, 1, 2], [0], [0]>} : vector<4x16x8xf32>, vector<4x8x32xf32>, vector<4x16x32xf32> -> vector<4x16x32xf32>
    "tpu.trace_stop"() : () -> ()
    %cst_26 = arith.constant dense<0.000000e+00> : vector<16x32xf32>
    %43 = vector.multi_reduction <add>, %42, %cst_26 [0] : vector<4x16x32xf32> to vector<16x32xf32>
    %44 = vector.broadcast %26 : vector<1x32xf32> to vector<16x32xf32>
    %45 = arith.addf %43, %44 : vector<16x32xf32>
    %46 = arith.addf %1, %45 : vector<16x32xf32>
    %c0_27 = arith.constant 0 : index
    %c4 = arith.constant 4 : index
    %c0_28 = arith.constant 0 : index
    %47 = vector.load %arg4[%c0_27, %c4, %c0_28] : memref<2x16x128xf32, #tpu.memory_space<vmem>>, vector<1x1x32xf32>
    %48 = vector.shape_cast %47 : vector<1x1x32xf32> to vector<1x32xf32>
    %c0_29 = arith.constant 0 : index
    %c5 = arith.constant 5 : index
    %c0_30 = arith.constant 0 : index
    %49 = vector.load %arg4[%c0_29, %c5, %c0_30] : memref<2x16x128xf32, #tpu.memory_space<vmem>>, vector<1x1x32xf32>
    %50 = vector.shape_cast %49 : vector<1x1x32xf32> to vector<1x32xf32>
    %cst_31 = arith.constant dense<0.000000e+00> : vector<16x8xf32>
    %51 = tpu.matmul %46, %11, %cst_31 {dimension_numbers = #tpu.dot_dimension_numbers<[1], [0], [0], [1], [0, 0, 1, 1], [], []>} : vector<16x32xf32>, vector<32x8xf32>, vector<16x8xf32> -> vector<16x8xf32>
    %52 = vector.extract_strided_slice %51 {offsets = [0, 0], sizes = [16, 1], strides = [1, 1]} : vector<16x8xf32> to vector<16x1xf32>
    %53 = arith.mulf %46, %46 : vector<16x32xf32>
    %cst_32 = arith.constant dense<0.000000e+00> : vector<16x8xf32>
    %54 = tpu.matmul %53, %11, %cst_32 {dimension_numbers = #tpu.dot_dimension_numbers<[1], [0], [0], [1], [0, 0, 1, 1], [], []>} : vector<16x32xf32>, vector<32x8xf32>, vector<16x8xf32> -> vector<16x8xf32>
    %55 = vector.extract_strided_slice %54 {offsets = [0, 0], sizes = [16, 1], strides = [1, 1]} : vector<16x8xf32> to vector<16x1xf32>
    %56 = arith.mulf %52, %52 : vector<16x1xf32>
    %57 = arith.subf %55, %56 : vector<16x1xf32>
    %58 = vector.broadcast %52 : vector<16x1xf32> to vector<16x32xf32>
    %59 = arith.subf %46, %58 : vector<16x32xf32>
    %cst_33 = arith.constant 9.99999974E-6 : f32
    %60 = vector.broadcast %cst_33 : f32 to vector<16x1xf32>
    %61 = arith.addf %57, %60 : vector<16x1xf32>
    %62 = math.rsqrt %61 : vector<16x1xf32>
    %63 = vector.broadcast %62 : vector<16x1xf32> to vector<16x32xf32>
    %64 = arith.mulf %59, %63 : vector<16x32xf32>
    %65 = vector.broadcast %48 : vector<1x32xf32> to vector<16x32xf32>
    %66 = arith.mulf %64, %65 : vector<16x32xf32>
    %67 = vector.broadcast %50 : vector<1x32xf32> to vector<16x32xf32>
    %68 = arith.addf %66, %67 : vector<16x32xf32>
    %69 = tpu.concatenate %68, %8 in 1 : vector<16x32xf32>, vector<16x1xf32> -> vector<16x33xf32>
    %c0_34 = arith.constant 0 : index
    %c12 = arith.constant 12 : index
    %c0_35 = arith.constant 0 : index
    %c0_36 = arith.constant 0 : index
    %70 = vector.load %arg2[%c0_34, %c12, %c0_35, %c0_36] : memref<2x32x8x33xf32, #tpu.memory_space<vmem>>, vector<1x4x8x33xf32>
    %71 = vector.shape_cast %70 : vector<1x4x8x33xf32> to vector<4x8x33xf32>
    %72 = vector.shape_cast %69 : vector<16x33xf32> to vector<1x16x33xf32>
    %73 = vector.shape_cast %72 : vector<1x16x33xf32> to vector<1x16x33xf32>
    %74 = vector.broadcast %73 : vector<1x16x33xf32> to vector<4x16x33xf32>
    "tpu.trace_start"() <{level = 10 : i32, message = "hld,hkd->hlk"}> : () -> ()
    %cst_37 = arith.constant dense<0.000000e+00> : vector<4x16x8xf32>
    %75 = tpu.matmul %74, %71, %cst_37 {dimension_numbers = #tpu.dot_dimension_numbers<[2], [2], [1], [1], [0, 0, 0, 1, 1, 1], [0], [0]>} : vector<4x16x33xf32>, vector<4x8x33xf32>, vector<4x16x8xf32> -> vector<4x16x8xf32>
    "tpu.trace_stop"() : () -> ()
    %c0_38 = arith.constant 0 : index
    %c16 = arith.constant 16 : index
    %c0_39 = arith.constant 0 : index
    %c0_40 = arith.constant 0 : index
    %76 = vector.load %arg2[%c0_38, %c16, %c0_39, %c0_40] : memref<2x32x8x33xf32, #tpu.memory_space<vmem>>, vector<1x8x8x33xf32>
    %77 = vector.shape_cast %76 : vector<1x8x8x33xf32> to vector<8x8x33xf32>
    %78 = vector.shape_cast %12 : vector<16x33xf32> to vector<1x16x33xf32>
    %79 = vector.shape_cast %78 : vector<1x16x33xf32> to vector<1x16x33xf32>
    %80 = vector.broadcast %79 : vector<1x16x33xf32> to vector<8x16x33xf32>
    "tpu.trace_start"() <{level = 10 : i32, message = "hld,hkd->hlk"}> : () -> ()
    %cst_41 = arith.constant dense<0.000000e+00> : vector<8x16x8xf32>
    %81 = tpu.matmul %80, %77, %cst_41 {dimension_numbers = #tpu.dot_dimension_numbers<[2], [2], [1], [1], [0, 0, 0, 1, 1, 1], [0], [0]>} : vector<8x16x33xf32>, vector<8x8x33xf32>, vector<8x16x8xf32> -> vector<8x16x8xf32>
    "tpu.trace_stop"() : () -> ()
    %82 = vector.extract_strided_slice %81 {offsets = [0, 0, 0], sizes = [4, 16, 8], strides = [1, 1, 1]} : vector<8x16x8xf32> to vector<4x16x8xf32>
    %83 = vector.extract_strided_slice %81 {offsets = [4, 0, 0], sizes = [4, 16, 8], strides = [1, 1, 1]} : vector<8x16x8xf32> to vector<4x16x8xf32>
    %c0_42 = arith.constant 0 : index
    %c28 = arith.constant 28 : index
    %c0_43 = arith.constant 0 : index
    %c0_44 = arith.constant 0 : index
    %84 = vector.load %arg2[%c0_42, %c28, %c0_43, %c0_44] : memref<2x32x8x33xf32, #tpu.memory_space<vmem>>, vector<1x4x8x32xf32>
    %85 = vector.shape_cast %84 : vector<1x4x8x32xf32> to vector<4x8x32xf32>
    %c0_45 = arith.constant 0 : index
    %c1_46 = arith.constant 1 : index
    %c0_47 = arith.constant 0 : index
    %86 = vector.load %arg4[%c0_45, %c1_46, %c0_47] : memref<2x16x128xf32, #tpu.memory_space<vmem>>, vector<1x1x32xf32>
    %87 = vector.shape_cast %86 : vector<1x1x32xf32> to vector<1x32xf32>
    "tpu.trace_start"() <{level = 10 : i32, message = "hqd,hkd->hqk"}> : () -> ()
    %cst_48 = arith.constant dense<0.000000e+00> : vector<4x16x16xf32>
    %88 = tpu.matmul %75, %82, %cst_48 {dimension_numbers = #tpu.dot_dimension_numbers<[2], [2], [1], [1], [0, 0, 0, 1, 1, 1], [0], [0]>} : vector<4x16x8xf32>, vector<4x16x8xf32>, vector<4x16x16xf32> -> vector<4x16x16xf32>
    "tpu.trace_stop"() : () -> ()
    %89 = vector.shape_cast %7 : vector<16x16xf32> to vector<1x16x16xf32>
    %90 = vector.broadcast %89 : vector<1x16x16xf32> to vector<4x16x16xf32>
    %91 = arith.addf %88, %90 : vector<4x16x16xf32>
    %cst_49 = arith.constant dense<0xFF800000> : vector<4x16xf32>
    %92 = vector.multi_reduction <maximumf>, %91, %cst_49 [2] : vector<4x16x16xf32> to vector<4x16xf32>
    %93 = vector.shape_cast %92 : vector<4x16xf32> to vector<4x16x1xf32>
    %94 = vector.broadcast %93 : vector<4x16x1xf32> to vector<4x16x16xf32>
    %95 = arith.subf %91, %94 : vector<4x16x16xf32>
    %96 = math.exp %95 : vector<4x16x16xf32>
    %cst_50 = arith.constant dense<0.000000e+00> : vector<4x16xf32>
    %97 = vector.multi_reduction <add>, %96, %cst_50 [2] : vector<4x16x16xf32> to vector<4x16xf32>
    %98 = vector.shape_cast %97 : vector<4x16xf32> to vector<4x16x1xf32>
    %99 = tpu.reciprocal %98 {approx = true} : vector<4x16x1xf32> -> vector<4x16x1xf32>
    %100 = vector.broadcast %99 : vector<4x16x1xf32> to vector<4x16x16xf32>
    %101 = arith.mulf %96, %100 : vector<4x16x16xf32>
    "tpu.trace_start"() <{level = 10 : i32, message = "hqk,hkd->hqd"}> : () -> ()
    %cst_51 = arith.constant dense<0.000000e+00> : vector<4x16x8xf32>
    %102 = tpu.matmul %101, %83, %cst_51 {dimension_numbers = #tpu.dot_dimension_numbers<[2], [1], [1], [2], [0, 0, 0, 1, 1, 2], [0], [0]>} : vector<4x16x16xf32>, vector<4x16x8xf32>, vector<4x16x8xf32> -> vector<4x16x8xf32>
    "tpu.trace_stop"() : () -> ()
    "tpu.trace_start"() <{level = 10 : i32, message = "hqd,hde->hqe"}> : () -> ()
    %cst_52 = arith.constant dense<0.000000e+00> : vector<4x16x32xf32>
    %103 = tpu.matmul %102, %85, %cst_52 {dimension_numbers = #tpu.dot_dimension_numbers<[2], [1], [1], [2], [0, 0, 0, 1, 1, 2], [0], [0]>} : vector<4x16x8xf32>, vector<4x8x32xf32>, vector<4x16x32xf32> -> vector<4x16x32xf32>
    "tpu.trace_stop"() : () -> ()
    %cst_53 = arith.constant dense<0.000000e+00> : vector<16x32xf32>
    %104 = vector.multi_reduction <add>, %103, %cst_53 [0] : vector<4x16x32xf32> to vector<16x32xf32>
    %105 = vector.broadcast %87 : vector<1x32xf32> to vector<16x32xf32>
    %106 = arith.addf %104, %105 : vector<16x32xf32>
    %107 = arith.addf %68, %106 : vector<16x32xf32>
    %c0_54 = arith.constant 0 : index
    %c6 = arith.constant 6 : index
    %c0_55 = arith.constant 0 : index
    %108 = vector.load %arg4[%c0_54, %c6, %c0_55] : memref<2x16x128xf32, #tpu.memory_space<vmem>>, vector<1x1x32xf32>
    %109 = vector.shape_cast %108 : vector<1x1x32xf32> to vector<1x32xf32>
    %c0_56 = arith.constant 0 : index
    %c7 = arith.constant 7 : index
    %c0_57 = arith.constant 0 : index
    %110 = vector.load %arg4[%c0_56, %c7, %c0_57] : memref<2x16x128xf32, #tpu.memory_space<vmem>>, vector<1x1x32xf32>
    %111 = vector.shape_cast %110 : vector<1x1x32xf32> to vector<1x32xf32>
    %cst_58 = arith.constant dense<0.000000e+00> : vector<16x8xf32>
    %112 = tpu.matmul %107, %11, %cst_58 {dimension_numbers = #tpu.dot_dimension_numbers<[1], [0], [0], [1], [0, 0, 1, 1], [], []>} : vector<16x32xf32>, vector<32x8xf32>, vector<16x8xf32> -> vector<16x8xf32>
    %113 = vector.extract_strided_slice %112 {offsets = [0, 0], sizes = [16, 1], strides = [1, 1]} : vector<16x8xf32> to vector<16x1xf32>
    %114 = arith.mulf %107, %107 : vector<16x32xf32>
    %cst_59 = arith.constant dense<0.000000e+00> : vector<16x8xf32>
    %115 = tpu.matmul %114, %11, %cst_59 {dimension_numbers = #tpu.dot_dimension_numbers<[1], [0], [0], [1], [0, 0, 1, 1], [], []>} : vector<16x32xf32>, vector<32x8xf32>, vector<16x8xf32> -> vector<16x8xf32>
    %116 = vector.extract_strided_slice %115 {offsets = [0, 0], sizes = [16, 1], strides = [1, 1]} : vector<16x8xf32> to vector<16x1xf32>
    %117 = arith.mulf %113, %113 : vector<16x1xf32>
    %118 = arith.subf %116, %117 : vector<16x1xf32>
    %119 = vector.broadcast %113 : vector<16x1xf32> to vector<16x32xf32>
    %120 = arith.subf %107, %119 : vector<16x32xf32>
    %cst_60 = arith.constant 9.99999974E-6 : f32
    %121 = vector.broadcast %cst_60 : f32 to vector<16x1xf32>
    %122 = arith.addf %118, %121 : vector<16x1xf32>
    %123 = math.rsqrt %122 : vector<16x1xf32>
    %124 = vector.broadcast %123 : vector<16x1xf32> to vector<16x32xf32>
    %125 = arith.mulf %120, %124 : vector<16x32xf32>
    %126 = vector.broadcast %109 : vector<1x32xf32> to vector<16x32xf32>
    %127 = arith.mulf %125, %126 : vector<16x32xf32>
    %128 = vector.broadcast %111 : vector<1x32xf32> to vector<16x32xf32>
    %129 = arith.addf %127, %128 : vector<16x32xf32>
    %c0_61 = arith.constant 0 : index
    %c0_62 = arith.constant 0 : index
    %c0_63 = arith.constant 0 : index
    %c0_64 = arith.constant 0 : index
    %130 = vector.load %arg3[%c0_61, %c0_62, %c0_63, %c0_64] : memref<2x2x64x64xf32, #tpu.memory_space<vmem>>, vector<1x1x32x64xf32>
    %131 = vector.shape_cast %130 : vector<1x1x32x64xf32> to vector<32x64xf32>
    %cst_65 = arith.constant dense<0.000000e+00> : vector<16x64xf32>
    %132 = tpu.matmul %129, %131, %cst_65 {dimension_numbers = #tpu.dot_dimension_numbers<[1], [0], [0], [1], [0, 0, 1, 1], [], []>} : vector<16x32xf32>, vector<32x64xf32>, vector<16x64xf32> -> vector<16x64xf32>
    %c0_66 = arith.constant 0 : index
    %c2_67 = arith.constant 2 : index
    %c0_68 = arith.constant 0 : index
    %133 = vector.load %arg4[%c0_66, %c2_67, %c0_68] : memref<2x16x128xf32, #tpu.memory_space<vmem>>, vector<1x1x64xf32>
    %134 = vector.shape_cast %133 : vector<1x1x64xf32> to vector<1x64xf32>
    %135 = vector.broadcast %134 : vector<1x64xf32> to vector<16x64xf32>
    %136 = arith.addf %132, %135 : vector<16x64xf32>
    %cst_69 = arith.constant 0.000000e+00 : f32
    %137 = vector.broadcast %cst_69 : f32 to vector<16x64xf32>
    %138 = arith.maximumf %136, %137 : vector<16x64xf32>
    %c0_70 = arith.constant 0 : index
    %c1_71 = arith.constant 1 : index
    %c0_72 = arith.constant 0 : index
    %c0_73 = arith.constant 0 : index
    %139 = vector.load %arg3[%c0_70, %c1_71, %c0_72, %c0_73] : memref<2x2x64x64xf32, #tpu.memory_space<vmem>>, vector<1x1x64x32xf32>
    %140 = vector.shape_cast %139 : vector<1x1x64x32xf32> to vector<64x32xf32>
    %cst_74 = arith.constant dense<0.000000e+00> : vector<16x32xf32>
    %141 = tpu.matmul %138, %140, %cst_74 {dimension_numbers = #tpu.dot_dimension_numbers<[1], [0], [0], [1], [0, 0, 1, 1], [], []>} : vector<16x64xf32>, vector<64x32xf32>, vector<16x32xf32> -> vector<16x32xf32>
    %c0_75 = arith.constant 0 : index
    %c3_76 = arith.constant 3 : index
    %c0_77 = arith.constant 0 : index
    %142 = vector.load %arg4[%c0_75, %c3_76, %c0_77] : memref<2x16x128xf32, #tpu.memory_space<vmem>>, vector<1x1x32xf32>
    %143 = vector.shape_cast %142 : vector<1x1x32xf32> to vector<1x32xf32>
    %144 = vector.broadcast %143 : vector<1x32xf32> to vector<16x32xf32>
    %145 = arith.addf %141, %144 : vector<16x32xf32>
    %146 = arith.addf %129, %145 : vector<16x32xf32>
    %c0_78 = arith.constant 0 : index
    %c8 = arith.constant 8 : index
    %c0_79 = arith.constant 0 : index
    %147 = vector.load %arg4[%c0_78, %c8, %c0_79] : memref<2x16x128xf32, #tpu.memory_space<vmem>>, vector<1x1x32xf32>
    %148 = vector.shape_cast %147 : vector<1x1x32xf32> to vector<1x32xf32>
    %c0_80 = arith.constant 0 : index
    %c9 = arith.constant 9 : index
    %c0_81 = arith.constant 0 : index
    %149 = vector.load %arg4[%c0_80, %c9, %c0_81] : memref<2x16x128xf32, #tpu.memory_space<vmem>>, vector<1x1x32xf32>
    %150 = vector.shape_cast %149 : vector<1x1x32xf32> to vector<1x32xf32>
    %cst_82 = arith.constant dense<0.000000e+00> : vector<16x8xf32>
    %151 = tpu.matmul %146, %11, %cst_82 {dimension_numbers = #tpu.dot_dimension_numbers<[1], [0], [0], [1], [0, 0, 1, 1], [], []>} : vector<16x32xf32>, vector<32x8xf32>, vector<16x8xf32> -> vector<16x8xf32>
    %152 = vector.extract_strided_slice %151 {offsets = [0, 0], sizes = [16, 1], strides = [1, 1]} : vector<16x8xf32> to vector<16x1xf32>
    %153 = arith.mulf %146, %146 : vector<16x32xf32>
    %cst_83 = arith.constant dense<0.000000e+00> : vector<16x8xf32>
    %154 = tpu.matmul %153, %11, %cst_83 {dimension_numbers = #tpu.dot_dimension_numbers<[1], [0], [0], [1], [0, 0, 1, 1], [], []>} : vector<16x32xf32>, vector<32x8xf32>, vector<16x8xf32> -> vector<16x8xf32>
    %155 = vector.extract_strided_slice %154 {offsets = [0, 0], sizes = [16, 1], strides = [1, 1]} : vector<16x8xf32> to vector<16x1xf32>
    %156 = arith.mulf %152, %152 : vector<16x1xf32>
    %157 = arith.subf %155, %156 : vector<16x1xf32>
    %158 = vector.broadcast %152 : vector<16x1xf32> to vector<16x32xf32>
    %159 = arith.subf %146, %158 : vector<16x32xf32>
    %cst_84 = arith.constant 9.99999974E-6 : f32
    %160 = vector.broadcast %cst_84 : f32 to vector<16x1xf32>
    %161 = arith.addf %157, %160 : vector<16x1xf32>
    %162 = math.rsqrt %161 : vector<16x1xf32>
    %163 = vector.broadcast %162 : vector<16x1xf32> to vector<16x32xf32>
    %164 = arith.mulf %159, %163 : vector<16x32xf32>
    %165 = vector.broadcast %148 : vector<1x32xf32> to vector<16x32xf32>
    %166 = arith.mulf %164, %165 : vector<16x32xf32>
    %167 = vector.broadcast %150 : vector<1x32xf32> to vector<16x32xf32>
    %168 = arith.addf %166, %167 : vector<16x32xf32>
    %169 = tpu.concatenate %168, %8 in 1 : vector<16x32xf32>, vector<16x1xf32> -> vector<16x33xf32>
    %c1_85 = arith.constant 1 : index
    %c0_86 = arith.constant 0 : index
    %c0_87 = arith.constant 0 : index
    %c0_88 = arith.constant 0 : index
    %170 = vector.load %arg2[%c1_85, %c0_86, %c0_87, %c0_88] : memref<2x32x8x33xf32, #tpu.memory_space<vmem>>, vector<1x12x8x33xf32>
    %171 = vector.shape_cast %170 : vector<1x12x8x33xf32> to vector<12x8x33xf32>
    %172 = vector.shape_cast %169 : vector<16x33xf32> to vector<1x16x33xf32>
    %173 = vector.shape_cast %172 : vector<1x16x33xf32> to vector<1x16x33xf32>
    %174 = vector.broadcast %173 : vector<1x16x33xf32> to vector<12x16x33xf32>
    "tpu.trace_start"() <{level = 10 : i32, message = "hld,hkd->hlk"}> : () -> ()
    %cst_89 = arith.constant dense<0.000000e+00> : vector<12x16x8xf32>
    %175 = tpu.matmul %174, %171, %cst_89 {dimension_numbers = #tpu.dot_dimension_numbers<[2], [2], [1], [1], [0, 0, 0, 1, 1, 1], [0], [0]>} : vector<12x16x33xf32>, vector<12x8x33xf32>, vector<12x16x8xf32> -> vector<12x16x8xf32>
    "tpu.trace_stop"() : () -> ()
    %176 = vector.extract_strided_slice %175 {offsets = [0, 0, 0], sizes = [4, 16, 8], strides = [1, 1, 1]} : vector<12x16x8xf32> to vector<4x16x8xf32>
    %177 = vector.extract_strided_slice %175 {offsets = [4, 0, 0], sizes = [4, 16, 8], strides = [1, 1, 1]} : vector<12x16x8xf32> to vector<4x16x8xf32>
    %178 = vector.extract_strided_slice %175 {offsets = [8, 0, 0], sizes = [4, 16, 8], strides = [1, 1, 1]} : vector<12x16x8xf32> to vector<4x16x8xf32>
    %c1_90 = arith.constant 1 : index
    %c24_91 = arith.constant 24 : index
    %c0_92 = arith.constant 0 : index
    %c0_93 = arith.constant 0 : index
    %179 = vector.load %arg2[%c1_90, %c24_91, %c0_92, %c0_93] : memref<2x32x8x33xf32, #tpu.memory_space<vmem>>, vector<1x4x8x32xf32>
    %180 = vector.shape_cast %179 : vector<1x4x8x32xf32> to vector<4x8x32xf32>
    %c1_94 = arith.constant 1 : index
    %c0_95 = arith.constant 0 : index
    %c0_96 = arith.constant 0 : index
    %181 = vector.load %arg4[%c1_94, %c0_95, %c0_96] : memref<2x16x128xf32, #tpu.memory_space<vmem>>, vector<1x1x32xf32>
    %182 = vector.shape_cast %181 : vector<1x1x32xf32> to vector<1x32xf32>
    "tpu.trace_start"() <{level = 10 : i32, message = "hqd,hkd->hqk"}> : () -> ()
    %cst_97 = arith.constant dense<0.000000e+00> : vector<4x16x16xf32>
    %183 = tpu.matmul %176, %177, %cst_97 {dimension_numbers = #tpu.dot_dimension_numbers<[2], [2], [1], [1], [0, 0, 0, 1, 1, 1], [0], [0]>} : vector<4x16x8xf32>, vector<4x16x8xf32>, vector<4x16x16xf32> -> vector<4x16x16xf32>
    "tpu.trace_stop"() : () -> ()
    %184 = vector.shape_cast %5 : vector<16x16xf32> to vector<1x16x16xf32>
    %185 = vector.broadcast %184 : vector<1x16x16xf32> to vector<4x16x16xf32>
    %186 = arith.addf %183, %185 : vector<4x16x16xf32>
    %cst_98 = arith.constant dense<0xFF800000> : vector<4x16xf32>
    %187 = vector.multi_reduction <maximumf>, %186, %cst_98 [2] : vector<4x16x16xf32> to vector<4x16xf32>
    %188 = vector.shape_cast %187 : vector<4x16xf32> to vector<4x16x1xf32>
    %189 = vector.broadcast %188 : vector<4x16x1xf32> to vector<4x16x16xf32>
    %190 = arith.subf %186, %189 : vector<4x16x16xf32>
    %191 = math.exp %190 : vector<4x16x16xf32>
    %cst_99 = arith.constant dense<0.000000e+00> : vector<4x16xf32>
    %192 = vector.multi_reduction <add>, %191, %cst_99 [2] : vector<4x16x16xf32> to vector<4x16xf32>
    %193 = vector.shape_cast %192 : vector<4x16xf32> to vector<4x16x1xf32>
    %194 = tpu.reciprocal %193 {approx = true} : vector<4x16x1xf32> -> vector<4x16x1xf32>
    %195 = vector.broadcast %194 : vector<4x16x1xf32> to vector<4x16x16xf32>
    %196 = arith.mulf %191, %195 : vector<4x16x16xf32>
    "tpu.trace_start"() <{level = 10 : i32, message = "hqk,hkd->hqd"}> : () -> ()
    %cst_100 = arith.constant dense<0.000000e+00> : vector<4x16x8xf32>
    %197 = tpu.matmul %196, %178, %cst_100 {dimension_numbers = #tpu.dot_dimension_numbers<[2], [1], [1], [2], [0, 0, 0, 1, 1, 2], [0], [0]>} : vector<4x16x16xf32>, vector<4x16x8xf32>, vector<4x16x8xf32> -> vector<4x16x8xf32>
    "tpu.trace_stop"() : () -> ()
    "tpu.trace_start"() <{level = 10 : i32, message = "hqd,hde->hqe"}> : () -> ()
    %cst_101 = arith.constant dense<0.000000e+00> : vector<4x16x32xf32>
    %198 = tpu.matmul %197, %180, %cst_101 {dimension_numbers = #tpu.dot_dimension_numbers<[2], [1], [1], [2], [0, 0, 0, 1, 1, 2], [0], [0]>} : vector<4x16x8xf32>, vector<4x8x32xf32>, vector<4x16x32xf32> -> vector<4x16x32xf32>
    "tpu.trace_stop"() : () -> ()
    %cst_102 = arith.constant dense<0.000000e+00> : vector<16x32xf32>
    %199 = vector.multi_reduction <add>, %198, %cst_102 [0] : vector<4x16x32xf32> to vector<16x32xf32>
    %200 = vector.broadcast %182 : vector<1x32xf32> to vector<16x32xf32>
    %201 = arith.addf %199, %200 : vector<16x32xf32>
    %202 = arith.addf %168, %201 : vector<16x32xf32>
    %c1_103 = arith.constant 1 : index
    %c4_104 = arith.constant 4 : index
    %c0_105 = arith.constant 0 : index
    %203 = vector.load %arg4[%c1_103, %c4_104, %c0_105] : memref<2x16x128xf32, #tpu.memory_space<vmem>>, vector<1x1x32xf32>
    %204 = vector.shape_cast %203 : vector<1x1x32xf32> to vector<1x32xf32>
    %c1_106 = arith.constant 1 : index
    %c5_107 = arith.constant 5 : index
    %c0_108 = arith.constant 0 : index
    %205 = vector.load %arg4[%c1_106, %c5_107, %c0_108] : memref<2x16x128xf32, #tpu.memory_space<vmem>>, vector<1x1x32xf32>
    %206 = vector.shape_cast %205 : vector<1x1x32xf32> to vector<1x32xf32>
    %cst_109 = arith.constant dense<0.000000e+00> : vector<16x8xf32>
    %207 = tpu.matmul %202, %11, %cst_109 {dimension_numbers = #tpu.dot_dimension_numbers<[1], [0], [0], [1], [0, 0, 1, 1], [], []>} : vector<16x32xf32>, vector<32x8xf32>, vector<16x8xf32> -> vector<16x8xf32>
    %208 = vector.extract_strided_slice %207 {offsets = [0, 0], sizes = [16, 1], strides = [1, 1]} : vector<16x8xf32> to vector<16x1xf32>
    %209 = arith.mulf %202, %202 : vector<16x32xf32>
    %cst_110 = arith.constant dense<0.000000e+00> : vector<16x8xf32>
    %210 = tpu.matmul %209, %11, %cst_110 {dimension_numbers = #tpu.dot_dimension_numbers<[1], [0], [0], [1], [0, 0, 1, 1], [], []>} : vector<16x32xf32>, vector<32x8xf32>, vector<16x8xf32> -> vector<16x8xf32>
    %211 = vector.extract_strided_slice %210 {offsets = [0, 0], sizes = [16, 1], strides = [1, 1]} : vector<16x8xf32> to vector<16x1xf32>
    %212 = arith.mulf %208, %208 : vector<16x1xf32>
    %213 = arith.subf %211, %212 : vector<16x1xf32>
    %214 = vector.broadcast %208 : vector<16x1xf32> to vector<16x32xf32>
    %215 = arith.subf %202, %214 : vector<16x32xf32>
    %cst_111 = arith.constant 9.99999974E-6 : f32
    %216 = vector.broadcast %cst_111 : f32 to vector<16x1xf32>
    %217 = arith.addf %213, %216 : vector<16x1xf32>
    %218 = math.rsqrt %217 : vector<16x1xf32>
    %219 = vector.broadcast %218 : vector<16x1xf32> to vector<16x32xf32>
    %220 = arith.mulf %215, %219 : vector<16x32xf32>
    %221 = vector.broadcast %204 : vector<1x32xf32> to vector<16x32xf32>
    %222 = arith.mulf %220, %221 : vector<16x32xf32>
    %223 = vector.broadcast %206 : vector<1x32xf32> to vector<16x32xf32>
    %224 = arith.addf %222, %223 : vector<16x32xf32>
    %225 = tpu.concatenate %224, %8 in 1 : vector<16x32xf32>, vector<16x1xf32> -> vector<16x33xf32>
    %c1_112 = arith.constant 1 : index
    %c12_113 = arith.constant 12 : index
    %c0_114 = arith.constant 0 : index
    %c0_115 = arith.constant 0 : index
    %226 = vector.load %arg2[%c1_112, %c12_113, %c0_114, %c0_115] : memref<2x32x8x33xf32, #tpu.memory_space<vmem>>, vector<1x4x8x33xf32>
    %227 = vector.shape_cast %226 : vector<1x4x8x33xf32> to vector<4x8x33xf32>
    %228 = vector.shape_cast %225 : vector<16x33xf32> to vector<1x16x33xf32>
    %229 = vector.shape_cast %228 : vector<1x16x33xf32> to vector<1x16x33xf32>
    %230 = vector.broadcast %229 : vector<1x16x33xf32> to vector<4x16x33xf32>
    "tpu.trace_start"() <{level = 10 : i32, message = "hld,hkd->hlk"}> : () -> ()
    %cst_116 = arith.constant dense<0.000000e+00> : vector<4x16x8xf32>
    %231 = tpu.matmul %230, %227, %cst_116 {dimension_numbers = #tpu.dot_dimension_numbers<[2], [2], [1], [1], [0, 0, 0, 1, 1, 1], [0], [0]>} : vector<4x16x33xf32>, vector<4x8x33xf32>, vector<4x16x8xf32> -> vector<4x16x8xf32>
    "tpu.trace_stop"() : () -> ()
    %c1_117 = arith.constant 1 : index
    %c16_118 = arith.constant 16 : index
    %c0_119 = arith.constant 0 : index
    %c0_120 = arith.constant 0 : index
    %232 = vector.load %arg2[%c1_117, %c16_118, %c0_119, %c0_120] : memref<2x32x8x33xf32, #tpu.memory_space<vmem>>, vector<1x8x8x33xf32>
    %233 = vector.shape_cast %232 : vector<1x8x8x33xf32> to vector<8x8x33xf32>
    %234 = vector.shape_cast %12 : vector<16x33xf32> to vector<1x16x33xf32>
    %235 = vector.shape_cast %234 : vector<1x16x33xf32> to vector<1x16x33xf32>
    %236 = vector.broadcast %235 : vector<1x16x33xf32> to vector<8x16x33xf32>
    "tpu.trace_start"() <{level = 10 : i32, message = "hld,hkd->hlk"}> : () -> ()
    %cst_121 = arith.constant dense<0.000000e+00> : vector<8x16x8xf32>
    %237 = tpu.matmul %236, %233, %cst_121 {dimension_numbers = #tpu.dot_dimension_numbers<[2], [2], [1], [1], [0, 0, 0, 1, 1, 1], [0], [0]>} : vector<8x16x33xf32>, vector<8x8x33xf32>, vector<8x16x8xf32> -> vector<8x16x8xf32>
    "tpu.trace_stop"() : () -> ()
    %238 = vector.extract_strided_slice %237 {offsets = [0, 0, 0], sizes = [4, 16, 8], strides = [1, 1, 1]} : vector<8x16x8xf32> to vector<4x16x8xf32>
    %239 = vector.extract_strided_slice %237 {offsets = [4, 0, 0], sizes = [4, 16, 8], strides = [1, 1, 1]} : vector<8x16x8xf32> to vector<4x16x8xf32>
    %c1_122 = arith.constant 1 : index
    %c28_123 = arith.constant 28 : index
    %c0_124 = arith.constant 0 : index
    %c0_125 = arith.constant 0 : index
    %240 = vector.load %arg2[%c1_122, %c28_123, %c0_124, %c0_125] : memref<2x32x8x33xf32, #tpu.memory_space<vmem>>, vector<1x4x8x32xf32>
    %241 = vector.shape_cast %240 : vector<1x4x8x32xf32> to vector<4x8x32xf32>
    %c1_126 = arith.constant 1 : index
    %c1_127 = arith.constant 1 : index
    %c0_128 = arith.constant 0 : index
    %242 = vector.load %arg4[%c1_126, %c1_127, %c0_128] : memref<2x16x128xf32, #tpu.memory_space<vmem>>, vector<1x1x32xf32>
    %243 = vector.shape_cast %242 : vector<1x1x32xf32> to vector<1x32xf32>
    "tpu.trace_start"() <{level = 10 : i32, message = "hqd,hkd->hqk"}> : () -> ()
    %cst_129 = arith.constant dense<0.000000e+00> : vector<4x16x16xf32>
    %244 = tpu.matmul %231, %238, %cst_129 {dimension_numbers = #tpu.dot_dimension_numbers<[2], [2], [1], [1], [0, 0, 0, 1, 1, 1], [0], [0]>} : vector<4x16x8xf32>, vector<4x16x8xf32>, vector<4x16x16xf32> -> vector<4x16x16xf32>
    "tpu.trace_stop"() : () -> ()
    %245 = vector.shape_cast %7 : vector<16x16xf32> to vector<1x16x16xf32>
    %246 = vector.broadcast %245 : vector<1x16x16xf32> to vector<4x16x16xf32>
    %247 = arith.addf %244, %246 : vector<4x16x16xf32>
    %cst_130 = arith.constant dense<0xFF800000> : vector<4x16xf32>
    %248 = vector.multi_reduction <maximumf>, %247, %cst_130 [2] : vector<4x16x16xf32> to vector<4x16xf32>
    %249 = vector.shape_cast %248 : vector<4x16xf32> to vector<4x16x1xf32>
    %250 = vector.broadcast %249 : vector<4x16x1xf32> to vector<4x16x16xf32>
    %251 = arith.subf %247, %250 : vector<4x16x16xf32>
    %252 = math.exp %251 : vector<4x16x16xf32>
    %cst_131 = arith.constant dense<0.000000e+00> : vector<4x16xf32>
    %253 = vector.multi_reduction <add>, %252, %cst_131 [2] : vector<4x16x16xf32> to vector<4x16xf32>
    %254 = vector.shape_cast %253 : vector<4x16xf32> to vector<4x16x1xf32>
    %255 = tpu.reciprocal %254 {approx = true} : vector<4x16x1xf32> -> vector<4x16x1xf32>
    %256 = vector.broadcast %255 : vector<4x16x1xf32> to vector<4x16x16xf32>
    %257 = arith.mulf %252, %256 : vector<4x16x16xf32>
    "tpu.trace_start"() <{level = 10 : i32, message = "hqk,hkd->hqd"}> : () -> ()
    %cst_132 = arith.constant dense<0.000000e+00> : vector<4x16x8xf32>
    %258 = tpu.matmul %257, %239, %cst_132 {dimension_numbers = #tpu.dot_dimension_numbers<[2], [1], [1], [2], [0, 0, 0, 1, 1, 2], [0], [0]>} : vector<4x16x16xf32>, vector<4x16x8xf32>, vector<4x16x8xf32> -> vector<4x16x8xf32>
    "tpu.trace_stop"() : () -> ()
    "tpu.trace_start"() <{level = 10 : i32, message = "hqd,hde->hqe"}> : () -> ()
    %cst_133 = arith.constant dense<0.000000e+00> : vector<4x16x32xf32>
    %259 = tpu.matmul %258, %241, %cst_133 {dimension_numbers = #tpu.dot_dimension_numbers<[2], [1], [1], [2], [0, 0, 0, 1, 1, 2], [0], [0]>} : vector<4x16x8xf32>, vector<4x8x32xf32>, vector<4x16x32xf32> -> vector<4x16x32xf32>
    "tpu.trace_stop"() : () -> ()
    %cst_134 = arith.constant dense<0.000000e+00> : vector<16x32xf32>
    %260 = vector.multi_reduction <add>, %259, %cst_134 [0] : vector<4x16x32xf32> to vector<16x32xf32>
    %261 = vector.broadcast %243 : vector<1x32xf32> to vector<16x32xf32>
    %262 = arith.addf %260, %261 : vector<16x32xf32>
    %263 = arith.addf %224, %262 : vector<16x32xf32>
    %c1_135 = arith.constant 1 : index
    %c6_136 = arith.constant 6 : index
    %c0_137 = arith.constant 0 : index
    %264 = vector.load %arg4[%c1_135, %c6_136, %c0_137] : memref<2x16x128xf32, #tpu.memory_space<vmem>>, vector<1x1x32xf32>
    %265 = vector.shape_cast %264 : vector<1x1x32xf32> to vector<1x32xf32>
    %c1_138 = arith.constant 1 : index
    %c7_139 = arith.constant 7 : index
    %c0_140 = arith.constant 0 : index
    %266 = vector.load %arg4[%c1_138, %c7_139, %c0_140] : memref<2x16x128xf32, #tpu.memory_space<vmem>>, vector<1x1x32xf32>
    %267 = vector.shape_cast %266 : vector<1x1x32xf32> to vector<1x32xf32>
    %cst_141 = arith.constant dense<0.000000e+00> : vector<16x8xf32>
    %268 = tpu.matmul %263, %11, %cst_141 {dimension_numbers = #tpu.dot_dimension_numbers<[1], [0], [0], [1], [0, 0, 1, 1], [], []>} : vector<16x32xf32>, vector<32x8xf32>, vector<16x8xf32> -> vector<16x8xf32>
    %269 = vector.extract_strided_slice %268 {offsets = [0, 0], sizes = [16, 1], strides = [1, 1]} : vector<16x8xf32> to vector<16x1xf32>
    %270 = arith.mulf %263, %263 : vector<16x32xf32>
    %cst_142 = arith.constant dense<0.000000e+00> : vector<16x8xf32>
    %271 = tpu.matmul %270, %11, %cst_142 {dimension_numbers = #tpu.dot_dimension_numbers<[1], [0], [0], [1], [0, 0, 1, 1], [], []>} : vector<16x32xf32>, vector<32x8xf32>, vector<16x8xf32> -> vector<16x8xf32>
    %272 = vector.extract_strided_slice %271 {offsets = [0, 0], sizes = [16, 1], strides = [1, 1]} : vector<16x8xf32> to vector<16x1xf32>
    %273 = arith.mulf %269, %269 : vector<16x1xf32>
    %274 = arith.subf %272, %273 : vector<16x1xf32>
    %275 = vector.broadcast %269 : vector<16x1xf32> to vector<16x32xf32>
    %276 = arith.subf %263, %275 : vector<16x32xf32>
    %cst_143 = arith.constant 9.99999974E-6 : f32
    %277 = vector.broadcast %cst_143 : f32 to vector<16x1xf32>
    %278 = arith.addf %274, %277 : vector<16x1xf32>
    %279 = math.rsqrt %278 : vector<16x1xf32>
    %280 = vector.broadcast %279 : vector<16x1xf32> to vector<16x32xf32>
    %281 = arith.mulf %276, %280 : vector<16x32xf32>
    %282 = vector.broadcast %265 : vector<1x32xf32> to vector<16x32xf32>
    %283 = arith.mulf %281, %282 : vector<16x32xf32>
    %284 = vector.broadcast %267 : vector<1x32xf32> to vector<16x32xf32>
    %285 = arith.addf %283, %284 : vector<16x32xf32>
    %c1_144 = arith.constant 1 : index
    %c0_145 = arith.constant 0 : index
    %c0_146 = arith.constant 0 : index
    %c0_147 = arith.constant 0 : index
    %286 = vector.load %arg3[%c1_144, %c0_145, %c0_146, %c0_147] : memref<2x2x64x64xf32, #tpu.memory_space<vmem>>, vector<1x1x32x64xf32>
    %287 = vector.shape_cast %286 : vector<1x1x32x64xf32> to vector<32x64xf32>
    %cst_148 = arith.constant dense<0.000000e+00> : vector<16x64xf32>
    %288 = tpu.matmul %285, %287, %cst_148 {dimension_numbers = #tpu.dot_dimension_numbers<[1], [0], [0], [1], [0, 0, 1, 1], [], []>} : vector<16x32xf32>, vector<32x64xf32>, vector<16x64xf32> -> vector<16x64xf32>
    %c1_149 = arith.constant 1 : index
    %c2_150 = arith.constant 2 : index
    %c0_151 = arith.constant 0 : index
    %289 = vector.load %arg4[%c1_149, %c2_150, %c0_151] : memref<2x16x128xf32, #tpu.memory_space<vmem>>, vector<1x1x64xf32>
    %290 = vector.shape_cast %289 : vector<1x1x64xf32> to vector<1x64xf32>
    %291 = vector.broadcast %290 : vector<1x64xf32> to vector<16x64xf32>
    %292 = arith.addf %288, %291 : vector<16x64xf32>
    %cst_152 = arith.constant 0.000000e+00 : f32
    %293 = vector.broadcast %cst_152 : f32 to vector<16x64xf32>
    %294 = arith.maximumf %292, %293 : vector<16x64xf32>
    %c1_153 = arith.constant 1 : index
    %c1_154 = arith.constant 1 : index
    %c0_155 = arith.constant 0 : index
    %c0_156 = arith.constant 0 : index
    %295 = vector.load %arg3[%c1_153, %c1_154, %c0_155, %c0_156] : memref<2x2x64x64xf32, #tpu.memory_space<vmem>>, vector<1x1x64x32xf32>
    %296 = vector.shape_cast %295 : vector<1x1x64x32xf32> to vector<64x32xf32>
    %cst_157 = arith.constant dense<0.000000e+00> : vector<16x32xf32>
    %297 = tpu.matmul %294, %296, %cst_157 {dimension_numbers = #tpu.dot_dimension_numbers<[1], [0], [0], [1], [0, 0, 1, 1], [], []>} : vector<16x64xf32>, vector<64x32xf32>, vector<16x32xf32> -> vector<16x32xf32>
    %c1_158 = arith.constant 1 : index
    %c3_159 = arith.constant 3 : index
    %c0_160 = arith.constant 0 : index
    %298 = vector.load %arg4[%c1_158, %c3_159, %c0_160] : memref<2x16x128xf32, #tpu.memory_space<vmem>>, vector<1x1x32xf32>
    %299 = vector.shape_cast %298 : vector<1x1x32xf32> to vector<1x32xf32>
    %300 = vector.broadcast %299 : vector<1x32xf32> to vector<16x32xf32>
    %301 = arith.addf %297, %300 : vector<16x32xf32>
    %302 = arith.addf %285, %301 : vector<16x32xf32>
    %c1_161 = arith.constant 1 : index
    %c8_162 = arith.constant 8 : index
    %c0_163 = arith.constant 0 : index
    %303 = vector.load %arg4[%c1_161, %c8_162, %c0_163] : memref<2x16x128xf32, #tpu.memory_space<vmem>>, vector<1x1x32xf32>
    %304 = vector.shape_cast %303 : vector<1x1x32xf32> to vector<1x32xf32>
    %c1_164 = arith.constant 1 : index
    %c9_165 = arith.constant 9 : index
    %c0_166 = arith.constant 0 : index
    %305 = vector.load %arg4[%c1_164, %c9_165, %c0_166] : memref<2x16x128xf32, #tpu.memory_space<vmem>>, vector<1x1x32xf32>
    %306 = vector.shape_cast %305 : vector<1x1x32xf32> to vector<1x32xf32>
    %cst_167 = arith.constant dense<0.000000e+00> : vector<16x8xf32>
    %307 = tpu.matmul %302, %11, %cst_167 {dimension_numbers = #tpu.dot_dimension_numbers<[1], [0], [0], [1], [0, 0, 1, 1], [], []>} : vector<16x32xf32>, vector<32x8xf32>, vector<16x8xf32> -> vector<16x8xf32>
    %308 = vector.extract_strided_slice %307 {offsets = [0, 0], sizes = [16, 1], strides = [1, 1]} : vector<16x8xf32> to vector<16x1xf32>
    %309 = arith.mulf %302, %302 : vector<16x32xf32>
    %cst_168 = arith.constant dense<0.000000e+00> : vector<16x8xf32>
    %310 = tpu.matmul %309, %11, %cst_168 {dimension_numbers = #tpu.dot_dimension_numbers<[1], [0], [0], [1], [0, 0, 1, 1], [], []>} : vector<16x32xf32>, vector<32x8xf32>, vector<16x8xf32> -> vector<16x8xf32>
    %311 = vector.extract_strided_slice %310 {offsets = [0, 0], sizes = [16, 1], strides = [1, 1]} : vector<16x8xf32> to vector<16x1xf32>
    %312 = arith.mulf %308, %308 : vector<16x1xf32>
    %313 = arith.subf %311, %312 : vector<16x1xf32>
    %314 = vector.broadcast %308 : vector<16x1xf32> to vector<16x32xf32>
    %315 = arith.subf %302, %314 : vector<16x32xf32>
    %cst_169 = arith.constant 9.99999974E-6 : f32
    %316 = vector.broadcast %cst_169 : f32 to vector<16x1xf32>
    %317 = arith.addf %313, %316 : vector<16x1xf32>
    %318 = math.rsqrt %317 : vector<16x1xf32>
    %319 = vector.broadcast %318 : vector<16x1xf32> to vector<16x32xf32>
    %320 = arith.mulf %315, %319 : vector<16x32xf32>
    %321 = vector.broadcast %304 : vector<1x32xf32> to vector<16x32xf32>
    %322 = arith.mulf %320, %321 : vector<16x32xf32>
    %323 = vector.broadcast %306 : vector<1x32xf32> to vector<16x32xf32>
    %324 = arith.addf %322, %323 : vector<16x32xf32>
    %c0_170 = arith.constant 0 : index
    %c0_171 = arith.constant 0 : index
    %325 = vector.load %arg5[%c0_170, %c0_171] : memref<40x128xf32, #tpu.memory_space<vmem>>, vector<32x128xf32>
    %cst_172 = arith.constant dense<0.000000e+00> : vector<16x128xf32>
    %326 = tpu.matmul %324, %325, %cst_172 {dimension_numbers = #tpu.dot_dimension_numbers<[1], [0], [0], [1], [0, 0, 1, 1], [], []>} : vector<16x32xf32>, vector<32x128xf32>, vector<16x128xf32> -> vector<16x128xf32>
    %c32 = arith.constant 32 : index
    %c0_173 = arith.constant 0 : index
    %327 = vector.load %arg5[%c32, %c0_173] : memref<40x128xf32, #tpu.memory_space<vmem>>, vector<1x128xf32>
    %328 = vector.broadcast %327 : vector<1x128xf32> to vector<16x128xf32>
    %329 = arith.addf %326, %328 : vector<16x128xf32>
    %c0_174 = arith.constant 0 : index
    %c0_175 = arith.constant 0 : index
    %330 = vector.load %arg6[%c0_174, %c0_175] : memref<16x128xf32, #tpu.memory_space<vmem>>, vector<16x128xf32>
    tpu.vector_store %arg6[%c0_174, %c0_175], %329 {strides = array<i32>} : memref<16x128xf32, #tpu.memory_space<vmem>>, vector<16x128xf32>,
    return
  }
  func.func @transform_0(%arg0: i32) -> (i32, i32, i32) {
    %c0_i32 = arith.constant 0 : i32
    %c0_i32_0 = arith.constant 0 : i32
    %c0_i32_1 = arith.constant 0 : i32
    %c0_i32_2 = arith.constant 0 : i32
    return %c0_i32, %c0_i32_0, %c0_i32_1 : i32, i32, i32
  }
  func.func @transform_1(%arg0: i32) -> (i32, i32, i32, i32) {
    %c0_i32 = arith.constant 0 : i32
    %c0_i32_0 = arith.constant 0 : i32
    %c0_i32_1 = arith.constant 0 : i32
    %c0_i32_2 = arith.constant 0 : i32
    %c0_i32_3 = arith.constant 0 : i32
    return %c0_i32, %c0_i32_0, %c0_i32_1, %c0_i32_2 : i32, i32, i32, i32
  }
  func.func @transform_2(%arg0: i32) -> (i32, i32, i32, i32) {
    %c0_i32 = arith.constant 0 : i32
    %c0_i32_0 = arith.constant 0 : i32
    %c0_i32_1 = arith.constant 0 : i32
    %c0_i32_2 = arith.constant 0 : i32
    %c0_i32_3 = arith.constant 0 : i32
    return %c0_i32, %c0_i32_0, %c0_i32_1, %c0_i32_2 : i32, i32, i32, i32
  }
  func.func @transform_3(%arg0: i32) -> (i32, i32, i32) {
    %c0_i32 = arith.constant 0 : i32
    %c0_i32_0 = arith.constant 0 : i32
    %c0_i32_1 = arith.constant 0 : i32
    %c0_i32_2 = arith.constant 0 : i32
    return %c0_i32, %c0_i32_0, %c0_i32_1 : i32, i32, i32
  }
  func.func @transform_4(%arg0: i32) -> (i32, i32) {
    %c0_i32 = arith.constant 0 : i32
    %c0_i32_0 = arith.constant 0 : i32
    %c0_i32_1 = arith.constant 0 : i32
    return %c0_i32, %c0_i32_0 : i32, i32
  }
  func.func @transform_5(%arg0: i32) -> (i32, i32) {
    %c0_i32 = arith.constant 0 : i32
    %c0_i32_0 = arith.constant 0 : i32
    %c0_i32_1 = arith.constant 0 : i32
    return %c0_i32, %c0_i32_0 : i32, i32
  }
}

</mosaic_0001>

<llo_original>
// kernel: transformer_dec_forward.1
$region0: #{transformer_dec_forward.1}
  #allocation0 [shape = 'u32[]', space=smem, size = 0x4, offset = 0x4, fixed_abs, tag = 'smem constant byte address 0x4 - core index']
  #allocation1 [shape = 'u32[72,128]{1,0:T(1,128)}', space=vmem, size = 0x9000, scoped, tag = 'internal scratch']
  %s0 = inlined_call_operand.vmem [shape: f32[4,16,32], index: 0, kind: input, shape index: {}]
  %s1 = inlined_call_operand.vmem [shape: f32[2,32,8,33], index: 1, kind: input, shape index: {}]
  %s2 = inlined_call_operand.vmem [shape: f32[2,2,64,64], index: 2, kind: input, shape index: {}]
  %s3 = inlined_call_operand.vmem [shape: f32[2,16,128], index: 3, kind: input, shape index: {}]
  %s4 = inlined_call_operand.vmem [shape: f32[40,128], index: 4, kind: input, shape index: {}]
  %s5 = inlined_call_operand.vmem [shape: f32[16,128], index: 5, kind: output, shape index: {}]
  %s6 = sld [smem:[#allocation0]]
  $region30: #{transformer_dec_forward.1} parent=0
    _
  %s8 = ssub.s32 1, %s6
  %s9 = scalar_select 0, %s8, %s6
  // Predicated region
  $region2: #{transformer_dec_forward.1} parent=0 // pred_check
    _
  $region3: #{transformer_dec_forward.1} parent=0 // pred_check_branch
    %11 = sbr.rel (0) target = $region5
  $region4: #{transformer_dec_forward.1} parent=0 // pred_region
    _
  $region5: #{transformer_dec_forward.1} parent=0 // pred_fallthru
    _
  // Predicated region
  $region6: #{transformer_dec_forward.1} parent=0 // pred_check
    _
  $region7: #{transformer_dec_forward.1} parent=0 // pred_check_branch
    %13 = sbr.rel (0) target = $region9
  $region8: #{transformer_dec_forward.1} parent=0 // pred_region
    _
  $region9: #{transformer_dec_forward.1} parent=0 // pred_fallthru
    _
  // Predicated region
  $region10: #{transformer_dec_forward.1} parent=0 // pred_check
    _
  $region11: #{transformer_dec_forward.1} parent=0 // pred_check_branch
    %15 = sbr.rel (0) target = $region13
  $region12: #{transformer_dec_forward.1} parent=0 // pred_region
    _
  $region13: #{transformer_dec_forward.1} parent=0 // pred_fallthru
    _
  // Predicated region
  $region14: #{transformer_dec_forward.1} parent=0 // pred_check
    _
  $region15: #{transformer_dec_forward.1} parent=0 // pred_check_branch
    %17 = sbr.rel (0) target = $region17
  $region16: #{transformer_dec_forward.1} parent=0 // pred_region
    _
  $region17: #{transformer_dec_forward.1} parent=0 // pred_fallthru
    _
  // Predicated region
  $region18: #{transformer_dec_forward.1} parent=0 // pred_check
    _
  $region19: #{transformer_dec_forward.1} parent=0 // pred_check_branch
    %19 = sbr.rel (0) target = $region21
  $region20: #{transformer_dec_forward.1} parent=0 // pred_region
    _
  $region21: #{transformer_dec_forward.1} parent=0 // pred_fallthru
    _
  %v20 = vld [vmem:[%s0] sm:$0xff]
  %v21 = vld [vmem:[%s0 + $0x8] sm:$0xff]
  %s22 = scalar_lea.vmem %s0, 16
  %v23 = vld [vmem:[%s22] sm:$0xff]
  %v24 = vld [vmem:[%s22 + $0x8] sm:$0xff]
  %s25 = scalar_lea.vmem %s0, 32
  %v26 = vld [vmem:[%s25] sm:$0xff]
  %v27 = vld [vmem:[%s25 + $0x8] sm:$0xff]
  %s28 = scalar_lea.vmem %s0, 48
  %v29 = vld [vmem:[%s28] sm:$0xff]
  %v30 = vld [vmem:[%s28 + $0x8] sm:$0xff]
  %vm31 = vcmask 7168
  %v32 = vsel %vm31, 0.03125, 0.0
  %vm33 = vcmask 261120
  %v34 = vsel %vm33, %v23, 1.0
  %v35 = vsel %vm33, %v24, 1.0
  %v36 = vsel %vm33, %v20, 1.0
  %v37 = vsel %vm33, %v21, 1.0
  %v38 = vld [vmem:[%s1] sm:$0xff]
  %v39 = vld [vmem:[%s1 + $0x8] sm:$0xff]
  %v40 = vld [vmem:[%s1 + $0x10] sm:$0xff]
  %v41 = vld [vmem:[%s1 + $0x18] sm:$0xff]
  %v42 = vld [vmem:[%s1 + $0x20] sm:$0xff]
  %v43 = vld [vmem:[%s1 + $0x28] sm:$0xff]
  %v44 = vld [vmem:[%s1 + $0x30] sm:$0xff]
  %v45 = vld [vmem:[%s1 + $0x38] sm:$0xff]
  %v46 = vld [vmem:[%s1 + $0x40] sm:$0xff]
  %v47 = vld [vmem:[%s1 + $0x48] sm:$0xff]
  %v48 = vld [vmem:[%s1 + $0x50] sm:$0xff]
  %v49 = vld [vmem:[%s1 + $0x58] sm:$0xff]
  %vm50 = vcmask 269312
  %v52 = vsel %vm50, %v36, 0
  %v55 = vsel %vm50, %v37, 0
  %v58 = vsel %vm50, %v38, 0
  %60 = vmatpush.xpose.msra.mxu0 0.0
  %61 = vmatpush.xpose.msra.mxu0 0.0
  %62 = vmatpush.xpose.msra.mxu0 0.0
  %63 = vmatpush.xpose.msra.mxu0 0.0
  %64 = vmatpush.xpose.msra.mxu0 0.0
  %65 = vmatpush.xpose.msra.mxu0 0.0
  %66 = vmatpush.xpose.msra.mxu0 0.0
  %67 = vmatpush.xpose.msra.mxu0 0.0
  %68 = vmatpush.xpose.msra.mxu0 0.0
  %69 = vmatpush.xpose.msra.mxu0 0.0
  %70 = vmatpush.xpose.msra.mxu0 0.0
  %71 = vmatpush.xpose.msra.mxu0 0.0
  %72 = vmatpush.xpose.msra.mxu0 0.0
  %73 = vmatpush.xpose.msra.mxu0 0.0
  %74 = vmatpush.xpose.msra.mxu0 0.0
  %75 = vmatpush.xpose.msra.mxu0 %v58
  %76 = vmatmul.f32.gmra.mxu0 %v52
  %v77 = vpop.f32.mrf.mxu0
  %v78 = vadd.f32 0.0, %v77
  %79 = vmatmul.f32.gmra.mxu0 %v55
  %v80 = vpop.f32.mrf.mxu0
  %v81 = vadd.f32 0.0, %v80
  %82 = vdwg.mxu0
  %v84 = vsel %vm50, %v39, 0
  %86 = vmatpush.xpose.msra.mxu0 0.0
  %87 = vmatpush.xpose.msra.mxu0 0.0
  %88 = vmatpush.xpose.msra.mxu0 0.0
  %89 = vmatpush.xpose.msra.mxu0 0.0
  %90 = vmatpush.xpose.msra.mxu0 0.0
  %91 = vmatpush.xpose.msra.mxu0 0.0
  %92 = vmatpush.xpose.msra.mxu0 0.0
  %93 = vmatpush.xpose.msra.mxu0 0.0
  %94 = vmatpush.xpose.msra.mxu0 0.0
  %95 = vmatpush.xpose.msra.mxu0 0.0
  %96 = vmatpush.xpose.msra.mxu0 0.0
  %97 = vmatpush.xpose.msra.mxu0 0.0
  %98 = vmatpush.xpose.msra.mxu0 0.0
  %99 = vmatpush.xpose.msra.mxu0 0.0
  %100 = vmatpush.xpose.msra.mxu0 0.0
  %101 = vmatpush.xpose.msra.mxu0 %v84
  %102 = vmatmul.f32.gmra.mxu0 %v52
  %v103 = vpop.f32.mrf.mxu0
  %v104 = vadd.f32 0.0, %v103
  %105 = vmatmul.f32.gmra.mxu0 %v55
  %v106 = vpop.f32.mrf.mxu0
  %v107 = vadd.f32 0.0, %v106
  %108 = vdwg.mxu0
  %v110 = vsel %vm50, %v40, 0
  %112 = vmatpush.xpose.msra.mxu0 0.0
  %113 = vmatpush.xpose.msra.mxu0 0.0
  %114 = vmatpush.xpose.msra.mxu0 0.0
  %115 = vmatpush.xpose.msra.mxu0 0.0
  %116 = vmatpush.xpose.msra.mxu0 0.0
  %117 = vmatpush.xpose.msra.mxu0 0.0
  %118 = vmatpush.xpose.msra.mxu0 0.0
  %119 = vmatpush.xpose.msra.mxu0 0.0
  %120 = vmatpush.xpose.msra.mxu0 0.0
  %121 = vmatpush.xpose.msra.mxu0 0.0
  %122 = vmatpush.xpose.msra.mxu0 0.0
  %123 = vmatpush.xpose.msra.mxu0 0.0
  %124 = vmatpush.xpose.msra.mxu0 0.0
  %125 = vmatpush.xpose.msra.mxu0 0.0
  %126 = vmatpush.xpose.msra.mxu0 0.0
  %127 = vmatpush.xpose.msra.mxu0 %v110
  %128 = vmatmul.f32.gmra.mxu0 %v52
  %v129 = vpop.f32.mrf.mxu0
  %v130 = vadd.f32 0.0, %v129
  %131 = vmatmul.f32.gmra.mxu0 %v55
  %v132 = vpop.f32.mrf.mxu0
  %v133 = vadd.f32 0.0, %v132
  %134 = vdwg.mxu0
  %v136 = vsel %vm50, %v41, 0
  %138 = vmatpush.xpose.msra.mxu0 0.0
  %139 = vmatpush.xpose.msra.mxu0 0.0
  %140 = vmatpush.xpose.msra.mxu0 0.0
  %141 = vmatpush.xpose.msra.mxu0 0.0
  %142 = vmatpush.xpose.msra.mxu0 0.0
  %143 = vmatpush.xpose.msra.mxu0 0.0
  %144 = vmatpush.xpose.msra.mxu0 0.0
  %145 = vmatpush.xpose.msra.mxu0 0.0
  %146 = vmatpush.xpose.msra.mxu0 0.0
  %147 = vmatpush.xpose.msra.mxu0 0.0
  %148 = vmatpush.xpose.msra.mxu0 0.0
  %149 = vmatpush.xpose.msra.mxu0 0.0
  %150 = vmatpush.xpose.msra.mxu0 0.0
  %151 = vmatpush.xpose.msra.mxu0 0.0
  %152 = vmatpush.xpose.msra.mxu0 0.0
  %153 = vmatpush.xpose.msra.mxu0 %v136
  %154 = vmatmul.f32.gmra.mxu0 %v52
  %v155 = vpop.f32.mrf.mxu0
  %v156 = vadd.f32 0.0, %v155
  %157 = vmatmul.f32.gmra.mxu0 %v55
  %v158 = vpop.f32.mrf.mxu0
  %v159 = vadd.f32 0.0, %v158
  %160 = vdwg.mxu0
  %v162 = vsel %vm50, %v42, 0
  %164 = vmatpush.xpose.msra.mxu0 0.0
  %165 = vmatpush.xpose.msra.mxu0 0.0
  %166 = vmatpush.xpose.msra.mxu0 0.0
  %167 = vmatpush.xpose.msra.mxu0 0.0
  %168 = vmatpush.xpose.msra.mxu0 0.0
  %169 = vmatpush.xpose.msra.mxu0 0.0
  %170 = vmatpush.xpose.msra.mxu0 0.0
  %171 = vmatpush.xpose.msra.mxu0 0.0
  %172 = vmatpush.xpose.msra.mxu0 0.0
  %173 = vmatpush.xpose.msra.mxu0 0.0
  %174 = vmatpush.xpose.msra.mxu0 0.0
  %175 = vmatpush.xpose.msra.mxu0 0.0
  %176 = vmatpush.xpose.msra.mxu0 0.0
  %177 = vmatpush.xpose.msra.mxu0 0.0
  %178 = vmatpush.xpose.msra.mxu0 0.0
  %179 = vmatpush.xpose.msra.mxu0 %v162
  %180 = vmatmul.f32.gmra.mxu0 %v52
  %v181 = vpop.f32.mrf.mxu0
  %v182 = vadd.f32 0.0, %v181
  %183 = vmatmul.f32.gmra.mxu0 %v55
  %v184 = vpop.f32.mrf.mxu0
  %v185 = vadd.f32 0.0, %v184
  %186 = vdwg.mxu0
  %v188 = vsel %vm50, %v43, 0
  %190 = vmatpush.xpose.msra.mxu0 0.0
  %191 = vmatpush.xpose.msra.mxu0 0.0
  %192 = vmatpush.xpose.msra.mxu0 0.0
  %193 = vmatpush.xpose.msra.mxu0 0.0
  %194 = vmatpush.xpose.msra.mxu0 0.0
  %195 = vmatpush.xpose.msra.mxu0 0.0
  %196 = vmatpush.xpose.msra.mxu0 0.0
  %197 = vmatpush.xpose.msra.mxu0 0.0
  %198 = vmatpush.xpose.msra.mxu0 0.0
  %199 = vmatpush.xpose.msra.mxu0 0.0
  %200 = vmatpush.xpose.msra.mxu0 0.0
  %201 = vmatpush.xpose.msra.mxu0 0.0
  %202 = vmatpush.xpose.msra.mxu0 0.0
  %203 = vmatpush.xpose.msra.mxu0 0.0
  %204 = vmatpush.xpose.msra.mxu0 0.0
  %205 = vmatpush.xpose.msra.mxu0 %v188
  %206 = vmatmul.f32.gmra.mxu0 %v52
  %v207 = vpop.f32.mrf.mxu0
  %v208 = vadd.f32 0.0, %v207
  %209 = vmatmul.f32.gmra.mxu0 %v55
  %v210 = vpop.f32.mrf.mxu0
  %v211 = vadd.f32 0.0, %v210
  %212 = vdwg.mxu0
  %v214 = vsel %vm50, %v44, 0
  %216 = vmatpush.xpose.msra.mxu0 0.0
  %217 = vmatpush.xpose.msra.mxu0 0.0
  %218 = vmatpush.xpose.msra.mxu0 0.0
  %219 = vmatpush.xpose.msra.mxu0 0.0
  %220 = vmatpush.xpose.msra.mxu0 0.0
  %221 = vmatpush.xpose.msra.mxu0 0.0
  %222 = vmatpush.xpose.msra.mxu0 0.0
  %223 = vmatpush.xpose.msra.mxu0 0.0
  %224 = vmatpush.xpose.msra.mxu0 0.0
  %225 = vmatpush.xpose.msra.mxu0 0.0
  %226 = vmatpush.xpose.msra.mxu0 0.0
  %227 = vmatpush.xpose.msra.mxu0 0.0
  %228 = vmatpush.xpose.msra.mxu0 0.0
  %229 = vmatpush.xpose.msra.mxu0 0.0
  %230 = vmatpush.xpose.msra.mxu0 0.0
  %231 = vmatpush.xpose.msra.mxu0 %v214
  %232 = vmatmul.f32.gmra.mxu0 %v52
  %v233 = vpop.f32.mrf.mxu0
  %v234 = vadd.f32 0.0, %v233
  %235 = vmatmul.f32.gmra.mxu0 %v55
  %v236 = vpop.f32.mrf.mxu0
  %v237 = vadd.f32 0.0, %v236
  %238 = vdwg.mxu0
  %v240 = vsel %vm50, %v45, 0
  %242 = vmatpush.xpose.msra.mxu0 0.0
  %243 = vmatpush.xpose.msra.mxu0 0.0
  %244 = vmatpush.xpose.msra.mxu0 0.0
  %245 = vmatpush.xpose.msra.mxu0 0.0
  %246 = vmatpush.xpose.msra.mxu0 0.0
  %247 = vmatpush.xpose.msra.mxu0 0.0
  %248 = vmatpush.xpose.msra.mxu0 0.0
  %249 = vmatpush.xpose.msra.mxu0 0.0
  %250 = vmatpush.xpose.msra.mxu0 0.0
  %251 = vmatpush.xpose.msra.mxu0 0.0
  %252 = vmatpush.xpose.msra.mxu0 0.0
  %253 = vmatpush.xpose.msra.mxu0 0.0
  %254 = vmatpush.xpose.msra.mxu0 0.0
  %255 = vmatpush.xpose.msra.mxu0 0.0
  %256 = vmatpush.xpose.msra.mxu0 0.0
  %257 = vmatpush.xpose.msra.mxu0 %v240
  %258 = vmatmul.f32.gmra.mxu0 %v52
  %v259 = vpop.f32.mrf.mxu0
  %v260 = vadd.f32 0.0, %v259
  %261 = vmatmul.f32.gmra.mxu0 %v55
  %v262 = vpop.f32.mrf.mxu0
  %v263 = vadd.f32 0.0, %v262
  %264 = vdwg.mxu0
  %v266 = vsel %vm50, %v46, 0
  %268 = vmatpush.xpose.msra.mxu0 0.0
  %269 = vmatpush.xpose.msra.mxu0 0.0
  %270 = vmatpush.xpose.msra.mxu0 0.0
  %271 = vmatpush.xpose.msra.mxu0 0.0
  %272 = vmatpush.xpose.msra.mxu0 0.0
  %273 = vmatpush.xpose.msra.mxu0 0.0
  %274 = vmatpush.xpose.msra.mxu0 0.0
  %275 = vmatpush.xpose.msra.mxu0 0.0
  %276 = vmatpush.xpose.msra.mxu0 0.0
  %277 = vmatpush.xpose.msra.mxu0 0.0
  %278 = vmatpush.xpose.msra.mxu0 0.0
  %279 = vmatpush.xpose.msra.mxu0 0.0
  %280 = vmatpush.xpose.msra.mxu0 0.0
  %281 = vmatpush.xpose.msra.mxu0 0.0
  %282 = vmatpush.xpose.msra.mxu0 0.0
  %283 = vmatpush.xpose.msra.mxu0 %v266
  %284 = vmatmul.f32.gmra.mxu0 %v52
  %v285 = vpop.f32.mrf.mxu0
  %v286 = vadd.f32 0.0, %v285
  %287 = vmatmul.f32.gmra.mxu0 %v55
  %v288 = vpop.f32.mrf.mxu0
  %v289 = vadd.f32 0.0, %v288
  %290 = vdwg.mxu0
  %v292 = vsel %vm50, %v47, 0
  %294 = vmatpush.xpose.msra.mxu0 0.0
  %295 = vmatpush.xpose.msra.mxu0 0.0
  %296 = vmatpush.xpose.msra.mxu0 0.0
  %297 = vmatpush.xpose.msra.mxu0 0.0
  %298 = vmatpush.xpose.msra.mxu0 0.0
  %299 = vmatpush.xpose.msra.mxu0 0.0
  %300 = vmatpush.xpose.msra.mxu0 0.0
  %301 = vmatpush.xpose.msra.mxu0 0.0
  %302 = vmatpush.xpose.msra.mxu0 0.0
  %303 = vmatpush.xpose.msra.mxu0 0.0
  %304 = vmatpush.xpose.msra.mxu0 0.0
  %305 = vmatpush.xpose.msra.mxu0 0.0
  %306 = vmatpush.xpose.msra.mxu0 0.0
  %307 = vmatpush.xpose.msra.mxu0 0.0
  %308 = vmatpush.xpose.msra.mxu0 0.0
  %309 = vmatpush.xpose.msra.mxu0 %v292
  %310 = vmatmul.f32.gmra.mxu0 %v52
  %v311 = vpop.f32.mrf.mxu0
  %v312 = vadd.f32 0.0, %v311
  %313 = vmatmul.f32.gmra.mxu0 %v55
  %v314 = vpop.f32.mrf.mxu0
  %v315 = vadd.f32 0.0, %v314
  %316 = vdwg.mxu0
  %v318 = vsel %vm50, %v48, 0
  %320 = vmatpush.xpose.msra.mxu0 0.0
  %321 = vmatpush.xpose.msra.mxu0 0.0
  %322 = vmatpush.xpose.msra.mxu0 0.0
  %323 = vmatpush.xpose.msra.mxu0 0.0
  %324 = vmatpush.xpose.msra.mxu0 0.0
  %325 = vmatpush.xpose.msra.mxu0 0.0
  %326 = vmatpush.xpose.msra.mxu0 0.0
  %327 = vmatpush.xpose.msra.mxu0 0.0
  %328 = vmatpush.xpose.msra.mxu0 0.0
  %329 = vmatpush.xpose.msra.mxu0 0.0
  %330 = vmatpush.xpose.msra.mxu0 0.0
  %331 = vmatpush.xpose.msra.mxu0 0.0
  %332 = vmatpush.xpose.msra.mxu0 0.0
  %333 = vmatpush.xpose.msra.mxu0 0.0
  %334 = vmatpush.xpose.msra.mxu0 0.0
  %335 = vmatpush.xpose.msra.mxu0 %v318
  %336 = vmatmul.f32.gmra.mxu0 %v52
  %v337 = vpop.f32.mrf.mxu0
  %v338 = vadd.f32 0.0, %v337
  %339 = vmatmul.f32.gmra.mxu0 %v55
  %v340 = vpop.f32.mrf.mxu0
  %v341 = vadd.f32 0.0, %v340
  %342 = vdwg.mxu0
  %v344 = vsel %vm50, %v49, 0
  %346 = vmatpush.xpose.msra.mxu0 0.0
  %347 = vmatpush.xpose.msra.mxu0 0.0
  %348 = vmatpush.xpose.msra.mxu0 0.0
  %349 = vmatpush.xpose.msra.mxu0 0.0
  %350 = vmatpush.xpose.msra.mxu0 0.0
  %351 = vmatpush.xpose.msra.mxu0 0.0
  %352 = vmatpush.xpose.msra.mxu0 0.0
  %353 = vmatpush.xpose.msra.mxu0 0.0
  %354 = vmatpush.xpose.msra.mxu0 0.0
  %355 = vmatpush.xpose.msra.mxu0 0.0
  %356 = vmatpush.xpose.msra.mxu0 0.0
  %357 = vmatpush.xpose.msra.mxu0 0.0
  %358 = vmatpush.xpose.msra.mxu0 0.0
  %359 = vmatpush.xpose.msra.mxu0 0.0
  %360 = vmatpush.xpose.msra.mxu0 0.0
  %361 = vmatpush.xpose.msra.mxu0 %v344
  %362 = vmatmul.f32.gmra.mxu0 %v52
  %v363 = vpop.f32.mrf.mxu0
  %v364 = vadd.f32 0.0, %v363
  %365 = vmatmul.f32.gmra.mxu0 %v55
  %v366 = vpop.f32.mrf.mxu0
  %v367 = vadd.f32 0.0, %v366
  %368 = vdwg.mxu0
  %s369 = scalar_lea.vmem %s1, 192
  %v370 = vld [vmem:[%s369] sm:$0xff]
  %v371 = vld [vmem:[%s369 + $0x8] sm:$0xff]
  %v372 = vld [vmem:[%s369 + $0x10] sm:$0xff]
  %v373 = vld [vmem:[%s369 + $0x18] sm:$0xff]
  %v374 = vld [vmem:[%s3] sm:$0x1]
  %vm375 = vcmask 64512
  %v377 = vsel %vm375, %v78, 0
  %v380 = vsel %vm375, %v81, 0
  %v383 = vsel %vm375, %v182, 0
  %v386 = vsel %vm375, %v185, 0
  %388 = vmatpush.xpose.msra.mxu0 0.0
  %389 = vmatpush.xpose.msra.mxu0 0.0
  %390 = vmatpush.xpose.msra.mxu0 0.0
  %391 = vmatpush.xpose.msra.mxu0 0.0
  %392 = vmatpush.xpose.msra.mxu0 0.0
  %393 = vmatpush.xpose.msra.mxu0 0.0
  %394 = vmatpush.xpose.msra.mxu0 0.0
  %395 = vmatpush.xpose.msra.mxu0 0.0
  %396 = vmatpush.xpose.msra.mxu0 0.0
  %397 = vmatpush.xpose.msra.mxu0 0.0
  %398 = vmatpush.xpose.msra.mxu0 0.0
  %399 = vmatpush.xpose.msra.mxu0 0.0
  %400 = vmatpush.xpose.msra.mxu0 0.0
  %401 = vmatpush.xpose.msra.mxu0 0.0
  %402 = vmatpush.xpose.msra.mxu0 %v386
  %403 = vmatpush.xpose.msra.mxu0 %v383
  %404 = vmatmul.f32.gmra.mxu0 %v377
  %v405 = vpop.f32.mrf.mxu0
  %v406 = vadd.f32 %v26, %v405
  %407 = vmatmul.f32.gmra.mxu0 %v380
  %v408 = vpop.f32.mrf.mxu0
  %v409 = vadd.f32 %v27, %v408
  %410 = vdwg.mxu0
  %v412 = vsel %vm375, %v104, 0
  %v415 = vsel %vm375, %v107, 0
  %v418 = vsel %vm375, %v208, 0
  %v421 = vsel %vm375, %v211, 0
  %423 = vmatpush.xpose.msra.mxu0 0.0
  %424 = vmatpush.xpose.msra.mxu0 0.0
  %425 = vmatpush.xpose.msra.mxu0 0.0
  %426 = vmatpush.xpose.msra.mxu0 0.0
  %427 = vmatpush.xpose.msra.mxu0 0.0
  %428 = vmatpush.xpose.msra.mxu0 0.0
  %429 = vmatpush.xpose.msra.mxu0 0.0
  %430 = vmatpush.xpose.msra.mxu0 0.0
  %431 = vmatpush.xpose.msra.mxu0 0.0
  %432 = vmatpush.xpose.msra.mxu0 0.0
  %433 = vmatpush.xpose.msra.mxu0 0.0
  %434 = vmatpush.xpose.msra.mxu0 0.0
  %435 = vmatpush.xpose.msra.mxu0 0.0
  %436 = vmatpush.xpose.msra.mxu0 0.0
  %437 = vmatpush.xpose.msra.mxu0 %v421
  %438 = vmatpush.xpose.msra.mxu0 %v418
  %439 = vmatmul.f32.gmra.mxu0 %v412
  %v440 = vpop.f32.mrf.mxu0
  %v441 = vadd.f32 %v26, %v440
  %442 = vmatmul.f32.gmra.mxu0 %v415
  %v443 = vpop.f32.mrf.mxu0
  %v444 = vadd.f32 %v27, %v443
  %445 = vdwg.mxu0
  %v447 = vsel %vm375, %v130, 0
  %v450 = vsel %vm375, %v133, 0
  %v453 = vsel %vm375, %v234, 0
  %v456 = vsel %vm375, %v237, 0
  %458 = vmatpush.xpose.msra.mxu0 0.0
  %459 = vmatpush.xpose.msra.mxu0 0.0
  %460 = vmatpush.xpose.msra.mxu0 0.0
  %461 = vmatpush.xpose.msra.mxu0 0.0
  %462 = vmatpush.xpose.msra.mxu0 0.0
  %463 = vmatpush.xpose.msra.mxu0 0.0
  %464 = vmatpush.xpose.msra.mxu0 0.0
  %465 = vmatpush.xpose.msra.mxu0 0.0
  %466 = vmatpush.xpose.msra.mxu0 0.0
  %467 = vmatpush.xpose.msra.mxu0 0.0
  %468 = vmatpush.xpose.msra.mxu0 0.0
  %469 = vmatpush.xpose.msra.mxu0 0.0
  %470 = vmatpush.xpose.msra.mxu0 0.0
  %471 = vmatpush.xpose.msra.mxu0 0.0
  %472 = vmatpush.xpose.msra.mxu0 %v456
  %473 = vmatpush.xpose.msra.mxu0 %v453
  %474 = vmatmul.f32.gmra.mxu0 %v447
  %v475 = vpop.f32.mrf.mxu0
  %v476 = vadd.f32 %v26, %v475
  %477 = vmatmul.f32.gmra.mxu0 %v450
  %v478 = vpop.f32.mrf.mxu0
  %v479 = vadd.f32 %v27, %v478
  %480 = vdwg.mxu0
  %v482 = vsel %vm375, %v156, 0
  %v485 = vsel %vm375, %v159, 0
  %v488 = vsel %vm375, %v260, 0
  %v491 = vsel %vm375, %v263, 0
  %493 = vmatpush.xpose.msra.mxu0 0.0
  %494 = vmatpush.xpose.msra.mxu0 0.0
  %495 = vmatpush.xpose.msra.mxu0 0.0
  %496 = vmatpush.xpose.msra.mxu0 0.0
  %497 = vmatpush.xpose.msra.mxu0 0.0
  %498 = vmatpush.xpose.msra.mxu0 0.0
  %499 = vmatpush.xpose.msra.mxu0 0.0
  %500 = vmatpush.xpose.msra.mxu0 0.0
  %501 = vmatpush.xpose.msra.mxu0 0.0
  %502 = vmatpush.xpose.msra.mxu0 0.0
  %503 = vmatpush.xpose.msra.mxu0 0.0
  %504 = vmatpush.xpose.msra.mxu0 0.0
  %505 = vmatpush.xpose.msra.mxu0 0.0
  %506 = vmatpush.xpose.msra.mxu0 0.0
  %507 = vmatpush.xpose.msra.mxu0 %v491
  %508 = vmatpush.xpose.msra.mxu0 %v488
  %509 = vmatmul.f32.gmra.mxu0 %v482
  %v510 = vpop.f32.mrf.mxu0
  %v511 = vadd.f32 %v26, %v510
  %512 = vmatmul.f32.gmra.mxu0 %v485
  %v513 = vpop.f32.mrf.mxu0
  %v514 = vadd.f32 %v27, %v513
  %515 = vdwg.mxu0
  %vm516 = vcmask 130048
  %v517 = vsel %vm516, %v406, -inf
  %518 = vmax.xlane.f32.xlu0 %v517
  %v519 = vpop.xlane.xlu0 %518
  %v520 = vsel %vm516, %v409, -inf
  %521 = vmax.xlane.f32.xlu0 %v520
  %v522 = vpop.xlane.xlu0 %521
  %v523 = vsel %vm516, %v441, -inf
  %524 = vmax.xlane.f32.xlu0 %v523
  %v525 = vpop.xlane.xlu0 %524
  %v526 = vsel %vm516, %v444, -inf
  %527 = vmax.xlane.f32.xlu0 %v526
  %v528 = vpop.xlane.xlu0 %527
  %v529 = vsel %vm516, %v476, -inf
  %530 = vmax.xlane.f32.xlu0 %v529
  %v531 = vpop.xlane.xlu0 %530
  %v532 = vsel %vm516, %v479, -inf
  %533 = vmax.xlane.f32.xlu0 %v532
  %v534 = vpop.xlane.xlu0 %533
  %v535 = vsel %vm516, %v511, -inf
  %536 = vmax.xlane.f32.xlu0 %v535
  %v537 = vpop.xlane.xlu0 %536
  %v538 = vsel %vm516, %v514, -inf
  %539 = vmax.xlane.f32.xlu0 %v538
  %v540 = vpop.xlane.xlu0 %539
  %v541 = vsub.f32 %v406, %v519
  %v542 = vsub.f32 %v409, %v522
  %v543 = vsub.f32 %v441, %v525
  %v544 = vsub.f32 %v444, %v528
  %v545 = vsub.f32 %v476, %v531
  %v546 = vsub.f32 %v479, %v534
  %v547 = vsub.f32 %v511, %v537
  %v548 = vsub.f32 %v514, %v540
  %v549 = vmul.f32 %v541, 1.442695
  %v550 = vpow.pop %v549
  %v551 = vmul.f32 %v542, 1.442695
  %v552 = vpow.pop %v551
  %v553 = vmul.f32 %v543, 1.442695
  %v554 = vpow.pop %v553
  %v555 = vmul.f32 %v544, 1.442695
  %v556 = vpow.pop %v555
  %v557 = vmul.f32 %v545, 1.442695
  %v558 = vpow.pop %v557
  %v559 = vmul.f32 %v546, 1.442695
  %v560 = vpow.pop %v559
  %v561 = vmul.f32 %v547, 1.442695
  %v562 = vpow.pop %v561
  %v563 = vmul.f32 %v548, 1.442695
  %v564 = vpow.pop %v563
  %v565 = vsel %vm516, %v550, 0.0
  %566 = vadd.xlane.f32.xlu0 %v565
  %v567 = vpop.xlane.xlu0 %566
  %v568 = vsel %vm516, %v552, 0.0
  %569 = vadd.xlane.f32.xlu0 %v568
  %v570 = vpop.xlane.xlu0 %569
  %v571 = vsel %vm516, %v554, 0.0
  %572 = vadd.xlane.f32.xlu0 %v571
  %v573 = vpop.xlane.xlu0 %572
  %v574 = vsel %vm516, %v556, 0.0
  %575 = vadd.xlane.f32.xlu0 %v574
  %v576 = vpop.xlane.xlu0 %575
  %v577 = vsel %vm516, %v558, 0.0
  %578 = vadd.xlane.f32.xlu0 %v577
  %v579 = vpop.xlane.xlu0 %578
  %v580 = vsel %vm516, %v560, 0.0
  %581 = vadd.xlane.f32.xlu0 %v580
  %v582 = vpop.xlane.xlu0 %581
  %v583 = vsel %vm516, %v562, 0.0
  %584 = vadd.xlane.f32.xlu0 %v583
  %v585 = vpop.xlane.xlu0 %584
  %v586 = vsel %vm516, %v564, 0.0
  %587 = vadd.xlane.f32.xlu0 %v586
  %v588 = vpop.xlane.xlu0 %587
  %v589 = vrcp.pop %v567
  %v590 = vrcp.pop %v570
  %v591 = vrcp.pop %v573
  %v592 = vrcp.pop %v576
  %v593 = vrcp.pop %v579
  %v594 = vrcp.pop %v582
  %v595 = vrcp.pop %v585
  %v596 = vrcp.pop %v588
  %v597 = vmul.f32 %v550, %v589
  %v598 = vmul.f32 %v552, %v590
  %v599 = vmul.f32 %v554, %v591
  %v600 = vmul.f32 %v556, %v592
  %v601 = vmul.f32 %v558, %v593
  %v602 = vmul.f32 %v560, %v594
  %v603 = vmul.f32 %v562, %v595
  %v604 = vmul.f32 %v564, %v596
  %v606 = vsel %vm516, %v597, 0
  %v609 = vsel %vm516, %v598, 0
  %611 = vmatpush.msra.mxu0 0.0
  %612 = vmatpush.msra.mxu0 0.0
  %613 = vmatpush.msra.mxu0 0.0
  %614 = vmatpush.msra.mxu0 0.0
  %615 = vmatpush.msra.mxu0 0.0
  %616 = vmatpush.msra.mxu0 0.0
  %617 = vmatpush.msra.mxu0 0.0
  %618 = vmatpush.msra.mxu0 0.0
  %619 = vmatpush.msra.mxu0 0.0
  %620 = vmatpush.msra.mxu0 0.0
  %621 = vmatpush.msra.mxu0 0.0
  %622 = vmatpush.msra.mxu0 0.0
  %623 = vmatpush.msra.mxu0 0.0
  %624 = vmatpush.msra.mxu0 0.0
  %625 = vmatpush.msra.mxu0 %v289
  %626 = vmatpush.msra.mxu0 %v286
  %627 = vmatmul.f32.gmra.mxu0 %v606
  %v628 = vpop.f32.mrf.mxu0
  %v629 = vadd.f32 0.0, %v628
  %630 = vmatmul.f32.gmra.mxu0 %v609
  %v631 = vpop.f32.mrf.mxu0
  %v632 = vadd.f32 0.0, %v631
  %633 = vdwg.mxu0
  %v635 = vsel %vm516, %v599, 0
  %v638 = vsel %vm516, %v600, 0
  %640 = vmatpush.msra.mxu0 0.0
  %641 = vmatpush.msra.mxu0 0.0
  %642 = vmatpush.msra.mxu0 0.0
  %643 = vmatpush.msra.mxu0 0.0
  %644 = vmatpush.msra.mxu0 0.0
  %645 = vmatpush.msra.mxu0 0.0
  %646 = vmatpush.msra.mxu0 0.0
  %647 = vmatpush.msra.mxu0 0.0
  %648 = vmatpush.msra.mxu0 0.0
  %649 = vmatpush.msra.mxu0 0.0
  %650 = vmatpush.msra.mxu0 0.0
  %651 = vmatpush.msra.mxu0 0.0
  %652 = vmatpush.msra.mxu0 0.0
  %653 = vmatpush.msra.mxu0 0.0
  %654 = vmatpush.msra.mxu0 %v315
  %655 = vmatpush.msra.mxu0 %v312
  %656 = vmatmul.f32.gmra.mxu0 %v635
  %v657 = vpop.f32.mrf.mxu0
  %v658 = vadd.f32 0.0, %v657
  %659 = vmatmul.f32.gmra.mxu0 %v638
  %v660 = vpop.f32.mrf.mxu0
  %v661 = vadd.f32 0.0, %v660
  %662 = vdwg.mxu0
  %v664 = vsel %vm516, %v601, 0
  %v667 = vsel %vm516, %v602, 0
  %669 = vmatpush.msra.mxu0 0.0
  %670 = vmatpush.msra.mxu0 0.0
  %671 = vmatpush.msra.mxu0 0.0
  %672 = vmatpush.msra.mxu0 0.0
  %673 = vmatpush.msra.mxu0 0.0
  %674 = vmatpush.msra.mxu0 0.0
  %675 = vmatpush.msra.mxu0 0.0
  %676 = vmatpush.msra.mxu0 0.0
  %677 = vmatpush.msra.mxu0 0.0
  %678 = vmatpush.msra.mxu0 0.0
  %679 = vmatpush.msra.mxu0 0.0
  %680 = vmatpush.msra.mxu0 0.0
  %681 = vmatpush.msra.mxu0 0.0
  %682 = vmatpush.msra.mxu0 0.0
  %683 = vmatpush.msra.mxu0 %v341
  %684 = vmatpush.msra.mxu0 %v338
  %685 = vmatmul.f32.gmra.mxu0 %v664
  %v686 = vpop.f32.mrf.mxu0
  %v687 = vadd.f32 0.0, %v686
  %688 = vmatmul.f32.gmra.mxu0 %v667
  %v689 = vpop.f32.mrf.mxu0
  %v690 = vadd.f32 0.0, %v689
  %691 = vdwg.mxu0
  %v693 = vsel %vm516, %v603, 0
  %v696 = vsel %vm516, %v604, 0
  %698 = vmatpush.msra.mxu0 0.0
  %699 = vmatpush.msra.mxu0 0.0
  %700 = vmatpush.msra.mxu0 0.0
  %701 = vmatpush.msra.mxu0 0.0
  %702 = vmatpush.msra.mxu0 0.0
  %703 = vmatpush.msra.mxu0 0.0
  %704 = vmatpush.msra.mxu0 0.0
  %705 = vmatpush.msra.mxu0 0.0
  %706 = vmatpush.msra.mxu0 0.0
  %707 = vmatpush.msra.mxu0 0.0
  %708 = vmatpush.msra.mxu0 0.0
  %709 = vmatpush.msra.mxu0 0.0
  %710 = vmatpush.msra.mxu0 0.0
  %711 = vmatpush.msra.mxu0 0.0
  %712 = vmatpush.msra.mxu0 %v367
  %713 = vmatpush.msra.mxu0 %v364
  %714 = vmatmul.f32.gmra.mxu0 %v693
  %v715 = vpop.f32.mrf.mxu0
  %v716 = vadd.f32 0.0, %v715
  %717 = vmatmul.f32.gmra.mxu0 %v696
  %v718 = vpop.f32.mrf.mxu0
  %v719 = vadd.f32 0.0, %v718
  %720 = vdwg.mxu0
  %v722 = vsel %vm375, %v629, 0
  %v725 = vsel %vm375, %v632, 0
  %727 = vmatpush.msra.mxu0 0.0
  %728 = vmatpush.msra.mxu0 0.0
  %729 = vmatpush.msra.mxu0 0.0
  %730 = vmatpush.msra.mxu0 0.0
  %731 = vmatpush.msra.mxu0 0.0
  %732 = vmatpush.msra.mxu0 0.0
  %733 = vmatpush.msra.mxu0 0.0
  %734 = vmatpush.msra.mxu0 0.0
  %735 = vmatpush.msra.mxu0 0.0
  %736 = vmatpush.msra.mxu0 0.0
  %737 = vmatpush.msra.mxu0 0.0
  %738 = vmatpush.msra.mxu0 0.0
  %739 = vmatpush.msra.mxu0 0.0
  %740 = vmatpush.msra.mxu0 0.0
  %741 = vmatpush.msra.mxu0 0.0
  %742 = vmatpush.msra.mxu0 %v370
  %743 = vmatmul.f32.gmra.mxu0 %v722
  %v744 = vpop.f32.mrf.mxu0
  %v745 = vadd.f32 0.0, %v744
  %746 = vmatmul.f32.gmra.mxu0 %v725
  %v747 = vpop.f32.mrf.mxu0
  %v748 = vadd.f32 0.0, %v747
  %749 = vdwg.mxu0
  %v751 = vsel %vm375, %v658, 0
  %v754 = vsel %vm375, %v661, 0
  %756 = vmatpush.msra.mxu0 0.0
  %757 = vmatpush.msra.mxu0 0.0
  %758 = vmatpush.msra.mxu0 0.0
  %759 = vmatpush.msra.mxu0 0.0
  %760 = vmatpush.msra.mxu0 0.0
  %761 = vmatpush.msra.mxu0 0.0
  %762 = vmatpush.msra.mxu0 0.0
  %763 = vmatpush.msra.mxu0 0.0
  %764 = vmatpush.msra.mxu0 0.0
  %765 = vmatpush.msra.mxu0 0.0
  %766 = vmatpush.msra.mxu0 0.0
  %767 = vmatpush.msra.mxu0 0.0
  %768 = vmatpush.msra.mxu0 0.0
  %769 = vmatpush.msra.mxu0 0.0
  %770 = vmatpush.msra.mxu0 0.0
  %771 = vmatpush.msra.mxu0 %v371
  %772 = vmatmul.f32.gmra.mxu0 %v751
  %v773 = vpop.f32.mrf.mxu0
  %v774 = vadd.f32 0.0, %v773
  %775 = vmatmul.f32.gmra.mxu0 %v754
  %v776 = vpop.f32.mrf.mxu0
  %v777 = vadd.f32 0.0, %v776
  %778 = vdwg.mxu0
  %v780 = vsel %vm375, %v687, 0
  %v783 = vsel %vm375, %v690, 0
  %785 = vmatpush.msra.mxu0 0.0
  %786 = vmatpush.msra.mxu0 0.0
  %787 = vmatpush.msra.mxu0 0.0
  %788 = vmatpush.msra.mxu0 0.0
  %789 = vmatpush.msra.mxu0 0.0
  %790 = vmatpush.msra.mxu0 0.0
  %791 = vmatpush.msra.mxu0 0.0
  %792 = vmatpush.msra.mxu0 0.0
  %793 = vmatpush.msra.mxu0 0.0
  %794 = vmatpush.msra.mxu0 0.0
  %795 = vmatpush.msra.mxu0 0.0
  %796 = vmatpush.msra.mxu0 0.0
  %797 = vmatpush.msra.mxu0 0.0
  %798 = vmatpush.msra.mxu0 0.0
  %799 = vmatpush.msra.mxu0 0.0
  %800 = vmatpush.msra.mxu0 %v372
  %801 = vmatmul.f32.gmra.mxu0 %v780
  %v802 = vpop.f32.mrf.mxu0
  %v803 = vadd.f32 0.0, %v802
  %804 = vmatmul.f32.gmra.mxu0 %v783
  %v805 = vpop.f32.mrf.mxu0
  %v806 = vadd.f32 0.0, %v805
  %807 = vdwg.mxu0
  %v809 = vsel %vm375, %v716, 0
  %v812 = vsel %vm375, %v719, 0
  %814 = vmatpush.msra.mxu0 0.0
  %815 = vmatpush.msra.mxu0 0.0
  %816 = vmatpush.msra.mxu0 0.0
  %817 = vmatpush.msra.mxu0 0.0
  %818 = vmatpush.msra.mxu0 0.0
  %819 = vmatpush.msra.mxu0 0.0
  %820 = vmatpush.msra.mxu0 0.0
  %821 = vmatpush.msra.mxu0 0.0
  %822 = vmatpush.msra.mxu0 0.0
  %823 = vmatpush.msra.mxu0 0.0
  %824 = vmatpush.msra.mxu0 0.0
  %825 = vmatpush.msra.mxu0 0.0
  %826 = vmatpush.msra.mxu0 0.0
  %827 = vmatpush.msra.mxu0 0.0
  %828 = vmatpush.msra.mxu0 0.0
  %829 = vmatpush.msra.mxu0 %v373
  %830 = vmatmul.f32.gmra.mxu0 %v809
  %v831 = vpop.f32.mrf.mxu0
  %v832 = vadd.f32 0.0, %v831
  %833 = vmatmul.f32.gmra.mxu0 %v812
  %v834 = vpop.f32.mrf.mxu0
  %v835 = vadd.f32 0.0, %v834
  %836 = vdwg.mxu0
  %v837 = vsel %vm33, %v745, 0.0
  %v838 = vsel %vm33, %v774, 0.0
  %v839 = vadd.f32 %v837, %v838
  %v840 = vsel %vm33, %v803, 0.0
  %v841 = vadd.f32 %v839, %v840
  %v842 = vsel %vm33, %v832, 0.0
  %v843 = vadd.f32 %v841, %v842
  %v844 = vsel %vm33, %v748, 0.0
  %v845 = vsel %vm33, %v777, 0.0
  %v846 = vadd.f32 %v844, %v845
  %v847 = vsel %vm33, %v806, 0.0
  %v848 = vadd.f32 %v846, %v847
  %v849 = vsel %vm33, %v835, 0.0
  %v850 = vadd.f32 %v848, %v849
  %v851 = vperm.slane %v374, 0
  %v852 = vadd.f32 %v843, %v851
  %v853 = vadd.f32 %v850, %v851
  %v854 = vadd.f32 %v20, %v852
  %v855 = vadd.f32 %v21, %v853
  %v856 = vld [vmem:[%s3 + $0x4] sm:$0x1]
  %v857 = vld [vmem:[%s3 + $0x5] sm:$0x1]
  %v859 = vsel %vm33, %v854, 0
  %v862 = vsel %vm33, %v855, 0
  %864 = vmatpush.msra.mxu0 0.0
  %865 = vmatpush.msra.mxu0 0.0
  %866 = vmatpush.msra.mxu0 0.0
  %867 = vmatpush.msra.mxu0 0.0
  %868 = vmatpush.msra.mxu0 0.0
  %869 = vmatpush.msra.mxu0 0.0
  %870 = vmatpush.msra.mxu0 0.0
  %871 = vmatpush.msra.mxu0 0.0
  %872 = vmatpush.msra.mxu0 0.0
  %873 = vmatpush.msra.mxu0 0.0
  %874 = vmatpush.msra.mxu0 0.0
  %875 = vmatpush.msra.mxu0 0.0
  %876 = vmatpush.msra.mxu0 %v32
  %877 = vmatpush.msra.mxu0 %v32
  %878 = vmatpush.msra.mxu0 %v32
  %879 = vmatpush.msra.mxu0 %v32
  %880 = vmatmul.f32.gmra.mxu0 %v859
  %v881 = vpop.f32.mrf.mxu0
  %v882 = vadd.f32 0.0, %v881
  %883 = vmatmul.f32.gmra.mxu0 %v862
  %v884 = vpop.f32.mrf.mxu0
  %v885 = vadd.f32 0.0, %v884
  %886 = vdwg.mxu0
  %v887 = vmul.f32 %v854, %v854
  %v888 = vmul.f32 %v855, %v855
  %v890 = vsel %vm33, %v887, 0
  %v893 = vsel %vm33, %v888, 0
  %895 = vmatpush.msra.mxu0 0.0
  %896 = vmatpush.msra.mxu0 0.0
  %897 = vmatpush.msra.mxu0 0.0
  %898 = vmatpush.msra.mxu0 0.0
  %899 = vmatpush.msra.mxu0 0.0
  %900 = vmatpush.msra.mxu0 0.0
  %901 = vmatpush.msra.mxu0 0.0
  %902 = vmatpush.msra.mxu0 0.0
  %903 = vmatpush.msra.mxu0 0.0
  %904 = vmatpush.msra.mxu0 0.0
  %905 = vmatpush.msra.mxu0 0.0
  %906 = vmatpush.msra.mxu0 0.0
  %907 = vmatpush.msra.mxu0 %v32
  %908 = vmatpush.msra.mxu0 %v32
  %909 = vmatpush.msra.mxu0 %v32
  %910 = vmatpush.msra.mxu0 %v32
  %911 = vmatmul.f32.gmra.mxu0 %v890
  %v912 = vpop.f32.mrf.mxu0
  %v913 = vadd.f32 0.0, %v912
  %914 = vmatmul.f32.gmra.mxu0 %v893
  %v915 = vpop.f32.mrf.mxu0
  %v916 = vadd.f32 0.0, %v915
  %917 = vdwg.mxu0
  %v918 = vmul.f32 %v882, %v882
  %v919 = vmul.f32 %v885, %v885
  %v920 = vsub.f32 %v913, %v918
  %v921 = vsub.f32 %v916, %v919
  %923 = vset.pattern.permute.xlu0 0
  %924 = vperm.xlu0 %923, %v882
  %v925 = vpop.permute.xlu0 %924
  %928 = vset.pattern.permute.xlu0 0
  %929 = vperm.xlu0 %928, %v885
  %v930 = vpop.permute.xlu0 %929
  %v932 = vsub.f32 %v854, %v925
  %v933 = vsub.f32 %v855, %v930
  %v934 = vadd.f32 %v920, 1e-05
  %v935 = vadd.f32 %v921, 1e-05
  %v936 = vrsqrt.pop %v934
  %v937 = vmul.f32 %v936, %v934
  %v938 = vmul.f32 %v937, %v936
  %v939 = vmul.f32 0.5, %v938
  %v940 = vsub.f32 1.5, %v939
  %v941 = vmul.f32 %v936, %v940
  %vm942 = vweird.f32 %v934
  %vm943 = vweird.f32 %v936
  %vm944 = vmor %vm942, %vm943
  %v945 = vsel %vm944, %v936, %v941
  %v946 = vrsqrt.pop %v935
  %v947 = vmul.f32 %v946, %v935
  %v948 = vmul.f32 %v947, %v946
  %v949 = vmul.f32 0.5, %v948
  %v950 = vsub.f32 1.5, %v949
  %v951 = vmul.f32 %v946, %v950
  %vm952 = vweird.f32 %v935
  %vm953 = vweird.f32 %v946
  %vm954 = vmor %vm952, %vm953
  %v955 = vsel %vm954, %v946, %v951
  %957 = vset.pattern.permute.xlu0 0
  %958 = vperm.xlu0 %957, %v945
  %v959 = vpop.permute.xlu0 %958
  %962 = vset.pattern.permute.xlu0 0
  %963 = vperm.xlu0 %962, %v955
  %v964 = vpop.permute.xlu0 %963
  %v966 = vmul.f32 %v932, %v959
  %v967 = vmul.f32 %v933, %v964
  %v968 = vperm.slane %v856, 0
  %v969 = vmul.f32 %v966, %v968
  %v970 = vmul.f32 %v967, %v968
  %v971 = vperm.slane %v857, 0
  %v972 = vadd.f32 %v969, %v971
  %v973 = vadd.f32 %v970, %v971
  %v974 = vsel %vm33, %v972, 1.0
  %v975 = vsel %vm33, %v973, 1.0
  %s976 = scalar_lea.vmem %s1, 96
  %v977 = vld [vmem:[%s976] sm:$0xff]
  %v978 = vld [vmem:[%s976 + $0x8] sm:$0xff]
  %v979 = vld [vmem:[%s976 + $0x10] sm:$0xff]
  %v980 = vld [vmem:[%s976 + $0x18] sm:$0xff]
  %v982 = vsel %vm50, %v974, 0
  %v985 = vsel %vm50, %v975, 0
  %v988 = vsel %vm50, %v977, 0
  %990 = vmatpush.xpose.msra.mxu0 0.0
  %991 = vmatpush.xpose.msra.mxu0 0.0
  %992 = vmatpush.xpose.msra.mxu0 0.0
  %993 = vmatpush.xpose.msra.mxu0 0.0
  %994 = vmatpush.xpose.msra.mxu0 0.0
  %995 = vmatpush.xpose.msra.mxu0 0.0
  %996 = vmatpush.xpose.msra.mxu0 0.0
  %997 = vmatpush.xpose.msra.mxu0 0.0
  %998 = vmatpush.xpose.msra.mxu0 0.0
  %999 = vmatpush.xpose.msra.mxu0 0.0
  %1000 = vmatpush.xpose.msra.mxu0 0.0
  %1001 = vmatpush.xpose.msra.mxu0 0.0
  %1002 = vmatpush.xpose.msra.mxu0 0.0
  %1003 = vmatpush.xpose.msra.mxu0 0.0
  %1004 = vmatpush.xpose.msra.mxu0 0.0
  %1005 = vmatpush.xpose.msra.mxu0 %v988
  %1006 = vmatmul.f32.gmra.mxu0 %v982
  %v1007 = vpop.f32.mrf.mxu0
  %v1008 = vadd.f32 0.0, %v1007
  %1009 = vmatmul.f32.gmra.mxu0 %v985
  %v1010 = vpop.f32.mrf.mxu0
  %v1011 = vadd.f32 0.0, %v1010
  %1012 = vdwg.mxu0
  %v1014 = vsel %vm50, %v978, 0
  %1016 = vmatpush.xpose.msra.mxu0 0.0
  %1017 = vmatpush.xpose.msra.mxu0 0.0
  %1018 = vmatpush.xpose.msra.mxu0 0.0
  %1019 = vmatpush.xpose.msra.mxu0 0.0
  %1020 = vmatpush.xpose.msra.mxu0 0.0
  %1021 = vmatpush.xpose.msra.mxu0 0.0
  %1022 = vmatpush.xpose.msra.mxu0 0.0
  %1023 = vmatpush.xpose.msra.mxu0 0.0
  %1024 = vmatpush.xpose.msra.mxu0 0.0
  %1025 = vmatpush.xpose.msra.mxu0 0.0
  %1026 = vmatpush.xpose.msra.mxu0 0.0
  %1027 = vmatpush.xpose.msra.mxu0 0.0
  %1028 = vmatpush.xpose.msra.mxu0 0.0
  %1029 = vmatpush.xpose.msra.mxu0 0.0
  %1030 = vmatpush.xpose.msra.mxu0 0.0
  %1031 = vmatpush.xpose.msra.mxu0 %v1014
  %1032 = vmatmul.f32.gmra.mxu0 %v982
  %v1033 = vpop.f32.mrf.mxu0
  %v1034 = vadd.f32 0.0, %v1033
  %1035 = vmatmul.f32.gmra.mxu0 %v985
  %v1036 = vpop.f32.mrf.mxu0
  %v1037 = vadd.f32 0.0, %v1036
  %1038 = vdwg.mxu0
  %v1040 = vsel %vm50, %v979, 0
  %1042 = vmatpush.xpose.msra.mxu0 0.0
  %1043 = vmatpush.xpose.msra.mxu0 0.0
  %1044 = vmatpush.xpose.msra.mxu0 0.0
  %1045 = vmatpush.xpose.msra.mxu0 0.0
  %1046 = vmatpush.xpose.msra.mxu0 0.0
  %1047 = vmatpush.xpose.msra.mxu0 0.0
  %1048 = vmatpush.xpose.msra.mxu0 0.0
  %1049 = vmatpush.xpose.msra.mxu0 0.0
  %1050 = vmatpush.xpose.msra.mxu0 0.0
  %1051 = vmatpush.xpose.msra.mxu0 0.0
  %1052 = vmatpush.xpose.msra.mxu0 0.0
  %1053 = vmatpush.xpose.msra.mxu0 0.0
  %1054 = vmatpush.xpose.msra.mxu0 0.0
  %1055 = vmatpush.xpose.msra.mxu0 0.0
  %1056 = vmatpush.xpose.msra.mxu0 0.0
  %1057 = vmatpush.xpose.msra.mxu0 %v1040
  %1058 = vmatmul.f32.gmra.mxu0 %v982
  %v1059 = vpop.f32.mrf.mxu0
  %v1060 = vadd.f32 0.0, %v1059
  %1061 = vmatmul.f32.gmra.mxu0 %v985
  %v1062 = vpop.f32.mrf.mxu0
  %v1063 = vadd.f32 0.0, %v1062
  %1064 = vdwg.mxu0
  %v1066 = vsel %vm50, %v980, 0
  %1068 = vmatpush.xpose.msra.mxu0 0.0
  %1069 = vmatpush.xpose.msra.mxu0 0.0
  %1070 = vmatpush.xpose.msra.mxu0 0.0
  %1071 = vmatpush.xpose.msra.mxu0 0.0
  %1072 = vmatpush.xpose.msra.mxu0 0.0
  %1073 = vmatpush.xpose.msra.mxu0 0.0
  %1074 = vmatpush.xpose.msra.mxu0 0.0
  %1075 = vmatpush.xpose.msra.mxu0 0.0
  %1076 = vmatpush.xpose.msra.mxu0 0.0
  %1077 = vmatpush.xpose.msra.mxu0 0.0
  %1078 = vmatpush.xpose.msra.mxu0 0.0
  %1079 = vmatpush.xpose.msra.mxu0 0.0
  %1080 = vmatpush.xpose.msra.mxu0 0.0
  %1081 = vmatpush.xpose.msra.mxu0 0.0
  %1082 = vmatpush.xpose.msra.mxu0 0.0
  %1083 = vmatpush.xpose.msra.mxu0 %v1066
  %1084 = vmatmul.f32.gmra.mxu0 %v982
  %v1085 = vpop.f32.mrf.mxu0
  %v1086 = vadd.f32 0.0, %v1085
  %1087 = vmatmul.f32.gmra.mxu0 %v985
  %v1088 = vpop.f32.mrf.mxu0
  %v1089 = vadd.f32 0.0, %v1088
  %1090 = vdwg.mxu0
  %s1091 = scalar_lea.vmem %s1, 128
  %v1092 = vld [vmem:[%s1091] sm:$0xff]
  %v1093 = vld [vmem:[%s1091 + $0x8] sm:$0xff]
  %v1094 = vld [vmem:[%s1091 + $0x10] sm:$0xff]
  %v1095 = vld [vmem:[%s1091 + $0x18] sm:$0xff]
  %v1096 = vld [vmem:[%s1091 + $0x20] sm:$0xff]
  %v1097 = vld [vmem:[%s1091 + $0x28] sm:$0xff]
  %v1098 = vld [vmem:[%s1091 + $0x30] sm:$0xff]
  %v1099 = vld [vmem:[%s1091 + $0x38] sm:$0xff]
  %v1101 = vsel %vm50, %v34, 0
  %v1104 = vsel %vm50, %v35, 0
  %v1107 = vsel %vm50, %v1092, 0
  %1109 = vmatpush.xpose.msra.mxu0 0.0
  %1110 = vmatpush.xpose.msra.mxu0 0.0
  %1111 = vmatpush.xpose.msra.mxu0 0.0
  %1112 = vmatpush.xpose.msra.mxu0 0.0
  %1113 = vmatpush.xpose.msra.mxu0 0.0
  %1114 = vmatpush.xpose.msra.mxu0 0.0
  %1115 = vmatpush.xpose.msra.mxu0 0.0
  %1116 = vmatpush.xpose.msra.mxu0 0.0
  %1117 = vmatpush.xpose.msra.mxu0 0.0
  %1118 = vmatpush.xpose.msra.mxu0 0.0
  %1119 = vmatpush.xpose.msra.mxu0 0.0
  %1120 = vmatpush.xpose.msra.mxu0 0.0
  %1121 = vmatpush.xpose.msra.mxu0 0.0
  %1122 = vmatpush.xpose.msra.mxu0 0.0
  %1123 = vmatpush.xpose.msra.mxu0 0.0
  %1124 = vmatpush.xpose.msra.mxu0 %v1107
  %1125 = vmatmul.f32.gmra.mxu0 %v1101
  %v1126 = vpop.f32.mrf.mxu0
  %v1127 = vadd.f32 0.0, %v1126
  %1128 = vmatmul.f32.gmra.mxu0 %v1104
  %v1129 = vpop.f32.mrf.mxu0
  %v1130 = vadd.f32 0.0, %v1129
  %1131 = vdwg.mxu0
  %v1133 = vsel %vm50, %v1093, 0
  %1135 = vmatpush.xpose.msra.mxu0 0.0
  %1136 = vmatpush.xpose.msra.mxu0 0.0
  %1137 = vmatpush.xpose.msra.mxu0 0.0
  %1138 = vmatpush.xpose.msra.mxu0 0.0
  %1139 = vmatpush.xpose.msra.mxu0 0.0
  %1140 = vmatpush.xpose.msra.mxu0 0.0
  %1141 = vmatpush.xpose.msra.mxu0 0.0
  %1142 = vmatpush.xpose.msra.mxu0 0.0
  %1143 = vmatpush.xpose.msra.mxu0 0.0
  %1144 = vmatpush.xpose.msra.mxu0 0.0
  %1145 = vmatpush.xpose.msra.mxu0 0.0
  %1146 = vmatpush.xpose.msra.mxu0 0.0
  %1147 = vmatpush.xpose.msra.mxu0 0.0
  %1148 = vmatpush.xpose.msra.mxu0 0.0
  %1149 = vmatpush.xpose.msra.mxu0 0.0
  %1150 = vmatpush.xpose.msra.mxu0 %v1133
  %1151 = vmatmul.f32.gmra.mxu0 %v1101
  %v1152 = vpop.f32.mrf.mxu0
  %v1153 = vadd.f32 0.0, %v1152
  %1154 = vmatmul.f32.gmra.mxu0 %v1104
  %v1155 = vpop.f32.mrf.mxu0
  %v1156 = vadd.f32 0.0, %v1155
  %1157 = vdwg.mxu0
  %v1159 = vsel %vm50, %v1094, 0
  %1161 = vmatpush.xpose.msra.mxu0 0.0
  %1162 = vmatpush.xpose.msra.mxu0 0.0
  %1163 = vmatpush.xpose.msra.mxu0 0.0
  %1164 = vmatpush.xpose.msra.mxu0 0.0
  %1165 = vmatpush.xpose.msra.mxu0 0.0
  %1166 = vmatpush.xpose.msra.mxu0 0.0
  %1167 = vmatpush.xpose.msra.mxu0 0.0
  %1168 = vmatpush.xpose.msra.mxu0 0.0
  %1169 = vmatpush.xpose.msra.mxu0 0.0
  %1170 = vmatpush.xpose.msra.mxu0 0.0
  %1171 = vmatpush.xpose.msra.mxu0 0.0
  %1172 = vmatpush.xpose.msra.mxu0 0.0
  %1173 = vmatpush.xpose.msra.mxu0 0.0
  %1174 = vmatpush.xpose.msra.mxu0 0.0
  %1175 = vmatpush.xpose.msra.mxu0 0.0
  %1176 = vmatpush.xpose.msra.mxu0 %v1159
  %1177 = vmatmul.f32.gmra.mxu0 %v1101
  %v1178 = vpop.f32.mrf.mxu0
  %v1179 = vadd.f32 0.0, %v1178
  %1180 = vmatmul.f32.gmra.mxu0 %v1104
  %v1181 = vpop.f32.mrf.mxu0
  %v1182 = vadd.f32 0.0, %v1181
  %1183 = vdwg.mxu0
  %v1185 = vsel %vm50, %v1095, 0
  %1187 = vmatpush.xpose.msra.mxu0 0.0
  %1188 = vmatpush.xpose.msra.mxu0 0.0
  %1189 = vmatpush.xpose.msra.mxu0 0.0
  %1190 = vmatpush.xpose.msra.mxu0 0.0
  %1191 = vmatpush.xpose.msra.mxu0 0.0
  %1192 = vmatpush.xpose.msra.mxu0 0.0
  %1193 = vmatpush.xpose.msra.mxu0 0.0
  %1194 = vmatpush.xpose.msra.mxu0 0.0
  %1195 = vmatpush.xpose.msra.mxu0 0.0
  %1196 = vmatpush.xpose.msra.mxu0 0.0
  %1197 = vmatpush.xpose.msra.mxu0 0.0
  %1198 = vmatpush.xpose.msra.mxu0 0.0
  %1199 = vmatpush.xpose.msra.mxu0 0.0
  %1200 = vmatpush.xpose.msra.mxu0 0.0
  %1201 = vmatpush.xpose.msra.mxu0 0.0
  %1202 = vmatpush.xpose.msra.mxu0 %v1185
  %1203 = vmatmul.f32.gmra.mxu0 %v1101
  %v1204 = vpop.f32.mrf.mxu0
  %v1205 = vadd.f32 0.0, %v1204
  %1206 = vmatmul.f32.gmra.mxu0 %v1104
  %v1207 = vpop.f32.mrf.mxu0
  %v1208 = vadd.f32 0.0, %v1207
  %1209 = vdwg.mxu0
  %v1211 = vsel %vm50, %v1096, 0
  %1213 = vmatpush.xpose.msra.mxu0 0.0
  %1214 = vmatpush.xpose.msra.mxu0 0.0
  %1215 = vmatpush.xpose.msra.mxu0 0.0
  %1216 = vmatpush.xpose.msra.mxu0 0.0
  %1217 = vmatpush.xpose.msra.mxu0 0.0
  %1218 = vmatpush.xpose.msra.mxu0 0.0
  %1219 = vmatpush.xpose.msra.mxu0 0.0
  %1220 = vmatpush.xpose.msra.mxu0 0.0
  %1221 = vmatpush.xpose.msra.mxu0 0.0
  %1222 = vmatpush.xpose.msra.mxu0 0.0
  %1223 = vmatpush.xpose.msra.mxu0 0.0
  %1224 = vmatpush.xpose.msra.mxu0 0.0
  %1225 = vmatpush.xpose.msra.mxu0 0.0
  %1226 = vmatpush.xpose.msra.mxu0 0.0
  %1227 = vmatpush.xpose.msra.mxu0 0.0
  %1228 = vmatpush.xpose.msra.mxu0 %v1211
  %1229 = vmatmul.f32.gmra.mxu0 %v1101
  %v1230 = vpop.f32.mrf.mxu0
  %v1231 = vadd.f32 0.0, %v1230
  %1232 = vmatmul.f32.gmra.mxu0 %v1104
  %v1233 = vpop.f32.mrf.mxu0
  %v1234 = vadd.f32 0.0, %v1233
  %1235 = vdwg.mxu0
  %v1237 = vsel %vm50, %v1097, 0
  %1239 = vmatpush.xpose.msra.mxu0 0.0
  %1240 = vmatpush.xpose.msra.mxu0 0.0
  %1241 = vmatpush.xpose.msra.mxu0 0.0
  %1242 = vmatpush.xpose.msra.mxu0 0.0
  %1243 = vmatpush.xpose.msra.mxu0 0.0
  %1244 = vmatpush.xpose.msra.mxu0 0.0
  %1245 = vmatpush.xpose.msra.mxu0 0.0
  %1246 = vmatpush.xpose.msra.mxu0 0.0
  %1247 = vmatpush.xpose.msra.mxu0 0.0
  %1248 = vmatpush.xpose.msra.mxu0 0.0
  %1249 = vmatpush.xpose.msra.mxu0 0.0
  %1250 = vmatpush.xpose.msra.mxu0 0.0
  %1251 = vmatpush.xpose.msra.mxu0 0.0
  %1252 = vmatpush.xpose.msra.mxu0 0.0
  %1253 = vmatpush.xpose.msra.mxu0 0.0
  %1254 = vmatpush.xpose.msra.mxu0 %v1237
  %1255 = vmatmul.f32.gmra.mxu0 %v1101
  %v1256 = vpop.f32.mrf.mxu0
  %v1257 = vadd.f32 0.0, %v1256
  %1258 = vmatmul.f32.gmra.mxu0 %v1104
  %v1259 = vpop.f32.mrf.mxu0
  %v1260 = vadd.f32 0.0, %v1259
  %1261 = vdwg.mxu0
  %v1263 = vsel %vm50, %v1098, 0
  %1265 = vmatpush.xpose.msra.mxu0 0.0
  %1266 = vmatpush.xpose.msra.mxu0 0.0
  %1267 = vmatpush.xpose.msra.mxu0 0.0
  %1268 = vmatpush.xpose.msra.mxu0 0.0
  %1269 = vmatpush.xpose.msra.mxu0 0.0
  %1270 = vmatpush.xpose.msra.mxu0 0.0
  %1271 = vmatpush.xpose.msra.mxu0 0.0
  %1272 = vmatpush.xpose.msra.mxu0 0.0
  %1273 = vmatpush.xpose.msra.mxu0 0.0
  %1274 = vmatpush.xpose.msra.mxu0 0.0
  %1275 = vmatpush.xpose.msra.mxu0 0.0
  %1276 = vmatpush.xpose.msra.mxu0 0.0
  %1277 = vmatpush.xpose.msra.mxu0 0.0
  %1278 = vmatpush.xpose.msra.mxu0 0.0
  %1279 = vmatpush.xpose.msra.mxu0 0.0
  %1280 = vmatpush.xpose.msra.mxu0 %v1263
  %1281 = vmatmul.f32.gmra.mxu0 %v1101
  %v1282 = vpop.f32.mrf.mxu0
  %v1283 = vadd.f32 0.0, %v1282
  %1284 = vmatmul.f32.gmra.mxu0 %v1104
  %v1285 = vpop.f32.mrf.mxu0
  %v1286 = vadd.f32 0.0, %v1285
  %1287 = vdwg.mxu0
  %v1289 = vsel %vm50, %v1099, 0
  %1291 = vmatpush.xpose.msra.mxu0 0.0
  %1292 = vmatpush.xpose.msra.mxu0 0.0
  %1293 = vmatpush.xpose.msra.mxu0 0.0
  %1294 = vmatpush.xpose.msra.mxu0 0.0
  %1295 = vmatpush.xpose.msra.mxu0 0.0
  %1296 = vmatpush.xpose.msra.mxu0 0.0
  %1297 = vmatpush.xpose.msra.mxu0 0.0
  %1298 = vmatpush.xpose.msra.mxu0 0.0
  %1299 = vmatpush.xpose.msra.mxu0 0.0
  %1300 = vmatpush.xpose.msra.mxu0 0.0
  %1301 = vmatpush.xpose.msra.mxu0 0.0
  %1302 = vmatpush.xpose.msra.mxu0 0.0
  %1303 = vmatpush.xpose.msra.mxu0 0.0
  %1304 = vmatpush.xpose.msra.mxu0 0.0
  %1305 = vmatpush.xpose.msra.mxu0 0.0
  %1306 = vmatpush.xpose.msra.mxu0 %v1289
  %1307 = vmatmul.f32.gmra.mxu0 %v1101
  %v1308 = vpop.f32.mrf.mxu0
  %v1309 = vadd.f32 0.0, %v1308
  %1310 = vmatmul.f32.gmra.mxu0 %v1104
  %v1311 = vpop.f32.mrf.mxu0
  %v1312 = vadd.f32 0.0, %v1311
  %1313 = vdwg.mxu0
  %s1314 = scalar_lea.vmem %s1, 224
  %v1315 = vld [vmem:[%s1314] sm:$0xff]
  %v1316 = vld [vmem:[%s1314 + $0x8] sm:$0xff]
  %v1317 = vld [vmem:[%s1314 + $0x10] sm:$0xff]
  %v1318 = vld [vmem:[%s1314 + $0x18] sm:$0xff]
  %v1319 = vld [vmem:[%s3 + $0x1] sm:$0x1]
  %v1321 = vsel %vm375, %v1008, 0
  %v1324 = vsel %vm375, %v1011, 0
  %v1327 = vsel %vm375, %v1127, 0
  %v1330 = vsel %vm375, %v1130, 0
  %1332 = vmatpush.xpose.msra.mxu0 0.0
  %1333 = vmatpush.xpose.msra.mxu0 0.0
  %1334 = vmatpush.xpose.msra.mxu0 0.0
  %1335 = vmatpush.xpose.msra.mxu0 0.0
  %1336 = vmatpush.xpose.msra.mxu0 0.0
  %1337 = vmatpush.xpose.msra.mxu0 0.0
  %1338 = vmatpush.xpose.msra.mxu0 0.0
  %1339 = vmatpush.xpose.msra.mxu0 0.0
  %1340 = vmatpush.xpose.msra.mxu0 0.0
  %1341 = vmatpush.xpose.msra.mxu0 0.0
  %1342 = vmatpush.xpose.msra.mxu0 0.0
  %1343 = vmatpush.xpose.msra.mxu0 0.0
  %1344 = vmatpush.xpose.msra.mxu0 0.0
  %1345 = vmatpush.xpose.msra.mxu0 0.0
  %1346 = vmatpush.xpose.msra.mxu0 %v1330
  %1347 = vmatpush.xpose.msra.mxu0 %v1327
  %1348 = vmatmul.f32.gmra.mxu0 %v1321
  %v1349 = vpop.f32.mrf.mxu0
  %v1350 = vadd.f32 %v29, %v1349
  %1351 = vmatmul.f32.gmra.mxu0 %v1324
  %v1352 = vpop.f32.mrf.mxu0
  %v1353 = vadd.f32 %v30, %v1352
  %1354 = vdwg.mxu0
  %v1356 = vsel %vm375, %v1034, 0
  %v1359 = vsel %vm375, %v1037, 0
  %v1362 = vsel %vm375, %v1153, 0
  %v1365 = vsel %vm375, %v1156, 0
  %1367 = vmatpush.xpose.msra.mxu0 0.0
  %1368 = vmatpush.xpose.msra.mxu0 0.0
  %1369 = vmatpush.xpose.msra.mxu0 0.0
  %1370 = vmatpush.xpose.msra.mxu0 0.0
  %1371 = vmatpush.xpose.msra.mxu0 0.0
  %1372 = vmatpush.xpose.msra.mxu0 0.0
  %1373 = vmatpush.xpose.msra.mxu0 0.0
  %1374 = vmatpush.xpose.msra.mxu0 0.0
  %1375 = vmatpush.xpose.msra.mxu0 0.0
  %1376 = vmatpush.xpose.msra.mxu0 0.0
  %1377 = vmatpush.xpose.msra.mxu0 0.0
  %1378 = vmatpush.xpose.msra.mxu0 0.0
  %1379 = vmatpush.xpose.msra.mxu0 0.0
  %1380 = vmatpush.xpose.msra.mxu0 0.0
  %1381 = vmatpush.xpose.msra.mxu0 %v1365
  %1382 = vmatpush.xpose.msra.mxu0 %v1362
  %1383 = vmatmul.f32.gmra.mxu0 %v1356
  %v1384 = vpop.f32.mrf.mxu0
  %v1385 = vadd.f32 %v29, %v1384
  %1386 = vmatmul.f32.gmra.mxu0 %v1359
  %v1387 = vpop.f32.mrf.mxu0
  %v1388 = vadd.f32 %v30, %v1387
  %1389 = vdwg.mxu0
  %v1391 = vsel %vm375, %v1060, 0
  %v1394 = vsel %vm375, %v1063, 0
  %v1397 = vsel %vm375, %v1179, 0
  %v1400 = vsel %vm375, %v1182, 0
  %1402 = vmatpush.xpose.msra.mxu0 0.0
  %1403 = vmatpush.xpose.msra.mxu0 0.0
  %1404 = vmatpush.xpose.msra.mxu0 0.0
  %1405 = vmatpush.xpose.msra.mxu0 0.0
  %1406 = vmatpush.xpose.msra.mxu0 0.0
  %1407 = vmatpush.xpose.msra.mxu0 0.0
  %1408 = vmatpush.xpose.msra.mxu0 0.0
  %1409 = vmatpush.xpose.msra.mxu0 0.0
  %1410 = vmatpush.xpose.msra.mxu0 0.0
  %1411 = vmatpush.xpose.msra.mxu0 0.0
  %1412 = vmatpush.xpose.msra.mxu0 0.0
  %1413 = vmatpush.xpose.msra.mxu0 0.0
  %1414 = vmatpush.xpose.msra.mxu0 0.0
  %1415 = vmatpush.xpose.msra.mxu0 0.0
  %1416 = vmatpush.xpose.msra.mxu0 %v1400
  %1417 = vmatpush.xpose.msra.mxu0 %v1397
  %1418 = vmatmul.f32.gmra.mxu0 %v1391
  %v1419 = vpop.f32.mrf.mxu0
  %v1420 = vadd.f32 %v29, %v1419
  %1421 = vmatmul.f32.gmra.mxu0 %v1394
  %v1422 = vpop.f32.mrf.mxu0
  %v1423 = vadd.f32 %v30, %v1422
  %1424 = vdwg.mxu0
  %v1426 = vsel %vm375, %v1086, 0
  %v1429 = vsel %vm375, %v1089, 0
  %v1432 = vsel %vm375, %v1205, 0
  %v1435 = vsel %vm375, %v1208, 0
  %1437 = vmatpush.xpose.msra.mxu0 0.0
  %1438 = vmatpush.xpose.msra.mxu0 0.0
  %1439 = vmatpush.xpose.msra.mxu0 0.0
  %1440 = vmatpush.xpose.msra.mxu0 0.0
  %1441 = vmatpush.xpose.msra.mxu0 0.0
  %1442 = vmatpush.xpose.msra.mxu0 0.0
  %1443 = vmatpush.xpose.msra.mxu0 0.0
  %1444 = vmatpush.xpose.msra.mxu0 0.0
  %1445 = vmatpush.xpose.msra.mxu0 0.0
  %1446 = vmatpush.xpose.msra.mxu0 0.0
  %1447 = vmatpush.xpose.msra.mxu0 0.0
  %1448 = vmatpush.xpose.msra.mxu0 0.0
  %1449 = vmatpush.xpose.msra.mxu0 0.0
  %1450 = vmatpush.xpose.msra.mxu0 0.0
  %1451 = vmatpush.xpose.msra.mxu0 %v1435
  %1452 = vmatpush.xpose.msra.mxu0 %v1432
  %1453 = vmatmul.f32.gmra.mxu0 %v1426
  %v1454 = vpop.f32.mrf.mxu0
  %v1455 = vadd.f32 %v29, %v1454
  %1456 = vmatmul.f32.gmra.mxu0 %v1429
  %v1457 = vpop.f32.mrf.mxu0
  %v1458 = vadd.f32 %v30, %v1457
  %1459 = vdwg.mxu0
  %v1460 = vsel %vm516, %v1350, -inf
  %1461 = vmax.xlane.f32.xlu0 %v1460
  %v1462 = vpop.xlane.xlu0 %1461
  %v1463 = vsel %vm516, %v1353, -inf
  %1464 = vmax.xlane.f32.xlu0 %v1463
  %v1465 = vpop.xlane.xlu0 %1464
  %v1466 = vsel %vm516, %v1385, -inf
  %1467 = vmax.xlane.f32.xlu0 %v1466
  %v1468 = vpop.xlane.xlu0 %1467
  %v1469 = vsel %vm516, %v1388, -inf
  %1470 = vmax.xlane.f32.xlu0 %v1469
  %v1471 = vpop.xlane.xlu0 %1470
  %v1472 = vsel %vm516, %v1420, -inf
  %1473 = vmax.xlane.f32.xlu0 %v1472
  %v1474 = vpop.xlane.xlu0 %1473
  %v1475 = vsel %vm516, %v1423, -inf
  %1476 = vmax.xlane.f32.xlu0 %v1475
  %v1477 = vpop.xlane.xlu0 %1476
  %v1478 = vsel %vm516, %v1455, -inf
  %1479 = vmax.xlane.f32.xlu0 %v1478
  %v1480 = vpop.xlane.xlu0 %1479
  %v1481 = vsel %vm516, %v1458, -inf
  %1482 = vmax.xlane.f32.xlu0 %v1481
  %v1483 = vpop.xlane.xlu0 %1482
  %v1484 = vsub.f32 %v1350, %v1462
  %v1485 = vsub.f32 %v1353, %v1465
  %v1486 = vsub.f32 %v1385, %v1468
  %v1487 = vsub.f32 %v1388, %v1471
  %v1488 = vsub.f32 %v1420, %v1474
  %v1489 = vsub.f32 %v1423, %v1477
  %v1490 = vsub.f32 %v1455, %v1480
  %v1491 = vsub.f32 %v1458, %v1483
  %v1492 = vmul.f32 %v1484, 1.442695
  %v1493 = vpow.pop %v1492
  %v1494 = vmul.f32 %v1485, 1.442695
  %v1495 = vpow.pop %v1494
  %v1496 = vmul.f32 %v1486, 1.442695
  %v1497 = vpow.pop %v1496
  %v1498 = vmul.f32 %v1487, 1.442695
  %v1499 = vpow.pop %v1498
  %v1500 = vmul.f32 %v1488, 1.442695
  %v1501 = vpow.pop %v1500
  %v1502 = vmul.f32 %v1489, 1.442695
  %v1503 = vpow.pop %v1502
  %v1504 = vmul.f32 %v1490, 1.442695
  %v1505 = vpow.pop %v1504
  %v1506 = vmul.f32 %v1491, 1.442695
  %v1507 = vpow.pop %v1506
  %v1508 = vsel %vm516, %v1493, 0.0
  %1509 = vadd.xlane.f32.xlu0 %v1508
  %v1510 = vpop.xlane.xlu0 %1509
  %v1511 = vsel %vm516, %v1495, 0.0
  %1512 = vadd.xlane.f32.xlu0 %v1511
  %v1513 = vpop.xlane.xlu0 %1512
  %v1514 = vsel %vm516, %v1497, 0.0
  %1515 = vadd.xlane.f32.xlu0 %v1514
  %v1516 = vpop.xlane.xlu0 %1515
  %v1517 = vsel %vm516, %v1499, 0.0
  %1518 = vadd.xlane.f32.xlu0 %v1517
  %v1519 = vpop.xlane.xlu0 %1518
  %v1520 = vsel %vm516, %v1501, 0.0
  %1521 = vadd.xlane.f32.xlu0 %v1520
  %v1522 = vpop.xlane.xlu0 %1521
  %v1523 = vsel %vm516, %v1503, 0.0
  %1524 = vadd.xlane.f32.xlu0 %v1523
  %v1525 = vpop.xlane.xlu0 %1524
  %v1526 = vsel %vm516, %v1505, 0.0
  %1527 = vadd.xlane.f32.xlu0 %v1526
  %v1528 = vpop.xlane.xlu0 %1527
  %v1529 = vsel %vm516, %v1507, 0.0
  %1530 = vadd.xlane.f32.xlu0 %v1529
  %v1531 = vpop.xlane.xlu0 %1530
  %v1532 = vrcp.pop %v1510
  %v1533 = vrcp.pop %v1513
  %v1534 = vrcp.pop %v1516
  %v1535 = vrcp.pop %v1519
  %v1536 = vrcp.pop %v1522
  %v1537 = vrcp.pop %v1525
  %v1538 = vrcp.pop %v1528
  %v1539 = vrcp.pop %v1531
  %v1540 = vmul.f32 %v1493, %v1532
  %v1541 = vmul.f32 %v1495, %v1533
  %v1542 = vmul.f32 %v1497, %v1534
  %v1543 = vmul.f32 %v1499, %v1535
  %v1544 = vmul.f32 %v1501, %v1536
  %v1545 = vmul.f32 %v1503, %v1537
  %v1546 = vmul.f32 %v1505, %v1538
  %v1547 = vmul.f32 %v1507, %v1539
  %v1549 = vsel %vm516, %v1540, 0
  %v1552 = vsel %vm516, %v1541, 0
  %1554 = vmatpush.msra.mxu0 0.0
  %1555 = vmatpush.msra.mxu0 0.0
  %1556 = vmatpush.msra.mxu0 0.0
  %1557 = vmatpush.msra.mxu0 0.0
  %1558 = vmatpush.msra.mxu0 0.0
  %1559 = vmatpush.msra.mxu0 0.0
  %1560 = vmatpush.msra.mxu0 0.0
  %1561 = vmatpush.msra.mxu0 0.0
  %1562 = vmatpush.msra.mxu0 0.0
  %1563 = vmatpush.msra.mxu0 0.0
  %1564 = vmatpush.msra.mxu0 0.0
  %1565 = vmatpush.msra.mxu0 0.0
  %1566 = vmatpush.msra.mxu0 0.0
  %1567 = vmatpush.msra.mxu0 0.0
  %1568 = vmatpush.msra.mxu0 %v1234
  %1569 = vmatpush.msra.mxu0 %v1231
  %1570 = vmatmul.f32.gmra.mxu0 %v1549
  %v1571 = vpop.f32.mrf.mxu0
  %v1572 = vadd.f32 0.0, %v1571
  %1573 = vmatmul.f32.gmra.mxu0 %v1552
  %v1574 = vpop.f32.mrf.mxu0
  %v1575 = vadd.f32 0.0, %v1574
  %1576 = vdwg.mxu0
  %v1578 = vsel %vm516, %v1542, 0
  %v1581 = vsel %vm516, %v1543, 0
  %1583 = vmatpush.msra.mxu0 0.0
  %1584 = vmatpush.msra.mxu0 0.0
  %1585 = vmatpush.msra.mxu0 0.0
  %1586 = vmatpush.msra.mxu0 0.0
  %1587 = vmatpush.msra.mxu0 0.0
  %1588 = vmatpush.msra.mxu0 0.0
  %1589 = vmatpush.msra.mxu0 0.0
  %1590 = vmatpush.msra.mxu0 0.0
  %1591 = vmatpush.msra.mxu0 0.0
  %1592 = vmatpush.msra.mxu0 0.0
  %1593 = vmatpush.msra.mxu0 0.0
  %1594 = vmatpush.msra.mxu0 0.0
  %1595 = vmatpush.msra.mxu0 0.0
  %1596 = vmatpush.msra.mxu0 0.0
  %1597 = vmatpush.msra.mxu0 %v1260
  %1598 = vmatpush.msra.mxu0 %v1257
  %1599 = vmatmul.f32.gmra.mxu0 %v1578
  %v1600 = vpop.f32.mrf.mxu0
  %v1601 = vadd.f32 0.0, %v1600
  %1602 = vmatmul.f32.gmra.mxu0 %v1581
  %v1603 = vpop.f32.mrf.mxu0
  %v1604 = vadd.f32 0.0, %v1603
  %1605 = vdwg.mxu0
  %v1607 = vsel %vm516, %v1544, 0
  %v1610 = vsel %vm516, %v1545, 0
  %1612 = vmatpush.msra.mxu0 0.0
  %1613 = vmatpush.msra.mxu0 0.0
  %1614 = vmatpush.msra.mxu0 0.0
  %1615 = vmatpush.msra.mxu0 0.0
  %1616 = vmatpush.msra.mxu0 0.0
  %1617 = vmatpush.msra.mxu0 0.0
  %1618 = vmatpush.msra.mxu0 0.0
  %1619 = vmatpush.msra.mxu0 0.0
  %1620 = vmatpush.msra.mxu0 0.0
  %1621 = vmatpush.msra.mxu0 0.0
  %1622 = vmatpush.msra.mxu0 0.0
  %1623 = vmatpush.msra.mxu0 0.0
  %1624 = vmatpush.msra.mxu0 0.0
  %1625 = vmatpush.msra.mxu0 0.0
  %1626 = vmatpush.msra.mxu0 %v1286
  %1627 = vmatpush.msra.mxu0 %v1283
  %1628 = vmatmul.f32.gmra.mxu0 %v1607
  %v1629 = vpop.f32.mrf.mxu0
  %v1630 = vadd.f32 0.0, %v1629
  %1631 = vmatmul.f32.gmra.mxu0 %v1610
  %v1632 = vpop.f32.mrf.mxu0
  %v1633 = vadd.f32 0.0, %v1632
  %1634 = vdwg.mxu0
  %v1636 = vsel %vm516, %v1546, 0
  %v1639 = vsel %vm516, %v1547, 0
  %1641 = vmatpush.msra.mxu0 0.0
  %1642 = vmatpush.msra.mxu0 0.0
  %1643 = vmatpush.msra.mxu0 0.0
  %1644 = vmatpush.msra.mxu0 0.0
  %1645 = vmatpush.msra.mxu0 0.0
  %1646 = vmatpush.msra.mxu0 0.0
  %1647 = vmatpush.msra.mxu0 0.0
  %1648 = vmatpush.msra.mxu0 0.0
  %1649 = vmatpush.msra.mxu0 0.0
  %1650 = vmatpush.msra.mxu0 0.0
  %1651 = vmatpush.msra.mxu0 0.0
  %1652 = vmatpush.msra.mxu0 0.0
  %1653 = vmatpush.msra.mxu0 0.0
  %1654 = vmatpush.msra.mxu0 0.0
  %1655 = vmatpush.msra.mxu0 %v1312
  %1656 = vmatpush.msra.mxu0 %v1309
  %1657 = vmatmul.f32.gmra.mxu0 %v1636
  %v1658 = vpop.f32.mrf.mxu0
  %v1659 = vadd.f32 0.0, %v1658
  %1660 = vmatmul.f32.gmra.mxu0 %v1639
  %v1661 = vpop.f32.mrf.mxu0
  %v1662 = vadd.f32 0.0, %v1661
  %1663 = vdwg.mxu0
  %v1665 = vsel %vm375, %v1572, 0
  %v1668 = vsel %vm375, %v1575, 0
  %1670 = vmatpush.msra.mxu0 0.0
  %1671 = vmatpush.msra.mxu0 0.0
  %1672 = vmatpush.msra.mxu0 0.0
  %1673 = vmatpush.msra.mxu0 0.0
  %1674 = vmatpush.msra.mxu0 0.0
  %1675 = vmatpush.msra.mxu0 0.0
  %1676 = vmatpush.msra.mxu0 0.0
  %1677 = vmatpush.msra.mxu0 0.0
  %1678 = vmatpush.msra.mxu0 0.0
  %1679 = vmatpush.msra.mxu0 0.0
  %1680 = vmatpush.msra.mxu0 0.0
  %1681 = vmatpush.msra.mxu0 0.0
  %1682 = vmatpush.msra.mxu0 0.0
  %1683 = vmatpush.msra.mxu0 0.0
  %1684 = vmatpush.msra.mxu0 0.0
  %1685 = vmatpush.msra.mxu0 %v1315
  %1686 = vmatmul.f32.gmra.mxu0 %v1665
  %v1687 = vpop.f32.mrf.mxu0
  %v1688 = vadd.f32 0.0, %v1687
  %1689 = vmatmul.f32.gmra.mxu0 %v1668
  %v1690 = vpop.f32.mrf.mxu0
  %v1691 = vadd.f32 0.0, %v1690
  %1692 = vdwg.mxu0
  %v1694 = vsel %vm375, %v1601, 0
  %v1697 = vsel %vm375, %v1604, 0
  %1699 = vmatpush.msra.mxu0 0.0
  %1700 = vmatpush.msra.mxu0 0.0
  %1701 = vmatpush.msra.mxu0 0.0
  %1702 = vmatpush.msra.mxu0 0.0
  %1703 = vmatpush.msra.mxu0 0.0
  %1704 = vmatpush.msra.mxu0 0.0
  %1705 = vmatpush.msra.mxu0 0.0
  %1706 = vmatpush.msra.mxu0 0.0
  %1707 = vmatpush.msra.mxu0 0.0
  %1708 = vmatpush.msra.mxu0 0.0
  %1709 = vmatpush.msra.mxu0 0.0
  %1710 = vmatpush.msra.mxu0 0.0
  %1711 = vmatpush.msra.mxu0 0.0
  %1712 = vmatpush.msra.mxu0 0.0
  %1713 = vmatpush.msra.mxu0 0.0
  %1714 = vmatpush.msra.mxu0 %v1316
  %1715 = vmatmul.f32.gmra.mxu0 %v1694
  %v1716 = vpop.f32.mrf.mxu0
  %v1717 = vadd.f32 0.0, %v1716
  %1718 = vmatmul.f32.gmra.mxu0 %v1697
  %v1719 = vpop.f32.mrf.mxu0
  %v1720 = vadd.f32 0.0, %v1719
  %1721 = vdwg.mxu0
  %v1723 = vsel %vm375, %v1630, 0
  %v1726 = vsel %vm375, %v1633, 0
  %1728 = vmatpush.msra.mxu0 0.0
  %1729 = vmatpush.msra.mxu0 0.0
  %1730 = vmatpush.msra.mxu0 0.0
  %1731 = vmatpush.msra.mxu0 0.0
  %1732 = vmatpush.msra.mxu0 0.0
  %1733 = vmatpush.msra.mxu0 0.0
  %1734 = vmatpush.msra.mxu0 0.0
  %1735 = vmatpush.msra.mxu0 0.0
  %1736 = vmatpush.msra.mxu0 0.0
  %1737 = vmatpush.msra.mxu0 0.0
  %1738 = vmatpush.msra.mxu0 0.0
  %1739 = vmatpush.msra.mxu0 0.0
  %1740 = vmatpush.msra.mxu0 0.0
  %1741 = vmatpush.msra.mxu0 0.0
  %1742 = vmatpush.msra.mxu0 0.0
  %1743 = vmatpush.msra.mxu0 %v1317
  %1744 = vmatmul.f32.gmra.mxu0 %v1723
  %v1745 = vpop.f32.mrf.mxu0
  %v1746 = vadd.f32 0.0, %v1745
  %1747 = vmatmul.f32.gmra.mxu0 %v1726
  %v1748 = vpop.f32.mrf.mxu0
  %v1749 = vadd.f32 0.0, %v1748
  %1750 = vdwg.mxu0
  %v1752 = vsel %vm375, %v1659, 0
  %v1755 = vsel %vm375, %v1662, 0
  %1757 = vmatpush.msra.mxu0 0.0
  %1758 = vmatpush.msra.mxu0 0.0
  %1759 = vmatpush.msra.mxu0 0.0
  %1760 = vmatpush.msra.mxu0 0.0
  %1761 = vmatpush.msra.mxu0 0.0
  %1762 = vmatpush.msra.mxu0 0.0
  %1763 = vmatpush.msra.mxu0 0.0
  %1764 = vmatpush.msra.mxu0 0.0
  %1765 = vmatpush.msra.mxu0 0.0
  %1766 = vmatpush.msra.mxu0 0.0
  %1767 = vmatpush.msra.mxu0 0.0
  %1768 = vmatpush.msra.mxu0 0.0
  %1769 = vmatpush.msra.mxu0 0.0
  %1770 = vmatpush.msra.mxu0 0.0
  %1771 = vmatpush.msra.mxu0 0.0
  %1772 = vmatpush.msra.mxu0 %v1318
  %1773 = vmatmul.f32.gmra.mxu0 %v1752
  %v1774 = vpop.f32.mrf.mxu0
  %v1775 = vadd.f32 0.0, %v1774
  %1776 = vmatmul.f32.gmra.mxu0 %v1755
  %v1777 = vpop.f32.mrf.mxu0
  %v1778 = vadd.f32 0.0, %v1777
  %1779 = vdwg.mxu0
  %v1780 = vsel %vm33, %v1688, 0.0
  %v1781 = vsel %vm33, %v1717, 0.0
  %v1782 = vadd.f32 %v1780, %v1781
  %v1783 = vsel %vm33, %v1746, 0.0
  %v1784 = vadd.f32 %v1782, %v1783
  %v1785 = vsel %vm33, %v1775, 0.0
  %v1786 = vadd.f32 %v1784, %v1785
  %v1787 = vsel %vm33, %v1691, 0.0
  %v1788 = vsel %vm33, %v1720, 0.0
  %v1789 = vadd.f32 %v1787, %v1788
  %v1790 = vsel %vm33, %v1749, 0.0
  %v1791 = vadd.f32 %v1789, %v1790
  %v1792 = vsel %vm33, %v1778, 0.0
  %v1793 = vadd.f32 %v1791, %v1792
  %v1794 = vperm.slane %v1319, 0
  %v1795 = vadd.f32 %v1786, %v1794
  %v1796 = vadd.f32 %v1793, %v1794
  %v1797 = vadd.f32 %v972, %v1795
  %v1798 = vadd.f32 %v973, %v1796
  %v1799 = vld [vmem:[%s3 + $0x6] sm:$0x1]
  %v1800 = vld [vmem:[%s3 + $0x7] sm:$0x1]
  %v1802 = vsel %vm33, %v1797, 0
  %v1805 = vsel %vm33, %v1798, 0
  %1807 = vmatpush.msra.mxu0 0.0
  %1808 = vmatpush.msra.mxu0 0.0
  %1809 = vmatpush.msra.mxu0 0.0
  %1810 = vmatpush.msra.mxu0 0.0
  %1811 = vmatpush.msra.mxu0 0.0
  %1812 = vmatpush.msra.mxu0 0.0
  %1813 = vmatpush.msra.mxu0 0.0
  %1814 = vmatpush.msra.mxu0 0.0
  %1815 = vmatpush.msra.mxu0 0.0
  %1816 = vmatpush.msra.mxu0 0.0
  %1817 = vmatpush.msra.mxu0 0.0
  %1818 = vmatpush.msra.mxu0 0.0
  %1819 = vmatpush.msra.mxu0 %v32
  %1820 = vmatpush.msra.mxu0 %v32
  %1821 = vmatpush.msra.mxu0 %v32
  %1822 = vmatpush.msra.mxu0 %v32
  %1823 = vmatmul.f32.gmra.mxu0 %v1802
  %v1824 = vpop.f32.mrf.mxu0
  %v1825 = vadd.f32 0.0, %v1824
  %1826 = vmatmul.f32.gmra.mxu0 %v1805
  %v1827 = vpop.f32.mrf.mxu0
  %v1828 = vadd.f32 0.0, %v1827
  %1829 = vdwg.mxu0
  %v1830 = vmul.f32 %v1797, %v1797
  %v1831 = vmul.f32 %v1798, %v1798
  %v1833 = vsel %vm33, %v1830, 0
  %v1836 = vsel %vm33, %v1831, 0
  %1838 = vmatpush.msra.mxu0 0.0
  %1839 = vmatpush.msra.mxu0 0.0
  %1840 = vmatpush.msra.mxu0 0.0
  %1841 = vmatpush.msra.mxu0 0.0
  %1842 = vmatpush.msra.mxu0 0.0
  %1843 = vmatpush.msra.mxu0 0.0
  %1844 = vmatpush.msra.mxu0 0.0
  %1845 = vmatpush.msra.mxu0 0.0
  %1846 = vmatpush.msra.mxu0 0.0
  %1847 = vmatpush.msra.mxu0 0.0
  %1848 = vmatpush.msra.mxu0 0.0
  %1849 = vmatpush.msra.mxu0 0.0
  %1850 = vmatpush.msra.mxu0 %v32
  %1851 = vmatpush.msra.mxu0 %v32
  %1852 = vmatpush.msra.mxu0 %v32
  %1853 = vmatpush.msra.mxu0 %v32
  %1854 = vmatmul.f32.gmra.mxu0 %v1833
  %v1855 = vpop.f32.mrf.mxu0
  %v1856 = vadd.f32 0.0, %v1855
  %1857 = vmatmul.f32.gmra.mxu0 %v1836
  %v1858 = vpop.f32.mrf.mxu0
  %v1859 = vadd.f32 0.0, %v1858
  %1860 = vdwg.mxu0
  %v1861 = vmul.f32 %v1825, %v1825
  %v1862 = vmul.f32 %v1828, %v1828
  %v1863 = vsub.f32 %v1856, %v1861
  %v1864 = vsub.f32 %v1859, %v1862
  %1866 = vset.pattern.permute.xlu0 0
  %1867 = vperm.xlu0 %1866, %v1825
  %v1868 = vpop.permute.xlu0 %1867
  %1871 = vset.pattern.permute.xlu0 0
  %1872 = vperm.xlu0 %1871, %v1828
  %v1873 = vpop.permute.xlu0 %1872
  %v1875 = vsub.f32 %v1797, %v1868
  %v1876 = vsub.f32 %v1798, %v1873
  %v1877 = vadd.f32 %v1863, 1e-05
  %v1878 = vadd.f32 %v1864, 1e-05
  %v1879 = vrsqrt.pop %v1877
  %v1880 = vmul.f32 %v1879, %v1877
  %v1881 = vmul.f32 %v1880, %v1879
  %v1882 = vmul.f32 0.5, %v1881
  %v1883 = vsub.f32 1.5, %v1882
  %v1884 = vmul.f32 %v1879, %v1883
  %vm1885 = vweird.f32 %v1877
  %vm1886 = vweird.f32 %v1879
  %vm1887 = vmor %vm1885, %vm1886
  %v1888 = vsel %vm1887, %v1879, %v1884
  %v1889 = vrsqrt.pop %v1878
  %v1890 = vmul.f32 %v1889, %v1878
  %v1891 = vmul.f32 %v1890, %v1889
  %v1892 = vmul.f32 0.5, %v1891
  %v1893 = vsub.f32 1.5, %v1892
  %v1894 = vmul.f32 %v1889, %v1893
  %vm1895 = vweird.f32 %v1878
  %vm1896 = vweird.f32 %v1889
  %vm1897 = vmor %vm1895, %vm1896
  %v1898 = vsel %vm1897, %v1889, %v1894
  %1900 = vset.pattern.permute.xlu0 0
  %1901 = vperm.xlu0 %1900, %v1888
  %v1902 = vpop.permute.xlu0 %1901
  %1905 = vset.pattern.permute.xlu0 0
  %1906 = vperm.xlu0 %1905, %v1898
  %v1907 = vpop.permute.xlu0 %1906
  %v1909 = vmul.f32 %v1875, %v1902
  %v1910 = vmul.f32 %v1876, %v1907
  %v1911 = vperm.slane %v1799, 0
  %v1912 = vmul.f32 %v1909, %v1911
  %v1913 = vmul.f32 %v1910, %v1911
  %v1914 = vperm.slane %v1800, 0
  %v1915 = vadd.f32 %v1912, %v1914
  %v1916 = vadd.f32 %v1913, %v1914
  %v1917 = vld [vmem:[%s2] sm:$0xff]
  %v1918 = vld [vmem:[%s2 + $0x8] sm:$0xff]
  %v1919 = vld [vmem:[%s2 + $0x10] sm:$0xff]
  %v1920 = vld [vmem:[%s2 + $0x18] sm:$0xff]
  %v1921 = vld [vmem:[%s3 + $0x2] sm:$0x1]
  %v1922 = vperm.slane %v1921, 0
  %v1924 = vsel %vm33, %v1915, 0
  %v1927 = vsel %vm33, %v1916, 0
  %1929 = vmatpush.msra.mxu0 0.0
  %1930 = vmatpush.msra.mxu0 0.0
  %1931 = vmatpush.msra.mxu0 0.0
  %1932 = vmatpush.msra.mxu0 0.0
  %1933 = vmatpush.msra.mxu0 0.0
  %1934 = vmatpush.msra.mxu0 0.0
  %1935 = vmatpush.msra.mxu0 0.0
  %1936 = vmatpush.msra.mxu0 0.0
  %1937 = vmatpush.msra.mxu0 0.0
  %1938 = vmatpush.msra.mxu0 0.0
  %1939 = vmatpush.msra.mxu0 0.0
  %1940 = vmatpush.msra.mxu0 0.0
  %1941 = vmatpush.msra.mxu0 %v1920
  %1942 = vmatpush.msra.mxu0 %v1919
  %1943 = vmatpush.msra.mxu0 %v1918
  %1944 = vmatpush.msra.mxu0 %v1917
  %1945 = vmatmul.f32.gmra.mxu0 %v1924
  %v1946 = vpop.f32.mrf.mxu0
  %v1947 = vadd.f32 %v1922, %v1946
  %1948 = vmatmul.f32.gmra.mxu0 %v1927
  %v1949 = vpop.f32.mrf.mxu0
  %v1950 = vadd.f32 %v1922, %v1949
  %1951 = vdwg.mxu0
  %v1952 = vmax.f32 %v1947, 0.0
  %v1953 = vmax.f32 %v1950, 0.0
  %s1954 = scalar_lea.vmem %s2, 64
  %v1955 = vld [vmem:[%s1954] sm:$0xff]
  %v1956 = vld [vmem:[%s1954 + $0x8] sm:$0xff]
  %v1957 = vld [vmem:[%s1954 + $0x10] sm:$0xff]
  %v1958 = vld [vmem:[%s1954 + $0x18] sm:$0xff]
  %v1959 = vld [vmem:[%s1954 + $0x20] sm:$0xff]
  %v1960 = vld [vmem:[%s1954 + $0x28] sm:$0xff]
  %v1961 = vld [vmem:[%s1954 + $0x30] sm:$0xff]
  %v1962 = vld [vmem:[%s1954 + $0x38] sm:$0xff]
  %v1963 = vld [vmem:[%s3 + $0x3] sm:$0x1]
  %v1964 = vperm.slane %v1963, 0
  %vm1965 = vcmask 523264
  %v1967 = vsel %vm1965, %v1952, 0
  %v1970 = vsel %vm1965, %v1953, 0
  %1972 = vmatpush.msra.mxu0 0.0
  %1973 = vmatpush.msra.mxu0 0.0
  %1974 = vmatpush.msra.mxu0 0.0
  %1975 = vmatpush.msra.mxu0 0.0
  %1976 = vmatpush.msra.mxu0 0.0
  %1977 = vmatpush.msra.mxu0 0.0
  %1978 = vmatpush.msra.mxu0 0.0
  %1979 = vmatpush.msra.mxu0 0.0
  %1980 = vmatpush.msra.mxu0 %v1962
  %1981 = vmatpush.msra.mxu0 %v1961
  %1982 = vmatpush.msra.mxu0 %v1960
  %1983 = vmatpush.msra.mxu0 %v1959
  %1984 = vmatpush.msra.mxu0 %v1958
  %1985 = vmatpush.msra.mxu0 %v1957
  %1986 = vmatpush.msra.mxu0 %v1956
  %1987 = vmatpush.msra.mxu0 %v1955
  %1988 = vmatmul.f32.gmra.mxu0 %v1967
  %v1989 = vpop.f32.mrf.mxu0
  %v1990 = vadd.f32 %v1964, %v1989
  %1991 = vmatmul.f32.gmra.mxu0 %v1970
  %v1992 = vpop.f32.mrf.mxu0
  %v1993 = vadd.f32 %v1964, %v1992
  %1994 = vdwg.mxu0
  %v1995 = vadd.f32 %v1915, %v1990
  %v1996 = vadd.f32 %v1916, %v1993
  %v1997 = vld [vmem:[%s3 + $0x8] sm:$0x1]
  %v1998 = vld [vmem:[%s3 + $0x9] sm:$0x1]
  %v2000 = vsel %vm33, %v1995, 0
  %v2003 = vsel %vm33, %v1996, 0
  %2005 = vmatpush.msra.mxu0 0.0
  %2006 = vmatpush.msra.mxu0 0.0
  %2007 = vmatpush.msra.mxu0 0.0
  %2008 = vmatpush.msra.mxu0 0.0
  %2009 = vmatpush.msra.mxu0 0.0
  %2010 = vmatpush.msra.mxu0 0.0
  %2011 = vmatpush.msra.mxu0 0.0
  %2012 = vmatpush.msra.mxu0 0.0
  %2013 = vmatpush.msra.mxu0 0.0
  %2014 = vmatpush.msra.mxu0 0.0
  %2015 = vmatpush.msra.mxu0 0.0
  %2016 = vmatpush.msra.mxu0 0.0
  %2017 = vmatpush.msra.mxu0 %v32
  %2018 = vmatpush.msra.mxu0 %v32
  %2019 = vmatpush.msra.mxu0 %v32
  %2020 = vmatpush.msra.mxu0 %v32
  %2021 = vmatmul.f32.gmra.mxu0 %v2000
  %v2022 = vpop.f32.mrf.mxu0
  %v2023 = vadd.f32 0.0, %v2022
  %2024 = vmatmul.f32.gmra.mxu0 %v2003
  %v2025 = vpop.f32.mrf.mxu0
  %v2026 = vadd.f32 0.0, %v2025
  %2027 = vdwg.mxu0
  %v2028 = vmul.f32 %v1995, %v1995
  %v2029 = vmul.f32 %v1996, %v1996
  %v2031 = vsel %vm33, %v2028, 0
  %v2034 = vsel %vm33, %v2029, 0
  %2036 = vmatpush.msra.mxu0 0.0
  %2037 = vmatpush.msra.mxu0 0.0
  %2038 = vmatpush.msra.mxu0 0.0
  %2039 = vmatpush.msra.mxu0 0.0
  %2040 = vmatpush.msra.mxu0 0.0
  %2041 = vmatpush.msra.mxu0 0.0
  %2042 = vmatpush.msra.mxu0 0.0
  %2043 = vmatpush.msra.mxu0 0.0
  %2044 = vmatpush.msra.mxu0 0.0
  %2045 = vmatpush.msra.mxu0 0.0
  %2046 = vmatpush.msra.mxu0 0.0
  %2047 = vmatpush.msra.mxu0 0.0
  %2048 = vmatpush.msra.mxu0 %v32
  %2049 = vmatpush.msra.mxu0 %v32
  %2050 = vmatpush.msra.mxu0 %v32
  %2051 = vmatpush.msra.mxu0 %v32
  %2052 = vmatmul.f32.gmra.mxu0 %v2031
  %v2053 = vpop.f32.mrf.mxu0
  %v2054 = vadd.f32 0.0, %v2053
  %2055 = vmatmul.f32.gmra.mxu0 %v2034
  %v2056 = vpop.f32.mrf.mxu0
  %v2057 = vadd.f32 0.0, %v2056
  %2058 = vdwg.mxu0
  %v2059 = vmul.f32 %v2023, %v2023
  %v2060 = vmul.f32 %v2026, %v2026
  %v2061 = vsub.f32 %v2054, %v2059
  %v2062 = vsub.f32 %v2057, %v2060
  %2064 = vset.pattern.permute.xlu0 0
  %2065 = vperm.xlu0 %2064, %v2023
  %v2066 = vpop.permute.xlu0 %2065
  %2069 = vset.pattern.permute.xlu0 0
  %2070 = vperm.xlu0 %2069, %v2026
  %v2071 = vpop.permute.xlu0 %2070
  %v2073 = vsub.f32 %v1995, %v2066
  %v2074 = vsub.f32 %v1996, %v2071
  %v2075 = vadd.f32 %v2061, 1e-05
  %v2076 = vadd.f32 %v2062, 1e-05
  %v2077 = vrsqrt.pop %v2075
  %v2078 = vmul.f32 %v2077, %v2075
  %v2079 = vmul.f32 %v2078, %v2077
  %v2080 = vmul.f32 0.5, %v2079
  %v2081 = vsub.f32 1.5, %v2080
  %v2082 = vmul.f32 %v2077, %v2081
  %vm2083 = vweird.f32 %v2075
  %vm2084 = vweird.f32 %v2077
  %vm2085 = vmor %vm2083, %vm2084
  %v2086 = vsel %vm2085, %v2077, %v2082
  %v2087 = vrsqrt.pop %v2076
  %v2088 = vmul.f32 %v2087, %v2076
  %v2089 = vmul.f32 %v2088, %v2087
  %v2090 = vmul.f32 0.5, %v2089
  %v2091 = vsub.f32 1.5, %v2090
  %v2092 = vmul.f32 %v2087, %v2091
  %vm2093 = vweird.f32 %v2076
  %vm2094 = vweird.f32 %v2087
  %vm2095 = vmor %vm2093, %vm2094
  %v2096 = vsel %vm2095, %v2087, %v2092
  %2098 = vset.pattern.permute.xlu0 0
  %2099 = vperm.xlu0 %2098, %v2086
  %v2100 = vpop.permute.xlu0 %2099
  %2103 = vset.pattern.permute.xlu0 0
  %2104 = vperm.xlu0 %2103, %v2096
  %v2105 = vpop.permute.xlu0 %2104
  %v2107 = vmul.f32 %v2073, %v2100
  %v2108 = vmul.f32 %v2074, %v2105
  %v2109 = vperm.slane %v1997, 0
  %v2110 = vmul.f32 %v2107, %v2109
  %v2111 = vmul.f32 %v2108, %v2109
  %v2112 = vperm.slane %v1998, 0
  %v2113 = vadd.f32 %v2110, %v2112
  %v2114 = vadd.f32 %v2111, %v2112
  %v2115 = vsel %vm33, %v2113, 1.0
  %v2116 = vsel %vm33, %v2114, 1.0
  %s2117 = scalar_lea.vmem %s1, 256
  %v2118 = vld [vmem:[%s2117] sm:$0xff]
  %v2119 = vld [vmem:[%s2117 + $0x8] sm:$0xff]
  %v2120 = vld [vmem:[%s2117 + $0x10] sm:$0xff]
  %v2121 = vld [vmem:[%s2117 + $0x18] sm:$0xff]
  %v2122 = vld [vmem:[%s2117 + $0x20] sm:$0xff]
  %v2123 = vld [vmem:[%s2117 + $0x28] sm:$0xff]
  %v2124 = vld [vmem:[%s2117 + $0x30] sm:$0xff]
  %v2125 = vld [vmem:[%s2117 + $0x38] sm:$0xff]
  %v2126 = vld [vmem:[%s2117 + $0x40] sm:$0xff]
  %v2127 = vld [vmem:[%s2117 + $0x48] sm:$0xff]
  %v2128 = vld [vmem:[%s2117 + $0x50] sm:$0xff]
  %v2129 = vld [vmem:[%s2117 + $0x58] sm:$0xff]
  %v2131 = vsel %vm50, %v2115, 0
  %v2134 = vsel %vm50, %v2116, 0
  %v2137 = vsel %vm50, %v2118, 0
  %2139 = vmatpush.xpose.msra.mxu0 0.0
  %2140 = vmatpush.xpose.msra.mxu0 0.0
  %2141 = vmatpush.xpose.msra.mxu0 0.0
  %2142 = vmatpush.xpose.msra.mxu0 0.0
  %2143 = vmatpush.xpose.msra.mxu0 0.0
  %2144 = vmatpush.xpose.msra.mxu0 0.0
  %2145 = vmatpush.xpose.msra.mxu0 0.0
  %2146 = vmatpush.xpose.msra.mxu0 0.0
  %2147 = vmatpush.xpose.msra.mxu0 0.0
  %2148 = vmatpush.xpose.msra.mxu0 0.0
  %2149 = vmatpush.xpose.msra.mxu0 0.0
  %2150 = vmatpush.xpose.msra.mxu0 0.0
  %2151 = vmatpush.xpose.msra.mxu0 0.0
  %2152 = vmatpush.xpose.msra.mxu0 0.0
  %2153 = vmatpush.xpose.msra.mxu0 0.0
  %2154 = vmatpush.xpose.msra.mxu0 %v2137
  %2155 = vmatmul.f32.gmra.mxu0 %v2131
  %v2156 = vpop.f32.mrf.mxu0
  %v2157 = vadd.f32 0.0, %v2156
  %2158 = vmatmul.f32.gmra.mxu0 %v2134
  %v2159 = vpop.f32.mrf.mxu0
  %v2160 = vadd.f32 0.0, %v2159
  %2161 = vdwg.mxu0
  %v2163 = vsel %vm50, %v2119, 0
  %2165 = vmatpush.xpose.msra.mxu0 0.0
  %2166 = vmatpush.xpose.msra.mxu0 0.0
  %2167 = vmatpush.xpose.msra.mxu0 0.0
  %2168 = vmatpush.xpose.msra.mxu0 0.0
  %2169 = vmatpush.xpose.msra.mxu0 0.0
  %2170 = vmatpush.xpose.msra.mxu0 0.0
  %2171 = vmatpush.xpose.msra.mxu0 0.0
  %2172 = vmatpush.xpose.msra.mxu0 0.0
  %2173 = vmatpush.xpose.msra.mxu0 0.0
  %2174 = vmatpush.xpose.msra.mxu0 0.0
  %2175 = vmatpush.xpose.msra.mxu0 0.0
  %2176 = vmatpush.xpose.msra.mxu0 0.0
  %2177 = vmatpush.xpose.msra.mxu0 0.0
  %2178 = vmatpush.xpose.msra.mxu0 0.0
  %2179 = vmatpush.xpose.msra.mxu0 0.0
  %2180 = vmatpush.xpose.msra.mxu0 %v2163
  %2181 = vmatmul.f32.gmra.mxu0 %v2131
  %v2182 = vpop.f32.mrf.mxu0
  %v2183 = vadd.f32 0.0, %v2182
  %2184 = vmatmul.f32.gmra.mxu0 %v2134
  %v2185 = vpop.f32.mrf.mxu0
  %v2186 = vadd.f32 0.0, %v2185
  %2187 = vdwg.mxu0
  %v2189 = vsel %vm50, %v2120, 0
  %2191 = vmatpush.xpose.msra.mxu0 0.0
  %2192 = vmatpush.xpose.msra.mxu0 0.0
  %2193 = vmatpush.xpose.msra.mxu0 0.0
  %2194 = vmatpush.xpose.msra.mxu0 0.0
  %2195 = vmatpush.xpose.msra.mxu0 0.0
  %2196 = vmatpush.xpose.msra.mxu0 0.0
  %2197 = vmatpush.xpose.msra.mxu0 0.0
  %2198 = vmatpush.xpose.msra.mxu0 0.0
  %2199 = vmatpush.xpose.msra.mxu0 0.0
  %2200 = vmatpush.xpose.msra.mxu0 0.0
  %2201 = vmatpush.xpose.msra.mxu0 0.0
  %2202 = vmatpush.xpose.msra.mxu0 0.0
  %2203 = vmatpush.xpose.msra.mxu0 0.0
  %2204 = vmatpush.xpose.msra.mxu0 0.0
  %2205 = vmatpush.xpose.msra.mxu0 0.0
  %2206 = vmatpush.xpose.msra.mxu0 %v2189
  %2207 = vmatmul.f32.gmra.mxu0 %v2131
  %v2208 = vpop.f32.mrf.mxu0
  %v2209 = vadd.f32 0.0, %v2208
  %2210 = vmatmul.f32.gmra.mxu0 %v2134
  %v2211 = vpop.f32.mrf.mxu0
  %v2212 = vadd.f32 0.0, %v2211
  %2213 = vdwg.mxu0
  %v2215 = vsel %vm50, %v2121, 0
  %2217 = vmatpush.xpose.msra.mxu0 0.0
  %2218 = vmatpush.xpose.msra.mxu0 0.0
  %2219 = vmatpush.xpose.msra.mxu0 0.0
  %2220 = vmatpush.xpose.msra.mxu0 0.0
  %2221 = vmatpush.xpose.msra.mxu0 0.0
  %2222 = vmatpush.xpose.msra.mxu0 0.0
  %2223 = vmatpush.xpose.msra.mxu0 0.0
  %2224 = vmatpush.xpose.msra.mxu0 0.0
  %2225 = vmatpush.xpose.msra.mxu0 0.0
  %2226 = vmatpush.xpose.msra.mxu0 0.0
  %2227 = vmatpush.xpose.msra.mxu0 0.0
  %2228 = vmatpush.xpose.msra.mxu0 0.0
  %2229 = vmatpush.xpose.msra.mxu0 0.0
  %2230 = vmatpush.xpose.msra.mxu0 0.0
  %2231 = vmatpush.xpose.msra.mxu0 0.0
  %2232 = vmatpush.xpose.msra.mxu0 %v2215
  %2233 = vmatmul.f32.gmra.mxu0 %v2131
  %v2234 = vpop.f32.mrf.mxu0
  %v2235 = vadd.f32 0.0, %v2234
  %2236 = vmatmul.f32.gmra.mxu0 %v2134
  %v2237 = vpop.f32.mrf.mxu0
  %v2238 = vadd.f32 0.0, %v2237
  %2239 = vdwg.mxu0
  %v2241 = vsel %vm50, %v2122, 0
  %2243 = vmatpush.xpose.msra.mxu0 0.0
  %2244 = vmatpush.xpose.msra.mxu0 0.0
  %2245 = vmatpush.xpose.msra.mxu0 0.0
  %2246 = vmatpush.xpose.msra.mxu0 0.0
  %2247 = vmatpush.xpose.msra.mxu0 0.0
  %2248 = vmatpush.xpose.msra.mxu0 0.0
  %2249 = vmatpush.xpose.msra.mxu0 0.0
  %2250 = vmatpush.xpose.msra.mxu0 0.0
  %2251 = vmatpush.xpose.msra.mxu0 0.0
  %2252 = vmatpush.xpose.msra.mxu0 0.0
  %2253 = vmatpush.xpose.msra.mxu0 0.0
  %2254 = vmatpush.xpose.msra.mxu0 0.0
  %2255 = vmatpush.xpose.msra.mxu0 0.0
  %2256 = vmatpush.xpose.msra.mxu0 0.0
  %2257 = vmatpush.xpose.msra.mxu0 0.0
  %2258 = vmatpush.xpose.msra.mxu0 %v2241
  %2259 = vmatmul.f32.gmra.mxu0 %v2131
  %v2260 = vpop.f32.mrf.mxu0
  %v2261 = vadd.f32 0.0, %v2260
  %2262 = vmatmul.f32.gmra.mxu0 %v2134
  %v2263 = vpop.f32.mrf.mxu0
  %v2264 = vadd.f32 0.0, %v2263
  %2265 = vdwg.mxu0
  %v2267 = vsel %vm50, %v2123, 0
  %2269 = vmatpush.xpose.msra.mxu0 0.0
  %2270 = vmatpush.xpose.msra.mxu0 0.0
  %2271 = vmatpush.xpose.msra.mxu0 0.0
  %2272 = vmatpush.xpose.msra.mxu0 0.0
  %2273 = vmatpush.xpose.msra.mxu0 0.0
  %2274 = vmatpush.xpose.msra.mxu0 0.0
  %2275 = vmatpush.xpose.msra.mxu0 0.0
  %2276 = vmatpush.xpose.msra.mxu0 0.0
  %2277 = vmatpush.xpose.msra.mxu0 0.0
  %2278 = vmatpush.xpose.msra.mxu0 0.0
  %2279 = vmatpush.xpose.msra.mxu0 0.0
  %2280 = vmatpush.xpose.msra.mxu0 0.0
  %2281 = vmatpush.xpose.msra.mxu0 0.0
  %2282 = vmatpush.xpose.msra.mxu0 0.0
  %2283 = vmatpush.xpose.msra.mxu0 0.0
  %2284 = vmatpush.xpose.msra.mxu0 %v2267
  %2285 = vmatmul.f32.gmra.mxu0 %v2131
  %v2286 = vpop.f32.mrf.mxu0
  %v2287 = vadd.f32 0.0, %v2286
  %2288 = vmatmul.f32.gmra.mxu0 %v2134
  %v2289 = vpop.f32.mrf.mxu0
  %v2290 = vadd.f32 0.0, %v2289
  %2291 = vdwg.mxu0
  %v2293 = vsel %vm50, %v2124, 0
  %2295 = vmatpush.xpose.msra.mxu0 0.0
  %2296 = vmatpush.xpose.msra.mxu0 0.0
  %2297 = vmatpush.xpose.msra.mxu0 0.0
  %2298 = vmatpush.xpose.msra.mxu0 0.0
  %2299 = vmatpush.xpose.msra.mxu0 0.0
  %2300 = vmatpush.xpose.msra.mxu0 0.0
  %2301 = vmatpush.xpose.msra.mxu0 0.0
  %2302 = vmatpush.xpose.msra.mxu0 0.0
  %2303 = vmatpush.xpose.msra.mxu0 0.0
  %2304 = vmatpush.xpose.msra.mxu0 0.0
  %2305 = vmatpush.xpose.msra.mxu0 0.0
  %2306 = vmatpush.xpose.msra.mxu0 0.0
  %2307 = vmatpush.xpose.msra.mxu0 0.0
  %2308 = vmatpush.xpose.msra.mxu0 0.0
  %2309 = vmatpush.xpose.msra.mxu0 0.0
  %2310 = vmatpush.xpose.msra.mxu0 %v2293
  %2311 = vmatmul.f32.gmra.mxu0 %v2131
  %v2312 = vpop.f32.mrf.mxu0
  %v2313 = vadd.f32 0.0, %v2312
  %2314 = vmatmul.f32.gmra.mxu0 %v2134
  %v2315 = vpop.f32.mrf.mxu0
  %v2316 = vadd.f32 0.0, %v2315
  %2317 = vdwg.mxu0
  %v2319 = vsel %vm50, %v2125, 0
  %2321 = vmatpush.xpose.msra.mxu0 0.0
  %2322 = vmatpush.xpose.msra.mxu0 0.0
  %2323 = vmatpush.xpose.msra.mxu0 0.0
  %2324 = vmatpush.xpose.msra.mxu0 0.0
  %2325 = vmatpush.xpose.msra.mxu0 0.0
  %2326 = vmatpush.xpose.msra.mxu0 0.0
  %2327 = vmatpush.xpose.msra.mxu0 0.0
  %2328 = vmatpush.xpose.msra.mxu0 0.0
  %2329 = vmatpush.xpose.msra.mxu0 0.0
  %2330 = vmatpush.xpose.msra.mxu0 0.0
  %2331 = vmatpush.xpose.msra.mxu0 0.0
  %2332 = vmatpush.xpose.msra.mxu0 0.0
  %2333 = vmatpush.xpose.msra.mxu0 0.0
  %2334 = vmatpush.xpose.msra.mxu0 0.0
  %2335 = vmatpush.xpose.msra.mxu0 0.0
  %2336 = vmatpush.xpose.msra.mxu0 %v2319
  %2337 = vmatmul.f32.gmra.mxu0 %v2131
  %v2338 = vpop.f32.mrf.mxu0
  %v2339 = vadd.f32 0.0, %v2338
  %2340 = vmatmul.f32.gmra.mxu0 %v2134
  %v2341 = vpop.f32.mrf.mxu0
  %v2342 = vadd.f32 0.0, %v2341
  %2343 = vdwg.mxu0
  %v2345 = vsel %vm50, %v2126, 0
  %2347 = vmatpush.xpose.msra.mxu0 0.0
  %2348 = vmatpush.xpose.msra.mxu0 0.0
  %2349 = vmatpush.xpose.msra.mxu0 0.0
  %2350 = vmatpush.xpose.msra.mxu0 0.0
  %2351 = vmatpush.xpose.msra.mxu0 0.0
  %2352 = vmatpush.xpose.msra.mxu0 0.0
  %2353 = vmatpush.xpose.msra.mxu0 0.0
  %2354 = vmatpush.xpose.msra.mxu0 0.0
  %2355 = vmatpush.xpose.msra.mxu0 0.0
  %2356 = vmatpush.xpose.msra.mxu0 0.0
  %2357 = vmatpush.xpose.msra.mxu0 0.0
  %2358 = vmatpush.xpose.msra.mxu0 0.0
  %2359 = vmatpush.xpose.msra.mxu0 0.0
  %2360 = vmatpush.xpose.msra.mxu0 0.0
  %2361 = vmatpush.xpose.msra.mxu0 0.0
  %2362 = vmatpush.xpose.msra.mxu0 %v2345
  %2363 = vmatmul.f32.gmra.mxu0 %v2131
  %v2364 = vpop.f32.mrf.mxu0
  %v2365 = vadd.f32 0.0, %v2364
  %2366 = vmatmul.f32.gmra.mxu0 %v2134
  %v2367 = vpop.f32.mrf.mxu0
  %v2368 = vadd.f32 0.0, %v2367
  %2369 = vdwg.mxu0
  %v2371 = vsel %vm50, %v2127, 0
  %2373 = vmatpush.xpose.msra.mxu0 0.0
  %2374 = vmatpush.xpose.msra.mxu0 0.0
  %2375 = vmatpush.xpose.msra.mxu0 0.0
  %2376 = vmatpush.xpose.msra.mxu0 0.0
  %2377 = vmatpush.xpose.msra.mxu0 0.0
  %2378 = vmatpush.xpose.msra.mxu0 0.0
  %2379 = vmatpush.xpose.msra.mxu0 0.0
  %2380 = vmatpush.xpose.msra.mxu0 0.0
  %2381 = vmatpush.xpose.msra.mxu0 0.0
  %2382 = vmatpush.xpose.msra.mxu0 0.0
  %2383 = vmatpush.xpose.msra.mxu0 0.0
  %2384 = vmatpush.xpose.msra.mxu0 0.0
  %2385 = vmatpush.xpose.msra.mxu0 0.0
  %2386 = vmatpush.xpose.msra.mxu0 0.0
  %2387 = vmatpush.xpose.msra.mxu0 0.0
  %2388 = vmatpush.xpose.msra.mxu0 %v2371
  %2389 = vmatmul.f32.gmra.mxu0 %v2131
  %v2390 = vpop.f32.mrf.mxu0
  %v2391 = vadd.f32 0.0, %v2390
  %2392 = vmatmul.f32.gmra.mxu0 %v2134
  %v2393 = vpop.f32.mrf.mxu0
  %v2394 = vadd.f32 0.0, %v2393
  %2395 = vdwg.mxu0
  %v2397 = vsel %vm50, %v2128, 0
  %2399 = vmatpush.xpose.msra.mxu0 0.0
  %2400 = vmatpush.xpose.msra.mxu0 0.0
  %2401 = vmatpush.xpose.msra.mxu0 0.0
  %2402 = vmatpush.xpose.msra.mxu0 0.0
  %2403 = vmatpush.xpose.msra.mxu0 0.0
  %2404 = vmatpush.xpose.msra.mxu0 0.0
  %2405 = vmatpush.xpose.msra.mxu0 0.0
  %2406 = vmatpush.xpose.msra.mxu0 0.0
  %2407 = vmatpush.xpose.msra.mxu0 0.0
  %2408 = vmatpush.xpose.msra.mxu0 0.0
  %2409 = vmatpush.xpose.msra.mxu0 0.0
  %2410 = vmatpush.xpose.msra.mxu0 0.0
  %2411 = vmatpush.xpose.msra.mxu0 0.0
  %2412 = vmatpush.xpose.msra.mxu0 0.0
  %2413 = vmatpush.xpose.msra.mxu0 0.0
  %2414 = vmatpush.xpose.msra.mxu0 %v2397
  %2415 = vmatmul.f32.gmra.mxu0 %v2131
  %v2416 = vpop.f32.mrf.mxu0
  %v2417 = vadd.f32 0.0, %v2416
  %2418 = vmatmul.f32.gmra.mxu0 %v2134
  %v2419 = vpop.f32.mrf.mxu0
  %v2420 = vadd.f32 0.0, %v2419
  %2421 = vdwg.mxu0
  %v2423 = vsel %vm50, %v2129, 0
  %2425 = vmatpush.xpose.msra.mxu0 0.0
  %2426 = vmatpush.xpose.msra.mxu0 0.0
  %2427 = vmatpush.xpose.msra.mxu0 0.0
  %2428 = vmatpush.xpose.msra.mxu0 0.0
  %2429 = vmatpush.xpose.msra.mxu0 0.0
  %2430 = vmatpush.xpose.msra.mxu0 0.0
  %2431 = vmatpush.xpose.msra.mxu0 0.0
  %2432 = vmatpush.xpose.msra.mxu0 0.0
  %2433 = vmatpush.xpose.msra.mxu0 0.0
  %2434 = vmatpush.xpose.msra.mxu0 0.0
  %2435 = vmatpush.xpose.msra.mxu0 0.0
  %2436 = vmatpush.xpose.msra.mxu0 0.0
  %2437 = vmatpush.xpose.msra.mxu0 0.0
  %2438 = vmatpush.xpose.msra.mxu0 0.0
  %2439 = vmatpush.xpose.msra.mxu0 0.0
  %2440 = vmatpush.xpose.msra.mxu0 %v2423
  %2441 = vmatmul.f32.gmra.mxu0 %v2131
  %v2442 = vpop.f32.mrf.mxu0
  %v2443 = vadd.f32 0.0, %v2442
  %2444 = vmatmul.f32.gmra.mxu0 %v2134
  %v2445 = vpop.f32.mrf.mxu0
  %v2446 = vadd.f32 0.0, %v2445
  %2447 = vdwg.mxu0
  %s2448 = scalar_lea.vmem %s1, 448
  %v2449 = vld [vmem:[%s2448] sm:$0xff]
  %v2450 = vld [vmem:[%s2448 + $0x8] sm:$0xff]
  %v2451 = vld [vmem:[%s2448 + $0x10] sm:$0xff]
  %v2452 = vld [vmem:[%s2448 + $0x18] sm:$0xff]
  %s2453 = scalar_lea.vmem %s3, 16
  %v2454 = vld [vmem:[%s2453] sm:$0x1]
  %v2456 = vsel %vm375, %v2157, 0
  %v2459 = vsel %vm375, %v2160, 0
  %v2462 = vsel %vm375, %v2261, 0
  %v2465 = vsel %vm375, %v2264, 0
  %2467 = vmatpush.xpose.msra.mxu0 0.0
  %2468 = vmatpush.xpose.msra.mxu0 0.0
  %2469 = vmatpush.xpose.msra.mxu0 0.0
  %2470 = vmatpush.xpose.msra.mxu0 0.0
  %2471 = vmatpush.xpose.msra.mxu0 0.0
  %2472 = vmatpush.xpose.msra.mxu0 0.0
  %2473 = vmatpush.xpose.msra.mxu0 0.0
  %2474 = vmatpush.xpose.msra.mxu0 0.0
  %2475 = vmatpush.xpose.msra.mxu0 0.0
  %2476 = vmatpush.xpose.msra.mxu0 0.0
  %2477 = vmatpush.xpose.msra.mxu0 0.0
  %2478 = vmatpush.xpose.msra.mxu0 0.0
  %2479 = vmatpush.xpose.msra.mxu0 0.0
  %2480 = vmatpush.xpose.msra.mxu0 0.0
  %2481 = vmatpush.xpose.msra.mxu0 %v2465
  %2482 = vmatpush.xpose.msra.mxu0 %v2462
  %2483 = vmatmul.f32.gmra.mxu0 %v2456
  %v2484 = vpop.f32.mrf.mxu0
  %v2485 = vadd.f32 %v26, %v2484
  %2486 = vmatmul.f32.gmra.mxu0 %v2459
  %v2487 = vpop.f32.mrf.mxu0
  %v2488 = vadd.f32 %v27, %v2487
  %2489 = vdwg.mxu0
  %v2491 = vsel %vm375, %v2183, 0
  %v2494 = vsel %vm375, %v2186, 0
  %v2497 = vsel %vm375, %v2287, 0
  %v2500 = vsel %vm375, %v2290, 0
  %2502 = vmatpush.xpose.msra.mxu0 0.0
  %2503 = vmatpush.xpose.msra.mxu0 0.0
  %2504 = vmatpush.xpose.msra.mxu0 0.0
  %2505 = vmatpush.xpose.msra.mxu0 0.0
  %2506 = vmatpush.xpose.msra.mxu0 0.0
  %2507 = vmatpush.xpose.msra.mxu0 0.0
  %2508 = vmatpush.xpose.msra.mxu0 0.0
  %2509 = vmatpush.xpose.msra.mxu0 0.0
  %2510 = vmatpush.xpose.msra.mxu0 0.0
  %2511 = vmatpush.xpose.msra.mxu0 0.0
  %2512 = vmatpush.xpose.msra.mxu0 0.0
  %2513 = vmatpush.xpose.msra.mxu0 0.0
  %2514 = vmatpush.xpose.msra.mxu0 0.0
  %2515 = vmatpush.xpose.msra.mxu0 0.0
  %2516 = vmatpush.xpose.msra.mxu0 %v2500
  %2517 = vmatpush.xpose.msra.mxu0 %v2497
  %2518 = vmatmul.f32.gmra.mxu0 %v2491
  %v2519 = vpop.f32.mrf.mxu0
  %v2520 = vadd.f32 %v26, %v2519
  %2521 = vmatmul.f32.gmra.mxu0 %v2494
  %v2522 = vpop.f32.mrf.mxu0
  %v2523 = vadd.f32 %v27, %v2522
  %2524 = vdwg.mxu0
  %v2526 = vsel %vm375, %v2209, 0
  %v2529 = vsel %vm375, %v2212, 0
  %v2532 = vsel %vm375, %v2313, 0
  %v2535 = vsel %vm375, %v2316, 0
  %2537 = vmatpush.xpose.msra.mxu0 0.0
  %2538 = vmatpush.xpose.msra.mxu0 0.0
  %2539 = vmatpush.xpose.msra.mxu0 0.0
  %2540 = vmatpush.xpose.msra.mxu0 0.0
  %2541 = vmatpush.xpose.msra.mxu0 0.0
  %2542 = vmatpush.xpose.msra.mxu0 0.0
  %2543 = vmatpush.xpose.msra.mxu0 0.0
  %2544 = vmatpush.xpose.msra.mxu0 0.0
  %2545 = vmatpush.xpose.msra.mxu0 0.0
  %2546 = vmatpush.xpose.msra.mxu0 0.0
  %2547 = vmatpush.xpose.msra.mxu0 0.0
  %2548 = vmatpush.xpose.msra.mxu0 0.0
  %2549 = vmatpush.xpose.msra.mxu0 0.0
  %2550 = vmatpush.xpose.msra.mxu0 0.0
  %2551 = vmatpush.xpose.msra.mxu0 %v2535
  %2552 = vmatpush.xpose.msra.mxu0 %v2532
  %2553 = vmatmul.f32.gmra.mxu0 %v2526
  %v2554 = vpop.f32.mrf.mxu0
  %v2555 = vadd.f32 %v26, %v2554
  %2556 = vmatmul.f32.gmra.mxu0 %v2529
  %v2557 = vpop.f32.mrf.mxu0
  %v2558 = vadd.f32 %v27, %v2557
  %2559 = vdwg.mxu0
  %v2561 = vsel %vm375, %v2235, 0
  %v2564 = vsel %vm375, %v2238, 0
  %v2567 = vsel %vm375, %v2339, 0
  %v2570 = vsel %vm375, %v2342, 0
  %2572 = vmatpush.xpose.msra.mxu0 0.0
  %2573 = vmatpush.xpose.msra.mxu0 0.0
  %2574 = vmatpush.xpose.msra.mxu0 0.0
  %2575 = vmatpush.xpose.msra.mxu0 0.0
  %2576 = vmatpush.xpose.msra.mxu0 0.0
  %2577 = vmatpush.xpose.msra.mxu0 0.0
  %2578 = vmatpush.xpose.msra.mxu0 0.0
  %2579 = vmatpush.xpose.msra.mxu0 0.0
  %2580 = vmatpush.xpose.msra.mxu0 0.0
  %2581 = vmatpush.xpose.msra.mxu0 0.0
  %2582 = vmatpush.xpose.msra.mxu0 0.0
  %2583 = vmatpush.xpose.msra.mxu0 0.0
  %2584 = vmatpush.xpose.msra.mxu0 0.0
  %2585 = vmatpush.xpose.msra.mxu0 0.0
  %2586 = vmatpush.xpose.msra.mxu0 %v2570
  %2587 = vmatpush.xpose.msra.mxu0 %v2567
  %2588 = vmatmul.f32.gmra.mxu0 %v2561
  %v2589 = vpop.f32.mrf.mxu0
  %v2590 = vadd.f32 %v26, %v2589
  %2591 = vmatmul.f32.gmra.mxu0 %v2564
  %v2592 = vpop.f32.mrf.mxu0
  %v2593 = vadd.f32 %v27, %v2592
  %2594 = vdwg.mxu0
  %v2595 = vsel %vm516, %v2485, -inf
  %2596 = vmax.xlane.f32.xlu0 %v2595
  %v2597 = vpop.xlane.xlu0 %2596
  %v2598 = vsel %vm516, %v2488, -inf
  %2599 = vmax.xlane.f32.xlu0 %v2598
  %v2600 = vpop.xlane.xlu0 %2599
  %v2601 = vsel %vm516, %v2520, -inf
  %2602 = vmax.xlane.f32.xlu0 %v2601
  %v2603 = vpop.xlane.xlu0 %2602
  %v2604 = vsel %vm516, %v2523, -inf
  %2605 = vmax.xlane.f32.xlu0 %v2604
  %v2606 = vpop.xlane.xlu0 %2605
  %v2607 = vsel %vm516, %v2555, -inf
  %2608 = vmax.xlane.f32.xlu0 %v2607
  %v2609 = vpop.xlane.xlu0 %2608
  %v2610 = vsel %vm516, %v2558, -inf
  %2611 = vmax.xlane.f32.xlu0 %v2610
  %v2612 = vpop.xlane.xlu0 %2611
  %v2613 = vsel %vm516, %v2590, -inf
  %2614 = vmax.xlane.f32.xlu0 %v2613
  %v2615 = vpop.xlane.xlu0 %2614
  %v2616 = vsel %vm516, %v2593, -inf
  %2617 = vmax.xlane.f32.xlu0 %v2616
  %v2618 = vpop.xlane.xlu0 %2617
  %v2619 = vsub.f32 %v2485, %v2597
  %v2620 = vsub.f32 %v2488, %v2600
  %v2621 = vsub.f32 %v2520, %v2603
  %v2622 = vsub.f32 %v2523, %v2606
  %v2623 = vsub.f32 %v2555, %v2609
  %v2624 = vsub.f32 %v2558, %v2612
  %v2625 = vsub.f32 %v2590, %v2615
  %v2626 = vsub.f32 %v2593, %v2618
  %v2627 = vmul.f32 %v2619, 1.442695
  %v2628 = vpow.pop %v2627
  %v2629 = vmul.f32 %v2620, 1.442695
  %v2630 = vpow.pop %v2629
  %v2631 = vmul.f32 %v2621, 1.442695
  %v2632 = vpow.pop %v2631
  %v2633 = vmul.f32 %v2622, 1.442695
  %v2634 = vpow.pop %v2633
  %v2635 = vmul.f32 %v2623, 1.442695
  %v2636 = vpow.pop %v2635
  %v2637 = vmul.f32 %v2624, 1.442695
  %v2638 = vpow.pop %v2637
  %v2639 = vmul.f32 %v2625, 1.442695
  %v2640 = vpow.pop %v2639
  %v2641 = vmul.f32 %v2626, 1.442695
  %v2642 = vpow.pop %v2641
  %v2643 = vsel %vm516, %v2628, 0.0
  %2644 = vadd.xlane.f32.xlu0 %v2643
  %v2645 = vpop.xlane.xlu0 %2644
  %v2646 = vsel %vm516, %v2630, 0.0
  %2647 = vadd.xlane.f32.xlu0 %v2646
  %v2648 = vpop.xlane.xlu0 %2647
  %v2649 = vsel %vm516, %v2632, 0.0
  %2650 = vadd.xlane.f32.xlu0 %v2649
  %v2651 = vpop.xlane.xlu0 %2650
  %v2652 = vsel %vm516, %v2634, 0.0
  %2653 = vadd.xlane.f32.xlu0 %v2652
  %v2654 = vpop.xlane.xlu0 %2653
  %v2655 = vsel %vm516, %v2636, 0.0
  %2656 = vadd.xlane.f32.xlu0 %v2655
  %v2657 = vpop.xlane.xlu0 %2656
  %v2658 = vsel %vm516, %v2638, 0.0
  %2659 = vadd.xlane.f32.xlu0 %v2658
  %v2660 = vpop.xlane.xlu0 %2659
  %v2661 = vsel %vm516, %v2640, 0.0
  %2662 = vadd.xlane.f32.xlu0 %v2661
  %v2663 = vpop.xlane.xlu0 %2662
  %v2664 = vsel %vm516, %v2642, 0.0
  %2665 = vadd.xlane.f32.xlu0 %v2664
  %v2666 = vpop.xlane.xlu0 %2665
  %v2667 = vrcp.pop %v2645
  %v2668 = vrcp.pop %v2648
  %v2669 = vrcp.pop %v2651
  %v2670 = vrcp.pop %v2654
  %v2671 = vrcp.pop %v2657
  %v2672 = vrcp.pop %v2660
  %v2673 = vrcp.pop %v2663
  %v2674 = vrcp.pop %v2666
  %v2675 = vmul.f32 %v2628, %v2667
  %v2676 = vmul.f32 %v2630, %v2668
  %v2677 = vmul.f32 %v2632, %v2669
  %v2678 = vmul.f32 %v2634, %v2670
  %v2679 = vmul.f32 %v2636, %v2671
  %v2680 = vmul.f32 %v2638, %v2672
  %v2681 = vmul.f32 %v2640, %v2673
  %v2682 = vmul.f32 %v2642, %v2674
  %v2684 = vsel %vm516, %v2675, 0
  %v2687 = vsel %vm516, %v2676, 0
  %2689 = vmatpush.msra.mxu0 0.0
  %2690 = vmatpush.msra.mxu0 0.0
  %2691 = vmatpush.msra.mxu0 0.0
  %2692 = vmatpush.msra.mxu0 0.0
  %2693 = vmatpush.msra.mxu0 0.0
  %2694 = vmatpush.msra.mxu0 0.0
  %2695 = vmatpush.msra.mxu0 0.0
  %2696 = vmatpush.msra.mxu0 0.0
  %2697 = vmatpush.msra.mxu0 0.0
  %2698 = vmatpush.msra.mxu0 0.0
  %2699 = vmatpush.msra.mxu0 0.0
  %2700 = vmatpush.msra.mxu0 0.0
  %2701 = vmatpush.msra.mxu0 0.0
  %2702 = vmatpush.msra.mxu0 0.0
  %2703 = vmatpush.msra.mxu0 %v2368
  %2704 = vmatpush.msra.mxu0 %v2365
  %2705 = vmatmul.f32.gmra.mxu0 %v2684
  %v2706 = vpop.f32.mrf.mxu0
  %v2707 = vadd.f32 0.0, %v2706
  %2708 = vmatmul.f32.gmra.mxu0 %v2687
  %v2709 = vpop.f32.mrf.mxu0
  %v2710 = vadd.f32 0.0, %v2709
  %2711 = vdwg.mxu0
  %v2713 = vsel %vm516, %v2677, 0
  %v2716 = vsel %vm516, %v2678, 0
  %2718 = vmatpush.msra.mxu0 0.0
  %2719 = vmatpush.msra.mxu0 0.0
  %2720 = vmatpush.msra.mxu0 0.0
  %2721 = vmatpush.msra.mxu0 0.0
  %2722 = vmatpush.msra.mxu0 0.0
  %2723 = vmatpush.msra.mxu0 0.0
  %2724 = vmatpush.msra.mxu0 0.0
  %2725 = vmatpush.msra.mxu0 0.0
  %2726 = vmatpush.msra.mxu0 0.0
  %2727 = vmatpush.msra.mxu0 0.0
  %2728 = vmatpush.msra.mxu0 0.0
  %2729 = vmatpush.msra.mxu0 0.0
  %2730 = vmatpush.msra.mxu0 0.0
  %2731 = vmatpush.msra.mxu0 0.0
  %2732 = vmatpush.msra.mxu0 %v2394
  %2733 = vmatpush.msra.mxu0 %v2391
  %2734 = vmatmul.f32.gmra.mxu0 %v2713
  %v2735 = vpop.f32.mrf.mxu0
  %v2736 = vadd.f32 0.0, %v2735
  %2737 = vmatmul.f32.gmra.mxu0 %v2716
  %v2738 = vpop.f32.mrf.mxu0
  %v2739 = vadd.f32 0.0, %v2738
  %2740 = vdwg.mxu0
  %v2742 = vsel %vm516, %v2679, 0
  %v2745 = vsel %vm516, %v2680, 0
  %2747 = vmatpush.msra.mxu0 0.0
  %2748 = vmatpush.msra.mxu0 0.0
  %2749 = vmatpush.msra.mxu0 0.0
  %2750 = vmatpush.msra.mxu0 0.0
  %2751 = vmatpush.msra.mxu0 0.0
  %2752 = vmatpush.msra.mxu0 0.0
  %2753 = vmatpush.msra.mxu0 0.0
  %2754 = vmatpush.msra.mxu0 0.0
  %2755 = vmatpush.msra.mxu0 0.0
  %2756 = vmatpush.msra.mxu0 0.0
  %2757 = vmatpush.msra.mxu0 0.0
  %2758 = vmatpush.msra.mxu0 0.0
  %2759 = vmatpush.msra.mxu0 0.0
  %2760 = vmatpush.msra.mxu0 0.0
  %2761 = vmatpush.msra.mxu0 %v2420
  %2762 = vmatpush.msra.mxu0 %v2417
  %2763 = vmatmul.f32.gmra.mxu0 %v2742
  %v2764 = vpop.f32.mrf.mxu0
  %v2765 = vadd.f32 0.0, %v2764
  %2766 = vmatmul.f32.gmra.mxu0 %v2745
  %v2767 = vpop.f32.mrf.mxu0
  %v2768 = vadd.f32 0.0, %v2767
  %2769 = vdwg.mxu0
  %v2771 = vsel %vm516, %v2681, 0
  %v2774 = vsel %vm516, %v2682, 0
  %2776 = vmatpush.msra.mxu0 0.0
  %2777 = vmatpush.msra.mxu0 0.0
  %2778 = vmatpush.msra.mxu0 0.0
  %2779 = vmatpush.msra.mxu0 0.0
  %2780 = vmatpush.msra.mxu0 0.0
  %2781 = vmatpush.msra.mxu0 0.0
  %2782 = vmatpush.msra.mxu0 0.0
  %2783 = vmatpush.msra.mxu0 0.0
  %2784 = vmatpush.msra.mxu0 0.0
  %2785 = vmatpush.msra.mxu0 0.0
  %2786 = vmatpush.msra.mxu0 0.0
  %2787 = vmatpush.msra.mxu0 0.0
  %2788 = vmatpush.msra.mxu0 0.0
  %2789 = vmatpush.msra.mxu0 0.0
  %2790 = vmatpush.msra.mxu0 %v2446
  %2791 = vmatpush.msra.mxu0 %v2443
  %2792 = vmatmul.f32.gmra.mxu0 %v2771
  %v2793 = vpop.f32.mrf.mxu0
  %v2794 = vadd.f32 0.0, %v2793
  %2795 = vmatmul.f32.gmra.mxu0 %v2774
  %v2796 = vpop.f32.mrf.mxu0
  %v2797 = vadd.f32 0.0, %v2796
  %2798 = vdwg.mxu0
  %v2800 = vsel %vm375, %v2707, 0
  %v2803 = vsel %vm375, %v2710, 0
  %2805 = vmatpush.msra.mxu0 0.0
  %2806 = vmatpush.msra.mxu0 0.0
  %2807 = vmatpush.msra.mxu0 0.0
  %2808 = vmatpush.msra.mxu0 0.0
  %2809 = vmatpush.msra.mxu0 0.0
  %2810 = vmatpush.msra.mxu0 0.0
  %2811 = vmatpush.msra.mxu0 0.0
  %2812 = vmatpush.msra.mxu0 0.0
  %2813 = vmatpush.msra.mxu0 0.0
  %2814 = vmatpush.msra.mxu0 0.0
  %2815 = vmatpush.msra.mxu0 0.0
  %2816 = vmatpush.msra.mxu0 0.0
  %2817 = vmatpush.msra.mxu0 0.0
  %2818 = vmatpush.msra.mxu0 0.0
  %2819 = vmatpush.msra.mxu0 0.0
  %2820 = vmatpush.msra.mxu0 %v2449
  %2821 = vmatmul.f32.gmra.mxu0 %v2800
  %v2822 = vpop.f32.mrf.mxu0
  %v2823 = vadd.f32 0.0, %v2822
  %2824 = vmatmul.f32.gmra.mxu0 %v2803
  %v2825 = vpop.f32.mrf.mxu0
  %v2826 = vadd.f32 0.0, %v2825
  %2827 = vdwg.mxu0
  %v2829 = vsel %vm375, %v2736, 0
  %v2832 = vsel %vm375, %v2739, 0
  %2834 = vmatpush.msra.mxu0 0.0
  %2835 = vmatpush.msra.mxu0 0.0
  %2836 = vmatpush.msra.mxu0 0.0
  %2837 = vmatpush.msra.mxu0 0.0
  %2838 = vmatpush.msra.mxu0 0.0
  %2839 = vmatpush.msra.mxu0 0.0
  %2840 = vmatpush.msra.mxu0 0.0
  %2841 = vmatpush.msra.mxu0 0.0
  %2842 = vmatpush.msra.mxu0 0.0
  %2843 = vmatpush.msra.mxu0 0.0
  %2844 = vmatpush.msra.mxu0 0.0
  %2845 = vmatpush.msra.mxu0 0.0
  %2846 = vmatpush.msra.mxu0 0.0
  %2847 = vmatpush.msra.mxu0 0.0
  %2848 = vmatpush.msra.mxu0 0.0
  %2849 = vmatpush.msra.mxu0 %v2450
  %2850 = vmatmul.f32.gmra.mxu0 %v2829
  %v2851 = vpop.f32.mrf.mxu0
  %v2852 = vadd.f32 0.0, %v2851
  %2853 = vmatmul.f32.gmra.mxu0 %v2832
  %v2854 = vpop.f32.mrf.mxu0
  %v2855 = vadd.f32 0.0, %v2854
  %2856 = vdwg.mxu0
  %v2858 = vsel %vm375, %v2765, 0
  %v2861 = vsel %vm375, %v2768, 0
  %2863 = vmatpush.msra.mxu0 0.0
  %2864 = vmatpush.msra.mxu0 0.0
  %2865 = vmatpush.msra.mxu0 0.0
  %2866 = vmatpush.msra.mxu0 0.0
  %2867 = vmatpush.msra.mxu0 0.0
  %2868 = vmatpush.msra.mxu0 0.0
  %2869 = vmatpush.msra.mxu0 0.0
  %2870 = vmatpush.msra.mxu0 0.0
  %2871 = vmatpush.msra.mxu0 0.0
  %2872 = vmatpush.msra.mxu0 0.0
  %2873 = vmatpush.msra.mxu0 0.0
  %2874 = vmatpush.msra.mxu0 0.0
  %2875 = vmatpush.msra.mxu0 0.0
  %2876 = vmatpush.msra.mxu0 0.0
  %2877 = vmatpush.msra.mxu0 0.0
  %2878 = vmatpush.msra.mxu0 %v2451
  %2879 = vmatmul.f32.gmra.mxu0 %v2858
  %v2880 = vpop.f32.mrf.mxu0
  %v2881 = vadd.f32 0.0, %v2880
  %2882 = vmatmul.f32.gmra.mxu0 %v2861
  %v2883 = vpop.f32.mrf.mxu0
  %v2884 = vadd.f32 0.0, %v2883
  %2885 = vdwg.mxu0
  %v2887 = vsel %vm375, %v2794, 0
  %v2890 = vsel %vm375, %v2797, 0
  %2892 = vmatpush.msra.mxu0 0.0
  %2893 = vmatpush.msra.mxu0 0.0
  %2894 = vmatpush.msra.mxu0 0.0
  %2895 = vmatpush.msra.mxu0 0.0
  %2896 = vmatpush.msra.mxu0 0.0
  %2897 = vmatpush.msra.mxu0 0.0
  %2898 = vmatpush.msra.mxu0 0.0
  %2899 = vmatpush.msra.mxu0 0.0
  %2900 = vmatpush.msra.mxu0 0.0
  %2901 = vmatpush.msra.mxu0 0.0
  %2902 = vmatpush.msra.mxu0 0.0
  %2903 = vmatpush.msra.mxu0 0.0
  %2904 = vmatpush.msra.mxu0 0.0
  %2905 = vmatpush.msra.mxu0 0.0
  %2906 = vmatpush.msra.mxu0 0.0
  %2907 = vmatpush.msra.mxu0 %v2452
  %2908 = vmatmul.f32.gmra.mxu0 %v2887
  %v2909 = vpop.f32.mrf.mxu0
  %v2910 = vadd.f32 0.0, %v2909
  %2911 = vmatmul.f32.gmra.mxu0 %v2890
  %v2912 = vpop.f32.mrf.mxu0
  %v2913 = vadd.f32 0.0, %v2912
  %2914 = vdwg.mxu0
  %v2915 = vsel %vm33, %v2823, 0.0
  %v2916 = vsel %vm33, %v2852, 0.0
  %v2917 = vadd.f32 %v2915, %v2916
  %v2918 = vsel %vm33, %v2881, 0.0
  %v2919 = vadd.f32 %v2917, %v2918
  %v2920 = vsel %vm33, %v2910, 0.0
  %v2921 = vadd.f32 %v2919, %v2920
  %v2922 = vsel %vm33, %v2826, 0.0
  %v2923 = vsel %vm33, %v2855, 0.0
  %v2924 = vadd.f32 %v2922, %v2923
  %v2925 = vsel %vm33, %v2884, 0.0
  %v2926 = vadd.f32 %v2924, %v2925
  %v2927 = vsel %vm33, %v2913, 0.0
  %v2928 = vadd.f32 %v2926, %v2927
  %v2929 = vperm.slane %v2454, 0
  %v2930 = vadd.f32 %v2921, %v2929
  %v2931 = vadd.f32 %v2928, %v2929
  %v2932 = vadd.f32 %v2113, %v2930
  %v2933 = vadd.f32 %v2114, %v2931
  %v2934 = vld [vmem:[%s2453 + $0x4] sm:$0x1]
  %v2935 = vld [vmem:[%s2453 + $0x5] sm:$0x1]
  %v2937 = vsel %vm33, %v2932, 0
  %v2940 = vsel %vm33, %v2933, 0
  %2942 = vmatpush.msra.mxu0 0.0
  %2943 = vmatpush.msra.mxu0 0.0
  %2944 = vmatpush.msra.mxu0 0.0
  %2945 = vmatpush.msra.mxu0 0.0
  %2946 = vmatpush.msra.mxu0 0.0
  %2947 = vmatpush.msra.mxu0 0.0
  %2948 = vmatpush.msra.mxu0 0.0
  %2949 = vmatpush.msra.mxu0 0.0
  %2950 = vmatpush.msra.mxu0 0.0
  %2951 = vmatpush.msra.mxu0 0.0
  %2952 = vmatpush.msra.mxu0 0.0
  %2953 = vmatpush.msra.mxu0 0.0
  %2954 = vmatpush.msra.mxu0 %v32
  %2955 = vmatpush.msra.mxu0 %v32
  %2956 = vmatpush.msra.mxu0 %v32
  %2957 = vmatpush.msra.mxu0 %v32
  %2958 = vmatmul.f32.gmra.mxu0 %v2937
  %v2959 = vpop.f32.mrf.mxu0
  %v2960 = vadd.f32 0.0, %v2959
  %2961 = vmatmul.f32.gmra.mxu0 %v2940
  %v2962 = vpop.f32.mrf.mxu0
  %v2963 = vadd.f32 0.0, %v2962
  %2964 = vdwg.mxu0
  %v2965 = vmul.f32 %v2932, %v2932
  %v2966 = vmul.f32 %v2933, %v2933
  %v2968 = vsel %vm33, %v2965, 0
  %v2971 = vsel %vm33, %v2966, 0
  %2973 = vmatpush.msra.mxu0 0.0
  %2974 = vmatpush.msra.mxu0 0.0
  %2975 = vmatpush.msra.mxu0 0.0
  %2976 = vmatpush.msra.mxu0 0.0
  %2977 = vmatpush.msra.mxu0 0.0
  %2978 = vmatpush.msra.mxu0 0.0
  %2979 = vmatpush.msra.mxu0 0.0
  %2980 = vmatpush.msra.mxu0 0.0
  %2981 = vmatpush.msra.mxu0 0.0
  %2982 = vmatpush.msra.mxu0 0.0
  %2983 = vmatpush.msra.mxu0 0.0
  %2984 = vmatpush.msra.mxu0 0.0
  %2985 = vmatpush.msra.mxu0 %v32
  %2986 = vmatpush.msra.mxu0 %v32
  %2987 = vmatpush.msra.mxu0 %v32
  %2988 = vmatpush.msra.mxu0 %v32
  %2989 = vmatmul.f32.gmra.mxu0 %v2968
  %v2990 = vpop.f32.mrf.mxu0
  %v2991 = vadd.f32 0.0, %v2990
  %2992 = vmatmul.f32.gmra.mxu0 %v2971
  %v2993 = vpop.f32.mrf.mxu0
  %v2994 = vadd.f32 0.0, %v2993
  %2995 = vdwg.mxu0
  %v2996 = vmul.f32 %v2960, %v2960
  %v2997 = vmul.f32 %v2963, %v2963
  %v2998 = vsub.f32 %v2991, %v2996
  %v2999 = vsub.f32 %v2994, %v2997
  %3001 = vset.pattern.permute.xlu0 0
  %3002 = vperm.xlu0 %3001, %v2960
  %v3003 = vpop.permute.xlu0 %3002
  %3006 = vset.pattern.permute.xlu0 0
  %3007 = vperm.xlu0 %3006, %v2963
  %v3008 = vpop.permute.xlu0 %3007
  %v3010 = vsub.f32 %v2932, %v3003
  %v3011 = vsub.f32 %v2933, %v3008
  %v3012 = vadd.f32 %v2998, 1e-05
  %v3013 = vadd.f32 %v2999, 1e-05
  %v3014 = vrsqrt.pop %v3012
  %v3015 = vmul.f32 %v3014, %v3012
  %v3016 = vmul.f32 %v3015, %v3014
  %v3017 = vmul.f32 0.5, %v3016
  %v3018 = vsub.f32 1.5, %v3017
  %v3019 = vmul.f32 %v3014, %v3018
  %vm3020 = vweird.f32 %v3012
  %vm3021 = vweird.f32 %v3014
  %vm3022 = vmor %vm3020, %vm3021
  %v3023 = vsel %vm3022, %v3014, %v3019
  %v3024 = vrsqrt.pop %v3013
  %v3025 = vmul.f32 %v3024, %v3013
  %v3026 = vmul.f32 %v3025, %v3024
  %v3027 = vmul.f32 0.5, %v3026
  %v3028 = vsub.f32 1.5, %v3027
  %v3029 = vmul.f32 %v3024, %v3028
  %vm3030 = vweird.f32 %v3013
  %vm3031 = vweird.f32 %v3024
  %vm3032 = vmor %vm3030, %vm3031
  %v3033 = vsel %vm3032, %v3024, %v3029
  %3035 = vset.pattern.permute.xlu0 0
  %3036 = vperm.xlu0 %3035, %v3023
  %v3037 = vpop.permute.xlu0 %3036
  %3040 = vset.pattern.permute.xlu0 0
  %3041 = vperm.xlu0 %3040, %v3033
  %v3042 = vpop.permute.xlu0 %3041
  %v3044 = vmul.f32 %v3010, %v3037
  %v3045 = vmul.f32 %v3011, %v3042
  %v3046 = vperm.slane %v2934, 0
  %v3047 = vmul.f32 %v3044, %v3046
  %v3048 = vmul.f32 %v3045, %v3046
  %v3049 = vperm.slane %v2935, 0
  %v3050 = vadd.f32 %v3047, %v3049
  %v3051 = vadd.f32 %v3048, %v3049
  %v3052 = vsel %vm33, %v3050, 1.0
  %v3053 = vsel %vm33, %v3051, 1.0
  %s3054 = scalar_lea.vmem %s1, 352
  %v3055 = vld [vmem:[%s3054] sm:$0xff]
  %v3056 = vld [vmem:[%s3054 + $0x8] sm:$0xff]
  %v3057 = vld [vmem:[%s3054 + $0x10] sm:$0xff]
  %v3058 = vld [vmem:[%s3054 + $0x18] sm:$0xff]
  %v3060 = vsel %vm50, %v3052, 0
  %v3063 = vsel %vm50, %v3053, 0
  %v3066 = vsel %vm50, %v3055, 0
  %3068 = vmatpush.xpose.msra.mxu0 0.0
  %3069 = vmatpush.xpose.msra.mxu0 0.0
  %3070 = vmatpush.xpose.msra.mxu0 0.0
  %3071 = vmatpush.xpose.msra.mxu0 0.0
  %3072 = vmatpush.xpose.msra.mxu0 0.0
  %3073 = vmatpush.xpose.msra.mxu0 0.0
  %3074 = vmatpush.xpose.msra.mxu0 0.0
  %3075 = vmatpush.xpose.msra.mxu0 0.0
  %3076 = vmatpush.xpose.msra.mxu0 0.0
  %3077 = vmatpush.xpose.msra.mxu0 0.0
  %3078 = vmatpush.xpose.msra.mxu0 0.0
  %3079 = vmatpush.xpose.msra.mxu0 0.0
  %3080 = vmatpush.xpose.msra.mxu0 0.0
  %3081 = vmatpush.xpose.msra.mxu0 0.0
  %3082 = vmatpush.xpose.msra.mxu0 0.0
  %3083 = vmatpush.xpose.msra.mxu0 %v3066
  %3084 = vmatmul.f32.gmra.mxu0 %v3060
  %v3085 = vpop.f32.mrf.mxu0
  %v3086 = vadd.f32 0.0, %v3085
  %3087 = vmatmul.f32.gmra.mxu0 %v3063
  %v3088 = vpop.f32.mrf.mxu0
  %v3089 = vadd.f32 0.0, %v3088
  %3090 = vdwg.mxu0
  %v3092 = vsel %vm50, %v3056, 0
  %3094 = vmatpush.xpose.msra.mxu0 0.0
  %3095 = vmatpush.xpose.msra.mxu0 0.0
  %3096 = vmatpush.xpose.msra.mxu0 0.0
  %3097 = vmatpush.xpose.msra.mxu0 0.0
  %3098 = vmatpush.xpose.msra.mxu0 0.0
  %3099 = vmatpush.xpose.msra.mxu0 0.0
  %3100 = vmatpush.xpose.msra.mxu0 0.0
  %3101 = vmatpush.xpose.msra.mxu0 0.0
  %3102 = vmatpush.xpose.msra.mxu0 0.0
  %3103 = vmatpush.xpose.msra.mxu0 0.0
  %3104 = vmatpush.xpose.msra.mxu0 0.0
  %3105 = vmatpush.xpose.msra.mxu0 0.0
  %3106 = vmatpush.xpose.msra.mxu0 0.0
  %3107 = vmatpush.xpose.msra.mxu0 0.0
  %3108 = vmatpush.xpose.msra.mxu0 0.0
  %3109 = vmatpush.xpose.msra.mxu0 %v3092
  %3110 = vmatmul.f32.gmra.mxu0 %v3060
  %v3111 = vpop.f32.mrf.mxu0
  %v3112 = vadd.f32 0.0, %v3111
  %3113 = vmatmul.f32.gmra.mxu0 %v3063
  %v3114 = vpop.f32.mrf.mxu0
  %v3115 = vadd.f32 0.0, %v3114
  %3116 = vdwg.mxu0
  %v3118 = vsel %vm50, %v3057, 0
  %3120 = vmatpush.xpose.msra.mxu0 0.0
  %3121 = vmatpush.xpose.msra.mxu0 0.0
  %3122 = vmatpush.xpose.msra.mxu0 0.0
  %3123 = vmatpush.xpose.msra.mxu0 0.0
  %3124 = vmatpush.xpose.msra.mxu0 0.0
  %3125 = vmatpush.xpose.msra.mxu0 0.0
  %3126 = vmatpush.xpose.msra.mxu0 0.0
  %3127 = vmatpush.xpose.msra.mxu0 0.0
  %3128 = vmatpush.xpose.msra.mxu0 0.0
  %3129 = vmatpush.xpose.msra.mxu0 0.0
  %3130 = vmatpush.xpose.msra.mxu0 0.0
  %3131 = vmatpush.xpose.msra.mxu0 0.0
  %3132 = vmatpush.xpose.msra.mxu0 0.0
  %3133 = vmatpush.xpose.msra.mxu0 0.0
  %3134 = vmatpush.xpose.msra.mxu0 0.0
  %3135 = vmatpush.xpose.msra.mxu0 %v3118
  %3136 = vmatmul.f32.gmra.mxu0 %v3060
  %v3137 = vpop.f32.mrf.mxu0
  %v3138 = vadd.f32 0.0, %v3137
  %3139 = vmatmul.f32.gmra.mxu0 %v3063
  %v3140 = vpop.f32.mrf.mxu0
  %v3141 = vadd.f32 0.0, %v3140
  %3142 = vdwg.mxu0
  %v3144 = vsel %vm50, %v3058, 0
  %3146 = vmatpush.xpose.msra.mxu0 0.0
  %3147 = vmatpush.xpose.msra.mxu0 0.0
  %3148 = vmatpush.xpose.msra.mxu0 0.0
  %3149 = vmatpush.xpose.msra.mxu0 0.0
  %3150 = vmatpush.xpose.msra.mxu0 0.0
  %3151 = vmatpush.xpose.msra.mxu0 0.0
  %3152 = vmatpush.xpose.msra.mxu0 0.0
  %3153 = vmatpush.xpose.msra.mxu0 0.0
  %3154 = vmatpush.xpose.msra.mxu0 0.0
  %3155 = vmatpush.xpose.msra.mxu0 0.0
  %3156 = vmatpush.xpose.msra.mxu0 0.0
  %3157 = vmatpush.xpose.msra.mxu0 0.0
  %3158 = vmatpush.xpose.msra.mxu0 0.0
  %3159 = vmatpush.xpose.msra.mxu0 0.0
  %3160 = vmatpush.xpose.msra.mxu0 0.0
  %3161 = vmatpush.xpose.msra.mxu0 %v3144
  %3162 = vmatmul.f32.gmra.mxu0 %v3060
  %v3163 = vpop.f32.mrf.mxu0
  %v3164 = vadd.f32 0.0, %v3163
  %3165 = vmatmul.f32.gmra.mxu0 %v3063
  %v3166 = vpop.f32.mrf.mxu0
  %v3167 = vadd.f32 0.0, %v3166
  %3168 = vdwg.mxu0
  %s3169 = scalar_lea.vmem %s1, 384
  %v3170 = vld [vmem:[%s3169] sm:$0xff]
  %v3171 = vld [vmem:[%s3169 + $0x8] sm:$0xff]
  %v3172 = vld [vmem:[%s3169 + $0x10] sm:$0xff]
  %v3173 = vld [vmem:[%s3169 + $0x18] sm:$0xff]
  %v3174 = vld [vmem:[%s3169 + $0x20] sm:$0xff]
  %v3175 = vld [vmem:[%s3169 + $0x28] sm:$0xff]
  %v3176 = vld [vmem:[%s3169 + $0x30] sm:$0xff]
  %v3177 = vld [vmem:[%s3169 + $0x38] sm:$0xff]
  %v3179 = vsel %vm50, %v3170, 0
  %3181 = vmatpush.xpose.msra.mxu0 0.0
  %3182 = vmatpush.xpose.msra.mxu0 0.0
  %3183 = vmatpush.xpose.msra.mxu0 0.0
  %3184 = vmatpush.xpose.msra.mxu0 0.0
  %3185 = vmatpush.xpose.msra.mxu0 0.0
  %3186 = vmatpush.xpose.msra.mxu0 0.0
  %3187 = vmatpush.xpose.msra.mxu0 0.0
  %3188 = vmatpush.xpose.msra.mxu0 0.0
  %3189 = vmatpush.xpose.msra.mxu0 0.0
  %3190 = vmatpush.xpose.msra.mxu0 0.0
  %3191 = vmatpush.xpose.msra.mxu0 0.0
  %3192 = vmatpush.xpose.msra.mxu0 0.0
  %3193 = vmatpush.xpose.msra.mxu0 0.0
  %3194 = vmatpush.xpose.msra.mxu0 0.0
  %3195 = vmatpush.xpose.msra.mxu0 0.0
  %3196 = vmatpush.xpose.msra.mxu0 %v3179
  %3197 = vmatmul.f32.gmra.mxu0 %v1101
  %v3198 = vpop.f32.mrf.mxu0
  %v3199 = vadd.f32 0.0, %v3198
  %3200 = vmatmul.f32.gmra.mxu0 %v1104
  %v3201 = vpop.f32.mrf.mxu0
  %v3202 = vadd.f32 0.0, %v3201
  %3203 = vdwg.mxu0
  %v3205 = vsel %vm50, %v3171, 0
  %3207 = vmatpush.xpose.msra.mxu0 0.0
  %3208 = vmatpush.xpose.msra.mxu0 0.0
  %3209 = vmatpush.xpose.msra.mxu0 0.0
  %3210 = vmatpush.xpose.msra.mxu0 0.0
  %3211 = vmatpush.xpose.msra.mxu0 0.0
  %3212 = vmatpush.xpose.msra.mxu0 0.0
  %3213 = vmatpush.xpose.msra.mxu0 0.0
  %3214 = vmatpush.xpose.msra.mxu0 0.0
  %3215 = vmatpush.xpose.msra.mxu0 0.0
  %3216 = vmatpush.xpose.msra.mxu0 0.0
  %3217 = vmatpush.xpose.msra.mxu0 0.0
  %3218 = vmatpush.xpose.msra.mxu0 0.0
  %3219 = vmatpush.xpose.msra.mxu0 0.0
  %3220 = vmatpush.xpose.msra.mxu0 0.0
  %3221 = vmatpush.xpose.msra.mxu0 0.0
  %3222 = vmatpush.xpose.msra.mxu0 %v3205
  %3223 = vmatmul.f32.gmra.mxu0 %v1101
  %v3224 = vpop.f32.mrf.mxu0
  %v3225 = vadd.f32 0.0, %v3224
  %3226 = vmatmul.f32.gmra.mxu0 %v1104
  %v3227 = vpop.f32.mrf.mxu0
  %v3228 = vadd.f32 0.0, %v3227
  %3229 = vdwg.mxu0
  %v3231 = vsel %vm50, %v3172, 0
  %3233 = vmatpush.xpose.msra.mxu0 0.0
  %3234 = vmatpush.xpose.msra.mxu0 0.0
  %3235 = vmatpush.xpose.msra.mxu0 0.0
  %3236 = vmatpush.xpose.msra.mxu0 0.0
  %3237 = vmatpush.xpose.msra.mxu0 0.0
  %3238 = vmatpush.xpose.msra.mxu0 0.0
  %3239 = vmatpush.xpose.msra.mxu0 0.0
  %3240 = vmatpush.xpose.msra.mxu0 0.0
  %3241 = vmatpush.xpose.msra.mxu0 0.0
  %3242 = vmatpush.xpose.msra.mxu0 0.0
  %3243 = vmatpush.xpose.msra.mxu0 0.0
  %3244 = vmatpush.xpose.msra.mxu0 0.0
  %3245 = vmatpush.xpose.msra.mxu0 0.0
  %3246 = vmatpush.xpose.msra.mxu0 0.0
  %3247 = vmatpush.xpose.msra.mxu0 0.0
  %3248 = vmatpush.xpose.msra.mxu0 %v3231
  %3249 = vmatmul.f32.gmra.mxu0 %v1101
  %v3250 = vpop.f32.mrf.mxu0
  %v3251 = vadd.f32 0.0, %v3250
  %3252 = vmatmul.f32.gmra.mxu0 %v1104
  %v3253 = vpop.f32.mrf.mxu0
  %v3254 = vadd.f32 0.0, %v3253
  %3255 = vdwg.mxu0
  %v3257 = vsel %vm50, %v3173, 0
  %3259 = vmatpush.xpose.msra.mxu0 0.0
  %3260 = vmatpush.xpose.msra.mxu0 0.0
  %3261 = vmatpush.xpose.msra.mxu0 0.0
  %3262 = vmatpush.xpose.msra.mxu0 0.0
  %3263 = vmatpush.xpose.msra.mxu0 0.0
  %3264 = vmatpush.xpose.msra.mxu0 0.0
  %3265 = vmatpush.xpose.msra.mxu0 0.0
  %3266 = vmatpush.xpose.msra.mxu0 0.0
  %3267 = vmatpush.xpose.msra.mxu0 0.0
  %3268 = vmatpush.xpose.msra.mxu0 0.0
  %3269 = vmatpush.xpose.msra.mxu0 0.0
  %3270 = vmatpush.xpose.msra.mxu0 0.0
  %3271 = vmatpush.xpose.msra.mxu0 0.0
  %3272 = vmatpush.xpose.msra.mxu0 0.0
  %3273 = vmatpush.xpose.msra.mxu0 0.0
  %3274 = vmatpush.xpose.msra.mxu0 %v3257
  %3275 = vmatmul.f32.gmra.mxu0 %v1101
  %v3276 = vpop.f32.mrf.mxu0
  %v3277 = vadd.f32 0.0, %v3276
  %3278 = vmatmul.f32.gmra.mxu0 %v1104
  %v3279 = vpop.f32.mrf.mxu0
  %v3280 = vadd.f32 0.0, %v3279
  %3281 = vdwg.mxu0
  %v3283 = vsel %vm50, %v3174, 0
  %3285 = vmatpush.xpose.msra.mxu0 0.0
  %3286 = vmatpush.xpose.msra.mxu0 0.0
  %3287 = vmatpush.xpose.msra.mxu0 0.0
  %3288 = vmatpush.xpose.msra.mxu0 0.0
  %3289 = vmatpush.xpose.msra.mxu0 0.0
  %3290 = vmatpush.xpose.msra.mxu0 0.0
  %3291 = vmatpush.xpose.msra.mxu0 0.0
  %3292 = vmatpush.xpose.msra.mxu0 0.0
  %3293 = vmatpush.xpose.msra.mxu0 0.0
  %3294 = vmatpush.xpose.msra.mxu0 0.0
  %3295 = vmatpush.xpose.msra.mxu0 0.0
  %3296 = vmatpush.xpose.msra.mxu0 0.0
  %3297 = vmatpush.xpose.msra.mxu0 0.0
  %3298 = vmatpush.xpose.msra.mxu0 0.0
  %3299 = vmatpush.xpose.msra.mxu0 0.0
  %3300 = vmatpush.xpose.msra.mxu0 %v3283
  %3301 = vmatmul.f32.gmra.mxu0 %v1101
  %v3302 = vpop.f32.mrf.mxu0
  %v3303 = vadd.f32 0.0, %v3302
  %3304 = vmatmul.f32.gmra.mxu0 %v1104
  %v3305 = vpop.f32.mrf.mxu0
  %v3306 = vadd.f32 0.0, %v3305
  %3307 = vdwg.mxu0
  %v3309 = vsel %vm50, %v3175, 0
  %3311 = vmatpush.xpose.msra.mxu0 0.0
  %3312 = vmatpush.xpose.msra.mxu0 0.0
  %3313 = vmatpush.xpose.msra.mxu0 0.0
  %3314 = vmatpush.xpose.msra.mxu0 0.0
  %3315 = vmatpush.xpose.msra.mxu0 0.0
  %3316 = vmatpush.xpose.msra.mxu0 0.0
  %3317 = vmatpush.xpose.msra.mxu0 0.0
  %3318 = vmatpush.xpose.msra.mxu0 0.0
  %3319 = vmatpush.xpose.msra.mxu0 0.0
  %3320 = vmatpush.xpose.msra.mxu0 0.0
  %3321 = vmatpush.xpose.msra.mxu0 0.0
  %3322 = vmatpush.xpose.msra.mxu0 0.0
  %3323 = vmatpush.xpose.msra.mxu0 0.0
  %3324 = vmatpush.xpose.msra.mxu0 0.0
  %3325 = vmatpush.xpose.msra.mxu0 0.0
  %3326 = vmatpush.xpose.msra.mxu0 %v3309
  %3327 = vmatmul.f32.gmra.mxu0 %v1101
  %v3328 = vpop.f32.mrf.mxu0
  %v3329 = vadd.f32 0.0, %v3328
  %3330 = vmatmul.f32.gmra.mxu0 %v1104
  %v3331 = vpop.f32.mrf.mxu0
  %v3332 = vadd.f32 0.0, %v3331
  %3333 = vdwg.mxu0
  %v3335 = vsel %vm50, %v3176, 0
  %3337 = vmatpush.xpose.msra.mxu0 0.0
  %3338 = vmatpush.xpose.msra.mxu0 0.0
  %3339 = vmatpush.xpose.msra.mxu0 0.0
  %3340 = vmatpush.xpose.msra.mxu0 0.0
  %3341 = vmatpush.xpose.msra.mxu0 0.0
  %3342 = vmatpush.xpose.msra.mxu0 0.0
  %3343 = vmatpush.xpose.msra.mxu0 0.0
  %3344 = vmatpush.xpose.msra.mxu0 0.0
  %3345 = vmatpush.xpose.msra.mxu0 0.0
  %3346 = vmatpush.xpose.msra.mxu0 0.0
  %3347 = vmatpush.xpose.msra.mxu0 0.0
  %3348 = vmatpush.xpose.msra.mxu0 0.0
  %3349 = vmatpush.xpose.msra.mxu0 0.0
  %3350 = vmatpush.xpose.msra.mxu0 0.0
  %3351 = vmatpush.xpose.msra.mxu0 0.0
  %3352 = vmatpush.xpose.msra.mxu0 %v3335
  %3353 = vmatmul.f32.gmra.mxu0 %v1101
  %v3354 = vpop.f32.mrf.mxu0
  %v3355 = vadd.f32 0.0, %v3354
  %3356 = vmatmul.f32.gmra.mxu0 %v1104
  %v3357 = vpop.f32.mrf.mxu0
  %v3358 = vadd.f32 0.0, %v3357
  %3359 = vdwg.mxu0
  %v3361 = vsel %vm50, %v3177, 0
  %3363 = vmatpush.xpose.msra.mxu0 0.0
  %3364 = vmatpush.xpose.msra.mxu0 0.0
  %3365 = vmatpush.xpose.msra.mxu0 0.0
  %3366 = vmatpush.xpose.msra.mxu0 0.0
  %3367 = vmatpush.xpose.msra.mxu0 0.0
  %3368 = vmatpush.xpose.msra.mxu0 0.0
  %3369 = vmatpush.xpose.msra.mxu0 0.0
  %3370 = vmatpush.xpose.msra.mxu0 0.0
  %3371 = vmatpush.xpose.msra.mxu0 0.0
  %3372 = vmatpush.xpose.msra.mxu0 0.0
  %3373 = vmatpush.xpose.msra.mxu0 0.0
  %3374 = vmatpush.xpose.msra.mxu0 0.0
  %3375 = vmatpush.xpose.msra.mxu0 0.0
  %3376 = vmatpush.xpose.msra.mxu0 0.0
  %3377 = vmatpush.xpose.msra.mxu0 0.0
  %3378 = vmatpush.xpose.msra.mxu0 %v3361
  %3379 = vmatmul.f32.gmra.mxu0 %v1101
  %v3380 = vpop.f32.mrf.mxu0
  %v3381 = vadd.f32 0.0, %v3380
  %3382 = vmatmul.f32.gmra.mxu0 %v1104
  %v3383 = vpop.f32.mrf.mxu0
  %v3384 = vadd.f32 0.0, %v3383
  %3385 = vdwg.mxu0
  %s3386 = scalar_lea.vmem %s1, 480
  %v3387 = vld [vmem:[%s3386] sm:$0xff]
  %v3388 = vld [vmem:[%s3386 + $0x8] sm:$0xff]
  %v3389 = vld [vmem:[%s3386 + $0x10] sm:$0xff]
  %v3390 = vld [vmem:[%s3386 + $0x18] sm:$0xff]
  %v3391 = vld [vmem:[%s2453 + $0x1] sm:$0x1]
  %v3393 = vsel %vm375, %v3086, 0
  %v3396 = vsel %vm375, %v3089, 0
  %v3399 = vsel %vm375, %v3199, 0
  %v3402 = vsel %vm375, %v3202, 0
  %3404 = vmatpush.xpose.msra.mxu0 0.0
  %3405 = vmatpush.xpose.msra.mxu0 0.0
  %3406 = vmatpush.xpose.msra.mxu0 0.0
  %3407 = vmatpush.xpose.msra.mxu0 0.0
  %3408 = vmatpush.xpose.msra.mxu0 0.0
  %3409 = vmatpush.xpose.msra.mxu0 0.0
  %3410 = vmatpush.xpose.msra.mxu0 0.0
  %3411 = vmatpush.xpose.msra.mxu0 0.0
  %3412 = vmatpush.xpose.msra.mxu0 0.0
  %3413 = vmatpush.xpose.msra.mxu0 0.0
  %3414 = vmatpush.xpose.msra.mxu0 0.0
  %3415 = vmatpush.xpose.msra.mxu0 0.0
  %3416 = vmatpush.xpose.msra.mxu0 0.0
  %3417 = vmatpush.xpose.msra.mxu0 0.0
  %3418 = vmatpush.xpose.msra.mxu0 %v3402
  %3419 = vmatpush.xpose.msra.mxu0 %v3399
  %3420 = vmatmul.f32.gmra.mxu0 %v3393
  %v3421 = vpop.f32.mrf.mxu0
  %v3422 = vadd.f32 %v29, %v3421
  %3423 = vmatmul.f32.gmra.mxu0 %v3396
  %v3424 = vpop.f32.mrf.mxu0
  %v3425 = vadd.f32 %v30, %v3424
  %3426 = vdwg.mxu0
  %v3428 = vsel %vm375, %v3112, 0
  %v3431 = vsel %vm375, %v3115, 0
  %v3434 = vsel %vm375, %v3225, 0
  %v3437 = vsel %vm375, %v3228, 0
  %3439 = vmatpush.xpose.msra.mxu0 0.0
  %3440 = vmatpush.xpose.msra.mxu0 0.0
  %3441 = vmatpush.xpose.msra.mxu0 0.0
  %3442 = vmatpush.xpose.msra.mxu0 0.0
  %3443 = vmatpush.xpose.msra.mxu0 0.0
  %3444 = vmatpush.xpose.msra.mxu0 0.0
  %3445 = vmatpush.xpose.msra.mxu0 0.0
  %3446 = vmatpush.xpose.msra.mxu0 0.0
  %3447 = vmatpush.xpose.msra.mxu0 0.0
  %3448 = vmatpush.xpose.msra.mxu0 0.0
  %3449 = vmatpush.xpose.msra.mxu0 0.0
  %3450 = vmatpush.xpose.msra.mxu0 0.0
  %3451 = vmatpush.xpose.msra.mxu0 0.0
  %3452 = vmatpush.xpose.msra.mxu0 0.0
  %3453 = vmatpush.xpose.msra.mxu0 %v3437
  %3454 = vmatpush.xpose.msra.mxu0 %v3434
  %3455 = vmatmul.f32.gmra.mxu0 %v3428
  %v3456 = vpop.f32.mrf.mxu0
  %v3457 = vadd.f32 %v29, %v3456
  %3458 = vmatmul.f32.gmra.mxu0 %v3431
  %v3459 = vpop.f32.mrf.mxu0
  %v3460 = vadd.f32 %v30, %v3459
  %3461 = vdwg.mxu0
  %v3463 = vsel %vm375, %v3138, 0
  %v3466 = vsel %vm375, %v3141, 0
  %v3469 = vsel %vm375, %v3251, 0
  %v3472 = vsel %vm375, %v3254, 0
  %3474 = vmatpush.xpose.msra.mxu0 0.0
  %3475 = vmatpush.xpose.msra.mxu0 0.0
  %3476 = vmatpush.xpose.msra.mxu0 0.0
  %3477 = vmatpush.xpose.msra.mxu0 0.0
  %3478 = vmatpush.xpose.msra.mxu0 0.0
  %3479 = vmatpush.xpose.msra.mxu0 0.0
  %3480 = vmatpush.xpose.msra.mxu0 0.0
  %3481 = vmatpush.xpose.msra.mxu0 0.0
  %3482 = vmatpush.xpose.msra.mxu0 0.0
  %3483 = vmatpush.xpose.msra.mxu0 0.0
  %3484 = vmatpush.xpose.msra.mxu0 0.0
  %3485 = vmatpush.xpose.msra.mxu0 0.0
  %3486 = vmatpush.xpose.msra.mxu0 0.0
  %3487 = vmatpush.xpose.msra.mxu0 0.0
  %3488 = vmatpush.xpose.msra.mxu0 %v3472
  %3489 = vmatpush.xpose.msra.mxu0 %v3469
  %3490 = vmatmul.f32.gmra.mxu0 %v3463
  %v3491 = vpop.f32.mrf.mxu0
  %v3492 = vadd.f32 %v29, %v3491
  %3493 = vmatmul.f32.gmra.mxu0 %v3466
  %v3494 = vpop.f32.mrf.mxu0
  %v3495 = vadd.f32 %v30, %v3494
  %3496 = vdwg.mxu0
  %v3498 = vsel %vm375, %v3164, 0
  %v3501 = vsel %vm375, %v3167, 0
  %v3504 = vsel %vm375, %v3277, 0
  %v3507 = vsel %vm375, %v3280, 0
  %3509 = vmatpush.xpose.msra.mxu0 0.0
  %3510 = vmatpush.xpose.msra.mxu0 0.0
  %3511 = vmatpush.xpose.msra.mxu0 0.0
  %3512 = vmatpush.xpose.msra.mxu0 0.0
  %3513 = vmatpush.xpose.msra.mxu0 0.0
  %3514 = vmatpush.xpose.msra.mxu0 0.0
  %3515 = vmatpush.xpose.msra.mxu0 0.0
  %3516 = vmatpush.xpose.msra.mxu0 0.0
  %3517 = vmatpush.xpose.msra.mxu0 0.0
  %3518 = vmatpush.xpose.msra.mxu0 0.0
  %3519 = vmatpush.xpose.msra.mxu0 0.0
  %3520 = vmatpush.xpose.msra.mxu0 0.0
  %3521 = vmatpush.xpose.msra.mxu0 0.0
  %3522 = vmatpush.xpose.msra.mxu0 0.0
  %3523 = vmatpush.xpose.msra.mxu0 %v3507
  %3524 = vmatpush.xpose.msra.mxu0 %v3504
  %3525 = vmatmul.f32.gmra.mxu0 %v3498
  %v3526 = vpop.f32.mrf.mxu0
  %v3527 = vadd.f32 %v29, %v3526
  %3528 = vmatmul.f32.gmra.mxu0 %v3501
  %v3529 = vpop.f32.mrf.mxu0
  %v3530 = vadd.f32 %v30, %v3529
  %3531 = vdwg.mxu0
  %v3532 = vsel %vm516, %v3422, -inf
  %3533 = vmax.xlane.f32.xlu0 %v3532
  %v3534 = vpop.xlane.xlu0 %3533
  %v3535 = vsel %vm516, %v3425, -inf
  %3536 = vmax.xlane.f32.xlu0 %v3535
  %v3537 = vpop.xlane.xlu0 %3536
  %v3538 = vsel %vm516, %v3457, -inf
  %3539 = vmax.xlane.f32.xlu0 %v3538
  %v3540 = vpop.xlane.xlu0 %3539
  %v3541 = vsel %vm516, %v3460, -inf
  %3542 = vmax.xlane.f32.xlu0 %v3541
  %v3543 = vpop.xlane.xlu0 %3542
  %v3544 = vsel %vm516, %v3492, -inf
  %3545 = vmax.xlane.f32.xlu0 %v3544
  %v3546 = vpop.xlane.xlu0 %3545
  %v3547 = vsel %vm516, %v3495, -inf
  %3548 = vmax.xlane.f32.xlu0 %v3547
  %v3549 = vpop.xlane.xlu0 %3548
  %v3550 = vsel %vm516, %v3527, -inf
  %3551 = vmax.xlane.f32.xlu0 %v3550
  %v3552 = vpop.xlane.xlu0 %3551
  %v3553 = vsel %vm516, %v3530, -inf
  %3554 = vmax.xlane.f32.xlu0 %v3553
  %v3555 = vpop.xlane.xlu0 %3554
  %v3556 = vsub.f32 %v3422, %v3534
  %v3557 = vsub.f32 %v3425, %v3537
  %v3558 = vsub.f32 %v3457, %v3540
  %v3559 = vsub.f32 %v3460, %v3543
  %v3560 = vsub.f32 %v3492, %v3546
  %v3561 = vsub.f32 %v3495, %v3549
  %v3562 = vsub.f32 %v3527, %v3552
  %v3563 = vsub.f32 %v3530, %v3555
  %v3564 = vmul.f32 %v3556, 1.442695
  %v3565 = vpow.pop %v3564
  %v3566 = vmul.f32 %v3557, 1.442695
  %v3567 = vpow.pop %v3566
  %v3568 = vmul.f32 %v3558, 1.442695
  %v3569 = vpow.pop %v3568
  %v3570 = vmul.f32 %v3559, 1.442695
  %v3571 = vpow.pop %v3570
  %v3572 = vmul.f32 %v3560, 1.442695
  %v3573 = vpow.pop %v3572
  %v3574 = vmul.f32 %v3561, 1.442695
  %v3575 = vpow.pop %v3574
  %v3576 = vmul.f32 %v3562, 1.442695
  %v3577 = vpow.pop %v3576
  %v3578 = vmul.f32 %v3563, 1.442695
  %v3579 = vpow.pop %v3578
  %v3580 = vsel %vm516, %v3565, 0.0
  %3581 = vadd.xlane.f32.xlu0 %v3580
  %v3582 = vpop.xlane.xlu0 %3581
  %v3583 = vsel %vm516, %v3567, 0.0
  %3584 = vadd.xlane.f32.xlu0 %v3583
  %v3585 = vpop.xlane.xlu0 %3584
  %v3586 = vsel %vm516, %v3569, 0.0
  %3587 = vadd.xlane.f32.xlu0 %v3586
  %v3588 = vpop.xlane.xlu0 %3587
  %v3589 = vsel %vm516, %v3571, 0.0
  %3590 = vadd.xlane.f32.xlu0 %v3589
  %v3591 = vpop.xlane.xlu0 %3590
  %v3592 = vsel %vm516, %v3573, 0.0
  %3593 = vadd.xlane.f32.xlu0 %v3592
  %v3594 = vpop.xlane.xlu0 %3593
  %v3595 = vsel %vm516, %v3575, 0.0
  %3596 = vadd.xlane.f32.xlu0 %v3595
  %v3597 = vpop.xlane.xlu0 %3596
  %v3598 = vsel %vm516, %v3577, 0.0
  %3599 = vadd.xlane.f32.xlu0 %v3598
  %v3600 = vpop.xlane.xlu0 %3599
  %v3601 = vsel %vm516, %v3579, 0.0
  %3602 = vadd.xlane.f32.xlu0 %v3601
  %v3603 = vpop.xlane.xlu0 %3602
  %v3604 = vrcp.pop %v3582
  %v3605 = vrcp.pop %v3585
  %v3606 = vrcp.pop %v3588
  %v3607 = vrcp.pop %v3591
  %v3608 = vrcp.pop %v3594
  %v3609 = vrcp.pop %v3597
  %v3610 = vrcp.pop %v3600
  %v3611 = vrcp.pop %v3603
  %v3612 = vmul.f32 %v3565, %v3604
  %v3613 = vmul.f32 %v3567, %v3605
  %v3614 = vmul.f32 %v3569, %v3606
  %v3615 = vmul.f32 %v3571, %v3607
  %v3616 = vmul.f32 %v3573, %v3608
  %v3617 = vmul.f32 %v3575, %v3609
  %v3618 = vmul.f32 %v3577, %v3610
  %v3619 = vmul.f32 %v3579, %v3611
  %v3621 = vsel %vm516, %v3612, 0
  %v3624 = vsel %vm516, %v3613, 0
  %3626 = vmatpush.msra.mxu0 0.0
  %3627 = vmatpush.msra.mxu0 0.0
  %3628 = vmatpush.msra.mxu0 0.0
  %3629 = vmatpush.msra.mxu0 0.0
  %3630 = vmatpush.msra.mxu0 0.0
  %3631 = vmatpush.msra.mxu0 0.0
  %3632 = vmatpush.msra.mxu0 0.0
  %3633 = vmatpush.msra.mxu0 0.0
  %3634 = vmatpush.msra.mxu0 0.0
  %3635 = vmatpush.msra.mxu0 0.0
  %3636 = vmatpush.msra.mxu0 0.0
  %3637 = vmatpush.msra.mxu0 0.0
  %3638 = vmatpush.msra.mxu0 0.0
  %3639 = vmatpush.msra.mxu0 0.0
  %3640 = vmatpush.msra.mxu0 %v3306
  %3641 = vmatpush.msra.mxu0 %v3303
  %3642 = vmatmul.f32.gmra.mxu0 %v3621
  %v3643 = vpop.f32.mrf.mxu0
  %v3644 = vadd.f32 0.0, %v3643
  %3645 = vmatmul.f32.gmra.mxu0 %v3624
  %v3646 = vpop.f32.mrf.mxu0
  %v3647 = vadd.f32 0.0, %v3646
  %3648 = vdwg.mxu0
  %v3650 = vsel %vm516, %v3614, 0
  %v3653 = vsel %vm516, %v3615, 0
  %3655 = vmatpush.msra.mxu0 0.0
  %3656 = vmatpush.msra.mxu0 0.0
  %3657 = vmatpush.msra.mxu0 0.0
  %3658 = vmatpush.msra.mxu0 0.0
  %3659 = vmatpush.msra.mxu0 0.0
  %3660 = vmatpush.msra.mxu0 0.0
  %3661 = vmatpush.msra.mxu0 0.0
  %3662 = vmatpush.msra.mxu0 0.0
  %3663 = vmatpush.msra.mxu0 0.0
  %3664 = vmatpush.msra.mxu0 0.0
  %3665 = vmatpush.msra.mxu0 0.0
  %3666 = vmatpush.msra.mxu0 0.0
  %3667 = vmatpush.msra.mxu0 0.0
  %3668 = vmatpush.msra.mxu0 0.0
  %3669 = vmatpush.msra.mxu0 %v3332
  %3670 = vmatpush.msra.mxu0 %v3329
  %3671 = vmatmul.f32.gmra.mxu0 %v3650
  %v3672 = vpop.f32.mrf.mxu0
  %v3673 = vadd.f32 0.0, %v3672
  %3674 = vmatmul.f32.gmra.mxu0 %v3653
  %v3675 = vpop.f32.mrf.mxu0
  %v3676 = vadd.f32 0.0, %v3675
  %3677 = vdwg.mxu0
  %v3679 = vsel %vm516, %v3616, 0
  %v3682 = vsel %vm516, %v3617, 0
  %3684 = vmatpush.msra.mxu0 0.0
  %3685 = vmatpush.msra.mxu0 0.0
  %3686 = vmatpush.msra.mxu0 0.0
  %3687 = vmatpush.msra.mxu0 0.0
  %3688 = vmatpush.msra.mxu0 0.0
  %3689 = vmatpush.msra.mxu0 0.0
  %3690 = vmatpush.msra.mxu0 0.0
  %3691 = vmatpush.msra.mxu0 0.0
  %3692 = vmatpush.msra.mxu0 0.0
  %3693 = vmatpush.msra.mxu0 0.0
  %3694 = vmatpush.msra.mxu0 0.0
  %3695 = vmatpush.msra.mxu0 0.0
  %3696 = vmatpush.msra.mxu0 0.0
  %3697 = vmatpush.msra.mxu0 0.0
  %3698 = vmatpush.msra.mxu0 %v3358
  %3699 = vmatpush.msra.mxu0 %v3355
  %3700 = vmatmul.f32.gmra.mxu0 %v3679
  %v3701 = vpop.f32.mrf.mxu0
  %v3702 = vadd.f32 0.0, %v3701
  %3703 = vmatmul.f32.gmra.mxu0 %v3682
  %v3704 = vpop.f32.mrf.mxu0
  %v3705 = vadd.f32 0.0, %v3704
  %3706 = vdwg.mxu0
  %v3708 = vsel %vm516, %v3618, 0
  %v3711 = vsel %vm516, %v3619, 0
  %3713 = vmatpush.msra.mxu0 0.0
  %3714 = vmatpush.msra.mxu0 0.0
  %3715 = vmatpush.msra.mxu0 0.0
  %3716 = vmatpush.msra.mxu0 0.0
  %3717 = vmatpush.msra.mxu0 0.0
  %3718 = vmatpush.msra.mxu0 0.0
  %3719 = vmatpush.msra.mxu0 0.0
  %3720 = vmatpush.msra.mxu0 0.0
  %3721 = vmatpush.msra.mxu0 0.0
  %3722 = vmatpush.msra.mxu0 0.0
  %3723 = vmatpush.msra.mxu0 0.0
  %3724 = vmatpush.msra.mxu0 0.0
  %3725 = vmatpush.msra.mxu0 0.0
  %3726 = vmatpush.msra.mxu0 0.0
  %3727 = vmatpush.msra.mxu0 %v3384
  %3728 = vmatpush.msra.mxu0 %v3381
  %3729 = vmatmul.f32.gmra.mxu0 %v3708
  %v3730 = vpop.f32.mrf.mxu0
  %v3731 = vadd.f32 0.0, %v3730
  %3732 = vmatmul.f32.gmra.mxu0 %v3711
  %v3733 = vpop.f32.mrf.mxu0
  %v3734 = vadd.f32 0.0, %v3733
  %3735 = vdwg.mxu0
  %v3737 = vsel %vm375, %v3644, 0
  %v3740 = vsel %vm375, %v3647, 0
  %3742 = vmatpush.msra.mxu0 0.0
  %3743 = vmatpush.msra.mxu0 0.0
  %3744 = vmatpush.msra.mxu0 0.0
  %3745 = vmatpush.msra.mxu0 0.0
  %3746 = vmatpush.msra.mxu0 0.0
  %3747 = vmatpush.msra.mxu0 0.0
  %3748 = vmatpush.msra.mxu0 0.0
  %3749 = vmatpush.msra.mxu0 0.0
  %3750 = vmatpush.msra.mxu0 0.0
  %3751 = vmatpush.msra.mxu0 0.0
  %3752 = vmatpush.msra.mxu0 0.0
  %3753 = vmatpush.msra.mxu0 0.0
  %3754 = vmatpush.msra.mxu0 0.0
  %3755 = vmatpush.msra.mxu0 0.0
  %3756 = vmatpush.msra.mxu0 0.0
  %3757 = vmatpush.msra.mxu0 %v3387
  %3758 = vmatmul.f32.gmra.mxu0 %v3737
  %v3759 = vpop.f32.mrf.mxu0
  %v3760 = vadd.f32 0.0, %v3759
  %3761 = vmatmul.f32.gmra.mxu0 %v3740
  %v3762 = vpop.f32.mrf.mxu0
  %v3763 = vadd.f32 0.0, %v3762
  %3764 = vdwg.mxu0
  %v3766 = vsel %vm375, %v3673, 0
  %v3769 = vsel %vm375, %v3676, 0
  %3771 = vmatpush.msra.mxu0 0.0
  %3772 = vmatpush.msra.mxu0 0.0
  %3773 = vmatpush.msra.mxu0 0.0
  %3774 = vmatpush.msra.mxu0 0.0
  %3775 = vmatpush.msra.mxu0 0.0
  %3776 = vmatpush.msra.mxu0 0.0
  %3777 = vmatpush.msra.mxu0 0.0
  %3778 = vmatpush.msra.mxu0 0.0
  %3779 = vmatpush.msra.mxu0 0.0
  %3780 = vmatpush.msra.mxu0 0.0
  %3781 = vmatpush.msra.mxu0 0.0
  %3782 = vmatpush.msra.mxu0 0.0
  %3783 = vmatpush.msra.mxu0 0.0
  %3784 = vmatpush.msra.mxu0 0.0
  %3785 = vmatpush.msra.mxu0 0.0
  %3786 = vmatpush.msra.mxu0 %v3388
  %3787 = vmatmul.f32.gmra.mxu0 %v3766
  %v3788 = vpop.f32.mrf.mxu0
  %v3789 = vadd.f32 0.0, %v3788
  %3790 = vmatmul.f32.gmra.mxu0 %v3769
  %v3791 = vpop.f32.mrf.mxu0
  %v3792 = vadd.f32 0.0, %v3791
  %3793 = vdwg.mxu0
  %v3795 = vsel %vm375, %v3702, 0
  %v3798 = vsel %vm375, %v3705, 0
  %3800 = vmatpush.msra.mxu0 0.0
  %3801 = vmatpush.msra.mxu0 0.0
  %3802 = vmatpush.msra.mxu0 0.0
  %3803 = vmatpush.msra.mxu0 0.0
  %3804 = vmatpush.msra.mxu0 0.0
  %3805 = vmatpush.msra.mxu0 0.0
  %3806 = vmatpush.msra.mxu0 0.0
  %3807 = vmatpush.msra.mxu0 0.0
  %3808 = vmatpush.msra.mxu0 0.0
  %3809 = vmatpush.msra.mxu0 0.0
  %3810 = vmatpush.msra.mxu0 0.0
  %3811 = vmatpush.msra.mxu0 0.0
  %3812 = vmatpush.msra.mxu0 0.0
  %3813 = vmatpush.msra.mxu0 0.0
  %3814 = vmatpush.msra.mxu0 0.0
  %3815 = vmatpush.msra.mxu0 %v3389
  %3816 = vmatmul.f32.gmra.mxu0 %v3795
  %v3817 = vpop.f32.mrf.mxu0
  %v3818 = vadd.f32 0.0, %v3817
  %3819 = vmatmul.f32.gmra.mxu0 %v3798
  %v3820 = vpop.f32.mrf.mxu0
  %v3821 = vadd.f32 0.0, %v3820
  %3822 = vdwg.mxu0
  %v3824 = vsel %vm375, %v3731, 0
  %v3827 = vsel %vm375, %v3734, 0
  %3829 = vmatpush.msra.mxu0 0.0
  %3830 = vmatpush.msra.mxu0 0.0
  %3831 = vmatpush.msra.mxu0 0.0
  %3832 = vmatpush.msra.mxu0 0.0
  %3833 = vmatpush.msra.mxu0 0.0
  %3834 = vmatpush.msra.mxu0 0.0
  %3835 = vmatpush.msra.mxu0 0.0
  %3836 = vmatpush.msra.mxu0 0.0
  %3837 = vmatpush.msra.mxu0 0.0
  %3838 = vmatpush.msra.mxu0 0.0
  %3839 = vmatpush.msra.mxu0 0.0
  %3840 = vmatpush.msra.mxu0 0.0
  %3841 = vmatpush.msra.mxu0 0.0
  %3842 = vmatpush.msra.mxu0 0.0
  %3843 = vmatpush.msra.mxu0 0.0
  %3844 = vmatpush.msra.mxu0 %v3390
  %3845 = vmatmul.f32.gmra.mxu0 %v3824
  %v3846 = vpop.f32.mrf.mxu0
  %v3847 = vadd.f32 0.0, %v3846
  %3848 = vmatmul.f32.gmra.mxu0 %v3827
  %v3849 = vpop.f32.mrf.mxu0
  %v3850 = vadd.f32 0.0, %v3849
  %3851 = vdwg.mxu0
  %v3852 = vsel %vm33, %v3760, 0.0
  %v3853 = vsel %vm33, %v3789, 0.0
  %v3854 = vadd.f32 %v3852, %v3853
  %v3855 = vsel %vm33, %v3818, 0.0
  %v3856 = vadd.f32 %v3854, %v3855
  %v3857 = vsel %vm33, %v3847, 0.0
  %v3858 = vadd.f32 %v3856, %v3857
  %v3859 = vsel %vm33, %v3763, 0.0
  %v3860 = vsel %vm33, %v3792, 0.0
  %v3861 = vadd.f32 %v3859, %v3860
  %v3862 = vsel %vm33, %v3821, 0.0
  %v3863 = vadd.f32 %v3861, %v3862
  %v3864 = vsel %vm33, %v3850, 0.0
  %v3865 = vadd.f32 %v3863, %v3864
  %v3866 = vperm.slane %v3391, 0
  %v3867 = vadd.f32 %v3858, %v3866
  %v3868 = vadd.f32 %v3865, %v3866
  %v3869 = vadd.f32 %v3050, %v3867
  %v3870 = vadd.f32 %v3051, %v3868
  %v3871 = vld [vmem:[%s2453 + $0x6] sm:$0x1]
  %v3872 = vld [vmem:[%s2453 + $0x7] sm:$0x1]
  %v3874 = vsel %vm33, %v3869, 0
  %v3877 = vsel %vm33, %v3870, 0
  %3879 = vmatpush.msra.mxu0 0.0
  %3880 = vmatpush.msra.mxu0 0.0
  %3881 = vmatpush.msra.mxu0 0.0
  %3882 = vmatpush.msra.mxu0 0.0
  %3883 = vmatpush.msra.mxu0 0.0
  %3884 = vmatpush.msra.mxu0 0.0
  %3885 = vmatpush.msra.mxu0 0.0
  %3886 = vmatpush.msra.mxu0 0.0
  %3887 = vmatpush.msra.mxu0 0.0
  %3888 = vmatpush.msra.mxu0 0.0
  %3889 = vmatpush.msra.mxu0 0.0
  %3890 = vmatpush.msra.mxu0 0.0
  %3891 = vmatpush.msra.mxu0 %v32
  %3892 = vmatpush.msra.mxu0 %v32
  %3893 = vmatpush.msra.mxu0 %v32
  %3894 = vmatpush.msra.mxu0 %v32
  %3895 = vmatmul.f32.gmra.mxu0 %v3874
  %v3896 = vpop.f32.mrf.mxu0
  %v3897 = vadd.f32 0.0, %v3896
  %3898 = vmatmul.f32.gmra.mxu0 %v3877
  %v3899 = vpop.f32.mrf.mxu0
  %v3900 = vadd.f32 0.0, %v3899
  %3901 = vdwg.mxu0
  %v3902 = vmul.f32 %v3869, %v3869
  %v3903 = vmul.f32 %v3870, %v3870
  %v3905 = vsel %vm33, %v3902, 0
  %v3908 = vsel %vm33, %v3903, 0
  %3910 = vmatpush.msra.mxu0 0.0
  %3911 = vmatpush.msra.mxu0 0.0
  %3912 = vmatpush.msra.mxu0 0.0
  %3913 = vmatpush.msra.mxu0 0.0
  %3914 = vmatpush.msra.mxu0 0.0
  %3915 = vmatpush.msra.mxu0 0.0
  %3916 = vmatpush.msra.mxu0 0.0
  %3917 = vmatpush.msra.mxu0 0.0
  %3918 = vmatpush.msra.mxu0 0.0
  %3919 = vmatpush.msra.mxu0 0.0
  %3920 = vmatpush.msra.mxu0 0.0
  %3921 = vmatpush.msra.mxu0 0.0
  %3922 = vmatpush.msra.mxu0 %v32
  %3923 = vmatpush.msra.mxu0 %v32
  %3924 = vmatpush.msra.mxu0 %v32
  %3925 = vmatpush.msra.mxu0 %v32
  %3926 = vmatmul.f32.gmra.mxu0 %v3905
  %v3927 = vpop.f32.mrf.mxu0
  %v3928 = vadd.f32 0.0, %v3927
  %3929 = vmatmul.f32.gmra.mxu0 %v3908
  %v3930 = vpop.f32.mrf.mxu0
  %v3931 = vadd.f32 0.0, %v3930
  %3932 = vdwg.mxu0
  %v3933 = vmul.f32 %v3897, %v3897
  %v3934 = vmul.f32 %v3900, %v3900
  %v3935 = vsub.f32 %v3928, %v3933
  %v3936 = vsub.f32 %v3931, %v3934
  %3938 = vset.pattern.permute.xlu0 0
  %3939 = vperm.xlu0 %3938, %v3897
  %v3940 = vpop.permute.xlu0 %3939
  %3943 = vset.pattern.permute.xlu0 0
  %3944 = vperm.xlu0 %3943, %v3900
  %v3945 = vpop.permute.xlu0 %3944
  %v3947 = vsub.f32 %v3869, %v3940
  %v3948 = vsub.f32 %v3870, %v3945
  %v3949 = vadd.f32 %v3935, 1e-05
  %v3950 = vadd.f32 %v3936, 1e-05
  %v3951 = vrsqrt.pop %v3949
  %v3952 = vmul.f32 %v3951, %v3949
  %v3953 = vmul.f32 %v3952, %v3951
  %v3954 = vmul.f32 0.5, %v3953
  %v3955 = vsub.f32 1.5, %v3954
  %v3956 = vmul.f32 %v3951, %v3955
  %vm3957 = vweird.f32 %v3949
  %vm3958 = vweird.f32 %v3951
  %vm3959 = vmor %vm3957, %vm3958
  %v3960 = vsel %vm3959, %v3951, %v3956
  %v3961 = vrsqrt.pop %v3950
  %v3962 = vmul.f32 %v3961, %v3950
  %v3963 = vmul.f32 %v3962, %v3961
  %v3964 = vmul.f32 0.5, %v3963
  %v3965 = vsub.f32 1.5, %v3964
  %v3966 = vmul.f32 %v3961, %v3965
  %vm3967 = vweird.f32 %v3950
  %vm3968 = vweird.f32 %v3961
  %vm3969 = vmor %vm3967, %vm3968
  %v3970 = vsel %vm3969, %v3961, %v3966
  %3972 = vset.pattern.permute.xlu0 0
  %3973 = vperm.xlu0 %3972, %v3960
  %v3974 = vpop.permute.xlu0 %3973
  %3977 = vset.pattern.permute.xlu0 0
  %3978 = vperm.xlu0 %3977, %v3970
  %v3979 = vpop.permute.xlu0 %3978
  %v3981 = vmul.f32 %v3947, %v3974
  %v3982 = vmul.f32 %v3948, %v3979
  %v3983 = vperm.slane %v3871, 0
  %v3984 = vmul.f32 %v3981, %v3983
  %v3985 = vmul.f32 %v3982, %v3983
  %v3986 = vperm.slane %v3872, 0
  %v3987 = vadd.f32 %v3984, %v3986
  %v3988 = vadd.f32 %v3985, %v3986
  %s3989 = scalar_lea.vmem %s2, 128
  %v3990 = vld [vmem:[%s3989] sm:$0xff]
  %v3991 = vld [vmem:[%s3989 + $0x8] sm:$0xff]
  %v3992 = vld [vmem:[%s3989 + $0x10] sm:$0xff]
  %v3993 = vld [vmem:[%s3989 + $0x18] sm:$0xff]
  %v3994 = vld [vmem:[%s2453 + $0x2] sm:$0x1]
  %v3995 = vperm.slane %v3994, 0
  %v3997 = vsel %vm33, %v3987, 0
  %v4000 = vsel %vm33, %v3988, 0
  %4002 = vmatpush.msra.mxu0 0.0
  %4003 = vmatpush.msra.mxu0 0.0
  %4004 = vmatpush.msra.mxu0 0.0
  %4005 = vmatpush.msra.mxu0 0.0
  %4006 = vmatpush.msra.mxu0 0.0
  %4007 = vmatpush.msra.mxu0 0.0
  %4008 = vmatpush.msra.mxu0 0.0
  %4009 = vmatpush.msra.mxu0 0.0
  %4010 = vmatpush.msra.mxu0 0.0
  %4011 = vmatpush.msra.mxu0 0.0
  %4012 = vmatpush.msra.mxu0 0.0
  %4013 = vmatpush.msra.mxu0 0.0
  %4014 = vmatpush.msra.mxu0 %v3993
  %4015 = vmatpush.msra.mxu0 %v3992
  %4016 = vmatpush.msra.mxu0 %v3991
  %4017 = vmatpush.msra.mxu0 %v3990
  %4018 = vmatmul.f32.gmra.mxu0 %v3997
  %v4019 = vpop.f32.mrf.mxu0
  %v4020 = vadd.f32 %v3995, %v4019
  %4021 = vmatmul.f32.gmra.mxu0 %v4000
  %v4022 = vpop.f32.mrf.mxu0
  %v4023 = vadd.f32 %v3995, %v4022
  %4024 = vdwg.mxu0
  %v4025 = vmax.f32 %v4020, 0.0
  %v4026 = vmax.f32 %v4023, 0.0
  %s4027 = scalar_lea.vmem %s2, 192
  %v4028 = vld [vmem:[%s4027] sm:$0xff]
  %v4029 = vld [vmem:[%s4027 + $0x8] sm:$0xff]
  %v4030 = vld [vmem:[%s4027 + $0x10] sm:$0xff]
  %v4031 = vld [vmem:[%s4027 + $0x18] sm:$0xff]
  %v4032 = vld [vmem:[%s4027 + $0x20] sm:$0xff]
  %v4033 = vld [vmem:[%s4027 + $0x28] sm:$0xff]
  %v4034 = vld [vmem:[%s4027 + $0x30] sm:$0xff]
  %v4035 = vld [vmem:[%s4027 + $0x38] sm:$0xff]
  %v4036 = vld [vmem:[%s2453 + $0x3] sm:$0x1]
  %v4037 = vperm.slane %v4036, 0
  %v4039 = vsel %vm1965, %v4025, 0
  %v4042 = vsel %vm1965, %v4026, 0
  %4044 = vmatpush.msra.mxu0 0.0
  %4045 = vmatpush.msra.mxu0 0.0
  %4046 = vmatpush.msra.mxu0 0.0
  %4047 = vmatpush.msra.mxu0 0.0
  %4048 = vmatpush.msra.mxu0 0.0
  %4049 = vmatpush.msra.mxu0 0.0
  %4050 = vmatpush.msra.mxu0 0.0
  %4051 = vmatpush.msra.mxu0 0.0
  %4052 = vmatpush.msra.mxu0 %v4035
  %4053 = vmatpush.msra.mxu0 %v4034
  %4054 = vmatpush.msra.mxu0 %v4033
  %4055 = vmatpush.msra.mxu0 %v4032
  %4056 = vmatpush.msra.mxu0 %v4031
  %4057 = vmatpush.msra.mxu0 %v4030
  %4058 = vmatpush.msra.mxu0 %v4029
  %4059 = vmatpush.msra.mxu0 %v4028
  %4060 = vmatmul.f32.gmra.mxu0 %v4039
  %v4061 = vpop.f32.mrf.mxu0
  %v4062 = vadd.f32 %v4037, %v4061
  %4063 = vmatmul.f32.gmra.mxu0 %v4042
  %v4064 = vpop.f32.mrf.mxu0
  %v4065 = vadd.f32 %v4037, %v4064
  %4066 = vdwg.mxu0
  %v4067 = vadd.f32 %v3987, %v4062
  %v4068 = vadd.f32 %v3988, %v4065
  %v4069 = vld [vmem:[%s2453 + $0x8] sm:$0x1]
  %v4070 = vld [vmem:[%s2453 + $0x9] sm:$0x1]
  %v4072 = vsel %vm33, %v4067, 0
  %v4075 = vsel %vm33, %v4068, 0
  %4077 = vmatpush.msra.mxu0 0.0
  %4078 = vmatpush.msra.mxu0 0.0
  %4079 = vmatpush.msra.mxu0 0.0
  %4080 = vmatpush.msra.mxu0 0.0
  %4081 = vmatpush.msra.mxu0 0.0
  %4082 = vmatpush.msra.mxu0 0.0
  %4083 = vmatpush.msra.mxu0 0.0
  %4084 = vmatpush.msra.mxu0 0.0
  %4085 = vmatpush.msra.mxu0 0.0
  %4086 = vmatpush.msra.mxu0 0.0
  %4087 = vmatpush.msra.mxu0 0.0
  %4088 = vmatpush.msra.mxu0 0.0
  %4089 = vmatpush.msra.mxu0 %v32
  %4090 = vmatpush.msra.mxu0 %v32
  %4091 = vmatpush.msra.mxu0 %v32
  %4092 = vmatpush.msra.mxu0 %v32
  %4093 = vmatmul.f32.gmra.mxu0 %v4072
  %v4094 = vpop.f32.mrf.mxu0
  %v4095 = vadd.f32 0.0, %v4094
  %4096 = vmatmul.f32.gmra.mxu0 %v4075
  %v4097 = vpop.f32.mrf.mxu0
  %v4098 = vadd.f32 0.0, %v4097
  %4099 = vdwg.mxu0
  %v4100 = vmul.f32 %v4067, %v4067
  %v4101 = vmul.f32 %v4068, %v4068
  %v4103 = vsel %vm33, %v4100, 0
  %v4106 = vsel %vm33, %v4101, 0
  %4108 = vmatpush.msra.mxu0 0.0
  %4109 = vmatpush.msra.mxu0 0.0
  %4110 = vmatpush.msra.mxu0 0.0
  %4111 = vmatpush.msra.mxu0 0.0
  %4112 = vmatpush.msra.mxu0 0.0
  %4113 = vmatpush.msra.mxu0 0.0
  %4114 = vmatpush.msra.mxu0 0.0
  %4115 = vmatpush.msra.mxu0 0.0
  %4116 = vmatpush.msra.mxu0 0.0
  %4117 = vmatpush.msra.mxu0 0.0
  %4118 = vmatpush.msra.mxu0 0.0
  %4119 = vmatpush.msra.mxu0 0.0
  %4120 = vmatpush.msra.mxu0 %v32
  %4121 = vmatpush.msra.mxu0 %v32
  %4122 = vmatpush.msra.mxu0 %v32
  %4123 = vmatpush.msra.mxu0 %v32
  %4124 = vmatmul.f32.gmra.mxu0 %v4103
  %v4125 = vpop.f32.mrf.mxu0
  %v4126 = vadd.f32 0.0, %v4125
  %4127 = vmatmul.f32.gmra.mxu0 %v4106
  %v4128 = vpop.f32.mrf.mxu0
  %v4129 = vadd.f32 0.0, %v4128
  %4130 = vdwg.mxu0
  %v4131 = vmul.f32 %v4095, %v4095
  %v4132 = vmul.f32 %v4098, %v4098
  %v4133 = vsub.f32 %v4126, %v4131
  %v4134 = vsub.f32 %v4129, %v4132
  %4136 = vset.pattern.permute.xlu0 0
  %4137 = vperm.xlu0 %4136, %v4095
  %v4138 = vpop.permute.xlu0 %4137
  %4141 = vset.pattern.permute.xlu0 0
  %4142 = vperm.xlu0 %4141, %v4098
  %v4143 = vpop.permute.xlu0 %4142
  %v4145 = vsub.f32 %v4067, %v4138
  %v4146 = vsub.f32 %v4068, %v4143
  %v4147 = vadd.f32 %v4133, 1e-05
  %v4148 = vadd.f32 %v4134, 1e-05
  %v4149 = vrsqrt.pop %v4147
  %v4150 = vmul.f32 %v4149, %v4147
  %v4151 = vmul.f32 %v4150, %v4149
  %v4152 = vmul.f32 0.5, %v4151
  %v4153 = vsub.f32 1.5, %v4152
  %v4154 = vmul.f32 %v4149, %v4153
  %vm4155 = vweird.f32 %v4147
  %vm4156 = vweird.f32 %v4149
  %vm4157 = vmor %vm4155, %vm4156
  %v4158 = vsel %vm4157, %v4149, %v4154
  %v4159 = vrsqrt.pop %v4148
  %v4160 = vmul.f32 %v4159, %v4148
  %v4161 = vmul.f32 %v4160, %v4159
  %v4162 = vmul.f32 0.5, %v4161
  %v4163 = vsub.f32 1.5, %v4162
  %v4164 = vmul.f32 %v4159, %v4163
  %vm4165 = vweird.f32 %v4148
  %vm4166 = vweird.f32 %v4159
  %vm4167 = vmor %vm4165, %vm4166
  %v4168 = vsel %vm4167, %v4159, %v4164
  %4170 = vset.pattern.permute.xlu0 0
  %4171 = vperm.xlu0 %4170, %v4158
  %v4172 = vpop.permute.xlu0 %4171
  %4175 = vset.pattern.permute.xlu0 0
  %4176 = vperm.xlu0 %4175, %v4168
  %v4177 = vpop.permute.xlu0 %4176
  %v4179 = vmul.f32 %v4145, %v4172
  %v4180 = vmul.f32 %v4146, %v4177
  %v4181 = vperm.slane %v4069, 0
  %v4182 = vmul.f32 %v4179, %v4181
  %v4183 = vmul.f32 %v4180, %v4181
  %v4184 = vperm.slane %v4070, 0
  %v4185 = vadd.f32 %v4182, %v4184
  %v4186 = vadd.f32 %v4183, %v4184
  %v4187 = vld [vmem:[%s4] sm:$0xff]
  %v4188 = vld [vmem:[%s4 + $0x8] sm:$0xff]
  %v4189 = vld [vmem:[%s4 + $0x10] sm:$0xff]
  %v4190 = vld [vmem:[%s4 + $0x18] sm:$0xff]
  %v4191 = vld [vmem:[%s4 + $0x20] sm:$0x1]
  %v4192 = vperm.slane %v4191, 0
  %v4194 = vsel %vm33, %v4185, 0
  %v4197 = vsel %vm33, %v4186, 0
  %4199 = vmatpush.msra.mxu0 0.0
  %4200 = vmatpush.msra.mxu0 0.0
  %4201 = vmatpush.msra.mxu0 0.0
  %4202 = vmatpush.msra.mxu0 0.0
  %4203 = vmatpush.msra.mxu0 0.0
  %4204 = vmatpush.msra.mxu0 0.0
  %4205 = vmatpush.msra.mxu0 0.0
  %4206 = vmatpush.msra.mxu0 0.0
  %4207 = vmatpush.msra.mxu0 0.0
  %4208 = vmatpush.msra.mxu0 0.0
  %4209 = vmatpush.msra.mxu0 0.0
  %4210 = vmatpush.msra.mxu0 0.0
  %4211 = vmatpush.msra.mxu0 %v4190
  %4212 = vmatpush.msra.mxu0 %v4189
  %4213 = vmatpush.msra.mxu0 %v4188
  %4214 = vmatpush.msra.mxu0 %v4187
  %4215 = vmatmul.f32.gmra.mxu0 %v4194
  %v4216 = vpop.f32.mrf.mxu0
  %v4217 = vadd.f32 %v4192, %v4216
  %4218 = vmatmul.f32.gmra.mxu0 %v4197
  %v4219 = vpop.f32.mrf.mxu0
  %v4220 = vadd.f32 %v4192, %v4219
  %4221 = vdwg.mxu0
  %4222 = vst [vmem:[%s5] sm:$0xff] %v4217
  %4223 = vst [vmem:[%s5 + $0x8] sm:$0xff] %v4220
  // Predicated region
  $region22: #{transformer_dec_forward.1} parent=0 // pred_check
    _
  $region23: #{transformer_dec_forward.1} parent=0 // pred_check_branch
    %4225 = sbr.rel (0) target = $region25
  $region24: #{transformer_dec_forward.1} parent=0 // pred_region
    _
  $region25: #{transformer_dec_forward.1} parent=0 // pred_fallthru
    _
  // Predicated region
  $region26: #{transformer_dec_forward.1} parent=0 // pred_check
    _
  $region27: #{transformer_dec_forward.1} parent=0 // pred_check_branch
    %4227 = sbr.rel (0) target = $region29
  $region28: #{transformer_dec_forward.1} parent=0 // pred_region
    _
  $region29: #{transformer_dec_forward.1} parent=0 // pred_fallthru
    _

</llo_original>
